<compile_context>
chip_gen: v7x
topology: tpu7x:2x2x1
jax: 0.10.0
libtpu: 0.0.40
codegen_flags: <defaults>
</compile_context>

<pallas_src>
import numpy as np

import jax
import jax.numpy as jnp
from jax.experimental import pallas as pl
from jax.experimental.pallas import tpu as pltpu


_H1 = 8    # conv1/pool1 spatial grid (8x8 input implied by Linear(256, 64))
_H2 = 4    # conv2/pool2 spatial grid (4x4 after first pool)
_PAD = 16  # sublane padding on each side of the shift scratch buffers


# ---------------------------------------------------------------------------
# Fully fused forward kernel.
#
# Row layouts (all 2-D, channels on lanes):
#   x      : (B*64, 1)    rows ordered (b, h, w)
#   conv1  : (B*64, 32)
#   pool1  : (B*16, 32)   rows ordered (b, h, w)
#   conv2  : (B*16, 64)
#   pool2  : (4*B, 64)    rows ordered (s, b), s = h*2+w  -> free flatten
#   hidden : (B, 64)
#   logits : (B, 128)     cols >= 10 are zero padding (lane-dense store)
# ---------------------------------------------------------------------------
def _fused_forward_kernel(x_ref, mask1_ref, w1_ref, b1_ref, qsel1_ref,
                          mask2_ref, w2r_ref, b2_ref, qsel2_ref,
                          v_ref, b3_ref, w4_ref, b4_ref,
                          out_ref,
                          xpad_ref, a1pad_ref, p1pad_ref, a2pad_ref):
    f32 = jnp.float32
    n1 = x_ref.shape[0]          # B * 64 pixel rows
    n2 = n1 // 4                 # B * 16 pixel rows after pool1
    batch = out_ref.shape[0]

    # ---- conv1 (3x3, stride 1, pad 1, Cin=1) + ReLU -------------------------
    # Shifts = offset reads from a zero-padded scratch; 9 VPU broadcast FMAs.
    xpad_ref[0:_PAD, :] = jnp.zeros((_PAD, 1), f32)
    xpad_ref[_PAD:_PAD + n1, :] = x_ref[...]
    xpad_ref[_PAD + n1:, :] = jnp.zeros((_PAD, 1), f32)
    acc1 = None
    for k in range(9):
        dy, dx = k // 3 - 1, k % 3 - 1
        off = dy * _H1 + dx
        xs = xpad_ref[_PAD + off:_PAD + off + n1, :] * mask1_ref[k]   # (n1, 1)
        term = xs * w1_ref[k]                                         # (n1, 32)
        acc1 = term if acc1 is None else acc1 + term
    a1 = jnp.maximum(acc1 + b1_ref[...], 0.0)                         # (n1, 32)

    # ---- maxpool1 (2x2 / 2): max of 3 shifted reads + one row-selection dot.
    a1pad_ref[0:n1, :] = a1
    a1pad_ref[n1:, :] = jnp.zeros((a1pad_ref.shape[0] - n1, 32), f32)
    mx1 = a1
    for off in (1, _H1, _H1 + 1):
        mx1 = jnp.maximum(mx1, a1pad_ref[off:off + n1, :])
    pool1 = jnp.dot(qsel1_ref[...], mx1, preferred_element_type=f32)  # (n2, 32)

    # ---- conv2 (3x3, stride 1, pad 1) + ReLU: in-VMEM im2col -> ONE dot.
    p1pad_ref[0:_PAD, :] = jnp.zeros((_PAD, 32), f32)
    p1pad_ref[_PAD:_PAD + n2, :] = pool1
    p1pad_ref[_PAD + n2:, :] = jnp.zeros((_PAD, 32), f32)
    pieces = []
    for k in range(9):
        dy, dx = k // 3 - 1, k % 3 - 1
        off = dy * _H2 + dx
        pieces.append(p1pad_ref[_PAD + off:_PAD + off + n2, :] * mask2_ref[k])
    slab = jnp.concatenate(pieces, axis=1)                            # (n2, 288)
    a2 = jnp.maximum(
        jnp.dot(slab, w2r_ref[...], preferred_element_type=f32) + b2_ref[...],
        0.0)                                                          # (n2, 64)

    # ---- maxpool2 (2x2 / 2), output rows ordered (s, b) for a free flatten.
    a2pad_ref[0:n2, :] = a2
    a2pad_ref[n2:, :] = jnp.zeros((a2pad_ref.shape[0] - n2, 64), f32)
    mx2 = a2
    for off in (1, _H2, _H2 + 1):
        mx2 = jnp.maximum(mx2, a2pad_ref[off:off + n2, :])
    pool2 = jnp.dot(qsel2_ref[...], mx2, preferred_element_type=f32)  # (4*B, 64)

    # ---- channel-major flatten + linear1 + ReLU: ONE (B,256)x(256,64) dot.
    #      (PyTorch flatten order c*4+s is folded into v; dropout = identity.)
    feat = jnp.concatenate(
        [pool2[s * batch:(s + 1) * batch, :] for s in range(4)], axis=1)  # (B, 256)
    h = jnp.maximum(
        jnp.dot(feat, v_ref[...], preferred_element_type=f32) + b3_ref[...], 0.0)

    # ---- linear2 -> lane-dense (B, 128) logits (cols >= 10 are zero padding).
    out = jnp.dot(h, w4_ref[...], preferred_element_type=f32) + b4_ref[...]
    out_ref[...] = out.astype(out_ref.dtype)


# ---------------------------------------------------------------------------
# One-time (outside the hot path) packing of weights + tiny structural data.
# ---------------------------------------------------------------------------
def _shift_masks(batch, h, w):
    """(9, B*h*w, 1) 0/1 masks: tap (dy,dx) is valid at pixel (i,j)."""
    m = batch * h * w
    out = np.zeros((9, m, 1), np.float32)
    for ky in range(3):
        for kx in range(3):
            k = ky * 3 + kx
            dy, dx = ky - 1, kx - 1
            for b in range(batch):
                for i in range(h):
                    for j in range(w):
                        if 0 <= i + dy < h and 0 <= j + dx < w:
                            out[k, b * h * w + i * w + j, 0] = 1.0
    return jnp.asarray(out)


def _pool_select(batch, h, w, s_major):
    """0/1 row selector picking the top-left corner row of every 2x2 window.

    Output rows ordered (b, i, j) if not s_major, else (s, b) with s = i*wo+j.
    """
    ho, wo = h // 2, w // 2
    q = np.zeros((batch * ho * wo, batch * h * w), np.float32)
    for b in range(batch):
        for i in range(ho):
            for j in range(wo):
                s = i * wo + j
                r_out = s * batch + b if s_major else b * ho * wo + s
                q[r_out, b * h * w + (2 * i) * w + (2 * j)] = 1.0
    return jnp.asarray(q)


def pack_forward_inputs(params, batch):
    """Pre-lay-out weights + tiny masks/selectors once (not per forward call)."""
    C1, C2, HID, NCLS = 32, 64, 64, 10

    # conv1 -> (9, 1, 32): w1[k, 0, o] = conv1_w[o, 0, ky, kx], k = ky*3+kx
    w1 = jnp.transpose(params["conv1_w"], (2, 3, 1, 0)).reshape(9, 1, C1)
    b1 = params["conv1_b"].reshape(1, C1)
    # conv2 -> (288, 64): row (ky*3+kx)*32 + c   (matches the im2col slab columns)
    w2r = jnp.transpose(params["conv2_w"], (2, 3, 1, 0)).reshape(9 * C1, C2)
    b2 = params["conv2_b"].reshape(1, C2)
    # linear1 with the channel-major flatten folded in:
    #   v[s*64 + c, o] = lin1_w[o, c*4 + s]   (s = h*2 + w over the 2x2 grid)
    v = jnp.transpose(params["lin1_w"].T.reshape(C2, 4, HID), (1, 0, 2)) \
           .reshape(4 * C2, HID)
    b3 = params["lin1_b"].reshape(1, HID)
    # linear2, N padded to 128 lanes for a lane-dense final store.
    w4 = jnp.zeros((HID, 128), jnp.float32).at[:, :NCLS].set(params["lin2_w"].T)
    b4 = jnp.zeros((1, 128), jnp.float32).at[0, :NCLS].set(params["lin2_b"])

    # Tiny structural data (~22 KB total at B=2).
    mask1 = _shift_masks(batch, _H1, _H1)                 # (9, B*64, 1)
    mask2 = _shift_masks(batch, _H2, _H2)                 # (9, B*16, 1)
    qsel1 = _pool_select(batch, _H1, _H1, s_major=False)  # (B*16, B*64)
    qsel2 = _pool_select(batch, _H2, _H2, s_major=True)   # (4*B,  B*16)

    return dict(mask1=mask1, w1=w1, b1=b1, qsel1=qsel1,
                mask2=mask2, w2r=w2r, b2=b2, qsel2=qsel2,
                v=v, b3=b3, w4=w4, b4=b4)


# ---------------------------------------------------------------------------
# Forward pass: ONE pallas_call, logits sliced outside the kernel.
# ---------------------------------------------------------------------------
def _full_block_spec(shape):
    zeros = (0,) * len(shape)
    return pl.BlockSpec(shape, lambda i, _z=zeros: _z)


def forward(packed, x_nchw):
    b, _, hh, ww = x_nchw.shape
    n1 = b * hh * ww                    # B*64 pixel rows
    n2 = n1 // 4                        # B*16 pixel rows after pool1
    # NCHW with C=1 is already (b, h, w) row-major -> free reshape to (n1, 1).
    x2d = x_nchw.reshape(n1, 1).astype(jnp.float32)

    args = (x2d,
            packed["mask1"], packed["w1"], packed["b1"], packed["qsel1"],
            packed["mask2"], packed["w2r"], packed["b2"], packed["qsel2"],
            packed["v"], packed["b3"], packed["w4"], packed["b4"])

    logits_padded = pl.pallas_call(
        _fused_forward_kernel,
        out_shape=jax.ShapeDtypeStruct((b, 128), jnp.float32),
        grid=(1,),   # B=2 is launch/DMA-bound; add a 'parallel' batch axis
                     # (per-image selectors) when the batch grows (v7x megacore).
        in_specs=[_full_block_spec(a.shape) for a in args],
        out_specs=pl.BlockSpec((b, 128), lambda i: (0, 0)),
        scratch_shapes=[
            pltpu.VMEM((n1 + 2 * _PAD, 1), jnp.float32),    # zero-padded x
            pltpu.VMEM((n1 + _PAD, 32), jnp.float32),       # padded conv1 act
            pltpu.VMEM((n2 + 2 * _PAD, 32), jnp.float32),   # zero-padded pool1
            pltpu.VMEM((n2 + 8, 64), jnp.float32),          # padded conv2 act
        ],
        compiler_params=pltpu.CompilerParams(
            dimension_semantics=("arbitrary",)),
    )(*args)
    return logits_padded[:, :10]


# ---------------------------------------------------------------------------
# Parameters (PyTorch layouts) + pure-JAX reference used only for the check.
# ---------------------------------------------------------------------------
def init_params(key):
    ks = jax.random.split(key, 8)
    return {
        "conv1_w": 0.1 * jax.random.normal(ks[0], (32, 1, 3, 3), jnp.float32),
        "conv1_b": 0.1 * jax.random.normal(ks[1], (32,), jnp.float32),
        "conv2_w": 0.05 * jax.random.normal(ks[2], (64, 32, 3, 3), jnp.float32),
        "conv2_b": 0.1 * jax.random.normal(ks[3], (64,), jnp.float32),
        "lin1_w": 0.05 * jax.random.normal(ks[4], (64, 256), jnp.float32),   # (out, in)
        "lin1_b": 0.1 * jax.random.normal(ks[5], (64,), jnp.float32),
        "lin2_w": 0.1 * jax.random.normal(ks[6], (10, 64), jnp.float32),     # (out, in)
        "lin2_b": 0.1 * jax.random.normal(ks[7], (10,), jnp.float32),
    }


def forward_ref(params, x_nchw):
    def conv(x, w, b):
        y = jax.lax.conv_general_dilated(
            x, w, window_strides=(1, 1), padding=((1, 1), (1, 1)),
            dimension_numbers=("NCHW", "OIHW", "NCHW"))
        return jax.nn.relu(y + b[None, :, None, None])

    def pool(x):
        return jax.lax.reduce_window(
            x, -jnp.inf, jax.lax.max, (1, 1, 2, 2), (1, 1, 2, 2), "VALID")

    x = conv(x_nchw, params["conv1_w"], params["conv1_b"])
    x = pool(x)
    x = conv(x, params["conv2_w"], params["conv2_b"])
    x = pool(x)
    x = x.reshape(x.shape[0], -1)
    x = jax.nn.relu(x @ params["lin1_w"].T + params["lin1_b"])
    # Dropout(p=0.5) is identity in inference mode.
    return x @ params["lin2_w"].T + params["lin2_b"]


if __name__ == "__main__":
    key = jax.random.PRNGKey(0)
    pkey, xkey = jax.random.split(key)
    params = init_params(pkey)
    x = jax.random.normal(xkey, (2, 1, 8, 8), jnp.float32)  # NCHW, as in PyTorch

    packed = pack_forward_inputs(params, batch=x.shape[0])  # once, off the hot path
    fwd = jax.jit(forward)

    out = jax.block_until_ready(fwd(packed, x))
    ref = jax.block_until_ready(forward_ref(params, x))

    assert out.shape == (2, 10), out.shape
    assert jnp.allclose(out, ref, atol=1e-4, rtol=1e-4), (out, ref)
    print("KERNEL_OK")
</pallas_src>

<mosaic_0001>
module attributes {stable_mosaic.version = 11 : i64} {
  func.func @_fused_forward_kernel(%arg0: i32, %arg1: memref<128x1xf32, #tpu.memory_space<vmem>>, %arg2: memref<9x128x1xf32, #tpu.memory_space<vmem>>, %arg3: memref<9x1x32xf32, #tpu.memory_space<vmem>>, %arg4: memref<1x32xf32, #tpu.memory_space<vmem>>, %arg5: memref<32x128xf32, #tpu.memory_space<vmem>>, %arg6: memref<9x32x1xf32, #tpu.memory_space<vmem>>, %arg7: memref<288x64xf32, #tpu.memory_space<vmem>>, %arg8: memref<1x64xf32, #tpu.memory_space<vmem>>, %arg9: memref<8x32xf32, #tpu.memory_space<vmem>>, %arg10: memref<256x64xf32, #tpu.memory_space<vmem>>, %arg11: memref<1x64xf32, #tpu.memory_space<vmem>>, %arg12: memref<64x128xf32, #tpu.memory_space<vmem>>, %arg13: memref<1x128xf32, #tpu.memory_space<vmem>>, %arg14: memref<2x128xf32, #tpu.memory_space<vmem>>, %arg15: memref<160x1xf32, #tpu.memory_space<vmem>>, %arg16: memref<144x32xf32, #tpu.memory_space<vmem>>, %arg17: memref<64x32xf32, #tpu.memory_space<vmem>>, %arg18: memref<40x64xf32, #tpu.memory_space<vmem>>) attributes {dimension_semantics = [#tpu.dimension_semantics<arbitrary>], iteration_bounds = array<i64: 1>, scalar_prefetch = 0 : i64, scratch_operands = 4 : i64, tpu.core_type = #tpu.core_type<tc>, window_params = [{pipeline_mode = #tpu.pipeline_mode<synchronous>, transform_indices = @transform_0, window_bounds = array<i64: 128, 1>}, {pipeline_mode = #tpu.pipeline_mode<synchronous>, transform_indices = @transform_1, window_bounds = array<i64: 9, 128, 1>}, {pipeline_mode = #tpu.pipeline_mode<synchronous>, transform_indices = @transform_2, window_bounds = array<i64: 9, 1, 32>}, {pipeline_mode = #tpu.pipeline_mode<synchronous>, transform_indices = @transform_3, window_bounds = array<i64: 1, 32>}, {pipeline_mode = #tpu.pipeline_mode<synchronous>, transform_indices = @transform_4, window_bounds = array<i64: 32, 128>}, {pipeline_mode = #tpu.pipeline_mode<synchronous>, transform_indices = @transform_5, window_bounds = array<i64: 9, 32, 1>}, {pipeline_mode = #tpu.pipeline_mode<synchronous>, transform_indices = @transform_6, window_bounds = array<i64: 288, 64>}, {pipeline_mode = #tpu.pipeline_mode<synchronous>, transform_indices = @transform_7, window_bounds = array<i64: 1, 64>}, {pipeline_mode = #tpu.pipeline_mode<synchronous>, transform_indices = @transform_8, window_bounds = array<i64: 8, 32>}, {pipeline_mode = #tpu.pipeline_mode<synchronous>, transform_indices = @transform_9, window_bounds = array<i64: 256, 64>}, {pipeline_mode = #tpu.pipeline_mode<synchronous>, transform_indices = @transform_10, window_bounds = array<i64: 1, 64>}, {pipeline_mode = #tpu.pipeline_mode<synchronous>, transform_indices = @transform_11, window_bounds = array<i64: 64, 128>}, {pipeline_mode = #tpu.pipeline_mode<synchronous>, transform_indices = @transform_12, window_bounds = array<i64: 1, 128>}, {pipeline_mode = #tpu.pipeline_mode<synchronous>, transform_indices = @transform_13, window_bounds = array<i64: 2, 128>}]} {
    %cst = arith.constant 0.000000e+00 : f32
    %0 = vector.broadcast %cst : f32 to vector<16x1xf32>
    %c0 = arith.constant 0 : index
    %c0_0 = arith.constant 0 : index
    %1 = vector.load %arg15[%c0, %c0_0] : memref<160x1xf32, #tpu.memory_space<vmem>>, vector<16x1xf32>
    tpu.vector_store %arg15[%c0, %c0_0], %0 {strides = array<i32>} : memref<160x1xf32, #tpu.memory_space<vmem>>, vector<16x1xf32>,
    %c0_1 = arith.constant 0 : index
    %c0_2 = arith.constant 0 : index
    %2 = vector.load %arg1[%c0_1, %c0_2] : memref<128x1xf32, #tpu.memory_space<vmem>>, vector<128x1xf32>
    %c16 = arith.constant 16 : index
    %c0_3 = arith.constant 0 : index
    %3 = vector.load %arg15[%c16, %c0_3] : memref<160x1xf32, #tpu.memory_space<vmem>>, vector<128x1xf32>
    tpu.vector_store %arg15[%c16, %c0_3], %2 {strides = array<i32>} : memref<160x1xf32, #tpu.memory_space<vmem>>, vector<128x1xf32>,
    %cst_4 = arith.constant 0.000000e+00 : f32
    %4 = vector.broadcast %cst_4 : f32 to vector<16x1xf32>
    %c144 = arith.constant 144 : index
    %c0_5 = arith.constant 0 : index
    %5 = vector.load %arg15[%c144, %c0_5] : memref<160x1xf32, #tpu.memory_space<vmem>>, vector<16x1xf32>
    tpu.vector_store %arg15[%c144, %c0_5], %4 {strides = array<i32>} : memref<160x1xf32, #tpu.memory_space<vmem>>, vector<16x1xf32>,
    %c7 = arith.constant 7 : index
    %c0_6 = arith.constant 0 : index
    %6 = vector.load %arg15[%c7, %c0_6] : memref<160x1xf32, #tpu.memory_space<vmem>>, vector<128x1xf32>
    %c0_7 = arith.constant 0 : index
    %c0_8 = arith.constant 0 : index
    %c0_9 = arith.constant 0 : index
    %7 = vector.load %arg2[%c0_7, %c0_8, %c0_9] : memref<9x128x1xf32, #tpu.memory_space<vmem>>, vector<1x128x1xf32>
    %8 = vector.shape_cast %7 : vector<1x128x1xf32> to vector<128x1xf32>
    %9 = arith.mulf %6, %8 : vector<128x1xf32>
    %c0_10 = arith.constant 0 : index
    %c0_11 = arith.constant 0 : index
    %c0_12 = arith.constant 0 : index
    %10 = vector.load %arg3[%c0_10, %c0_11, %c0_12] : memref<9x1x32xf32, #tpu.memory_space<vmem>>, vector<1x1x32xf32>
    %11 = vector.shape_cast %10 : vector<1x1x32xf32> to vector<1x32xf32>
    %12 = vector.broadcast %9 : vector<128x1xf32> to vector<128x32xf32>
    %13 = vector.broadcast %11 : vector<1x32xf32> to vector<128x32xf32>
    %14 = arith.mulf %12, %13 : vector<128x32xf32>
    %c8 = arith.constant 8 : index
    %c0_13 = arith.constant 0 : index
    %15 = vector.load %arg15[%c8, %c0_13] : memref<160x1xf32, #tpu.memory_space<vmem>>, vector<128x1xf32>
    %c1 = arith.constant 1 : index
    %c0_14 = arith.constant 0 : index
    %c0_15 = arith.constant 0 : index
    %16 = vector.load %arg2[%c1, %c0_14, %c0_15] : memref<9x128x1xf32, #tpu.memory_space<vmem>>, vector<1x128x1xf32>
    %17 = vector.shape_cast %16 : vector<1x128x1xf32> to vector<128x1xf32>
    %18 = arith.mulf %15, %17 : vector<128x1xf32>
    %c1_16 = arith.constant 1 : index
    %c0_17 = arith.constant 0 : index
    %c0_18 = arith.constant 0 : index
    %19 = vector.load %arg3[%c1_16, %c0_17, %c0_18] : memref<9x1x32xf32, #tpu.memory_space<vmem>>, vector<1x1x32xf32>
    %20 = vector.shape_cast %19 : vector<1x1x32xf32> to vector<1x32xf32>
    %21 = vector.broadcast %18 : vector<128x1xf32> to vector<128x32xf32>
    %22 = vector.broadcast %20 : vector<1x32xf32> to vector<128x32xf32>
    %23 = arith.mulf %21, %22 : vector<128x32xf32>
    %24 = arith.addf %14, %23 : vector<128x32xf32>
    %c9 = arith.constant 9 : index
    %c0_19 = arith.constant 0 : index
    %25 = vector.load %arg15[%c9, %c0_19] : memref<160x1xf32, #tpu.memory_space<vmem>>, vector<128x1xf32>
    %c2 = arith.constant 2 : index
    %c0_20 = arith.constant 0 : index
    %c0_21 = arith.constant 0 : index
    %26 = vector.load %arg2[%c2, %c0_20, %c0_21] : memref<9x128x1xf32, #tpu.memory_space<vmem>>, vector<1x128x1xf32>
    %27 = vector.shape_cast %26 : vector<1x128x1xf32> to vector<128x1xf32>
    %28 = arith.mulf %25, %27 : vector<128x1xf32>
    %c2_22 = arith.constant 2 : index
    %c0_23 = arith.constant 0 : index
    %c0_24 = arith.constant 0 : index
    %29 = vector.load %arg3[%c2_22, %c0_23, %c0_24] : memref<9x1x32xf32, #tpu.memory_space<vmem>>, vector<1x1x32xf32>
    %30 = vector.shape_cast %29 : vector<1x1x32xf32> to vector<1x32xf32>
    %31 = vector.broadcast %28 : vector<128x1xf32> to vector<128x32xf32>
    %32 = vector.broadcast %30 : vector<1x32xf32> to vector<128x32xf32>
    %33 = arith.mulf %31, %32 : vector<128x32xf32>
    %34 = arith.addf %24, %33 : vector<128x32xf32>
    %c15 = arith.constant 15 : index
    %c0_25 = arith.constant 0 : index
    %35 = vector.load %arg15[%c15, %c0_25] : memref<160x1xf32, #tpu.memory_space<vmem>>, vector<128x1xf32>
    %c3 = arith.constant 3 : index
    %c0_26 = arith.constant 0 : index
    %c0_27 = arith.constant 0 : index
    %36 = vector.load %arg2[%c3, %c0_26, %c0_27] : memref<9x128x1xf32, #tpu.memory_space<vmem>>, vector<1x128x1xf32>
    %37 = vector.shape_cast %36 : vector<1x128x1xf32> to vector<128x1xf32>
    %38 = arith.mulf %35, %37 : vector<128x1xf32>
    %c3_28 = arith.constant 3 : index
    %c0_29 = arith.constant 0 : index
    %c0_30 = arith.constant 0 : index
    %39 = vector.load %arg3[%c3_28, %c0_29, %c0_30] : memref<9x1x32xf32, #tpu.memory_space<vmem>>, vector<1x1x32xf32>
    %40 = vector.shape_cast %39 : vector<1x1x32xf32> to vector<1x32xf32>
    %41 = vector.broadcast %38 : vector<128x1xf32> to vector<128x32xf32>
    %42 = vector.broadcast %40 : vector<1x32xf32> to vector<128x32xf32>
    %43 = arith.mulf %41, %42 : vector<128x32xf32>
    %44 = arith.addf %34, %43 : vector<128x32xf32>
    %c16_31 = arith.constant 16 : index
    %c0_32 = arith.constant 0 : index
    %45 = vector.load %arg15[%c16_31, %c0_32] : memref<160x1xf32, #tpu.memory_space<vmem>>, vector<128x1xf32>
    %c4 = arith.constant 4 : index
    %c0_33 = arith.constant 0 : index
    %c0_34 = arith.constant 0 : index
    %46 = vector.load %arg2[%c4, %c0_33, %c0_34] : memref<9x128x1xf32, #tpu.memory_space<vmem>>, vector<1x128x1xf32>
    %47 = vector.shape_cast %46 : vector<1x128x1xf32> to vector<128x1xf32>
    %48 = arith.mulf %45, %47 : vector<128x1xf32>
    %c4_35 = arith.constant 4 : index
    %c0_36 = arith.constant 0 : index
    %c0_37 = arith.constant 0 : index
    %49 = vector.load %arg3[%c4_35, %c0_36, %c0_37] : memref<9x1x32xf32, #tpu.memory_space<vmem>>, vector<1x1x32xf32>
    %50 = vector.shape_cast %49 : vector<1x1x32xf32> to vector<1x32xf32>
    %51 = vector.broadcast %48 : vector<128x1xf32> to vector<128x32xf32>
    %52 = vector.broadcast %50 : vector<1x32xf32> to vector<128x32xf32>
    %53 = arith.mulf %51, %52 : vector<128x32xf32>
    %54 = arith.addf %44, %53 : vector<128x32xf32>
    %c17 = arith.constant 17 : index
    %c0_38 = arith.constant 0 : index
    %55 = vector.load %arg15[%c17, %c0_38] : memref<160x1xf32, #tpu.memory_space<vmem>>, vector<128x1xf32>
    %c5 = arith.constant 5 : index
    %c0_39 = arith.constant 0 : index
    %c0_40 = arith.constant 0 : index
    %56 = vector.load %arg2[%c5, %c0_39, %c0_40] : memref<9x128x1xf32, #tpu.memory_space<vmem>>, vector<1x128x1xf32>
    %57 = vector.shape_cast %56 : vector<1x128x1xf32> to vector<128x1xf32>
    %58 = arith.mulf %55, %57 : vector<128x1xf32>
    %c5_41 = arith.constant 5 : index
    %c0_42 = arith.constant 0 : index
    %c0_43 = arith.constant 0 : index
    %59 = vector.load %arg3[%c5_41, %c0_42, %c0_43] : memref<9x1x32xf32, #tpu.memory_space<vmem>>, vector<1x1x32xf32>
    %60 = vector.shape_cast %59 : vector<1x1x32xf32> to vector<1x32xf32>
    %61 = vector.broadcast %58 : vector<128x1xf32> to vector<128x32xf32>
    %62 = vector.broadcast %60 : vector<1x32xf32> to vector<128x32xf32>
    %63 = arith.mulf %61, %62 : vector<128x32xf32>
    %64 = arith.addf %54, %63 : vector<128x32xf32>
    %c23 = arith.constant 23 : index
    %c0_44 = arith.constant 0 : index
    %65 = vector.load %arg15[%c23, %c0_44] : memref<160x1xf32, #tpu.memory_space<vmem>>, vector<128x1xf32>
    %c6 = arith.constant 6 : index
    %c0_45 = arith.constant 0 : index
    %c0_46 = arith.constant 0 : index
    %66 = vector.load %arg2[%c6, %c0_45, %c0_46] : memref<9x128x1xf32, #tpu.memory_space<vmem>>, vector<1x128x1xf32>
    %67 = vector.shape_cast %66 : vector<1x128x1xf32> to vector<128x1xf32>
    %68 = arith.mulf %65, %67 : vector<128x1xf32>
    %c6_47 = arith.constant 6 : index
    %c0_48 = arith.constant 0 : index
    %c0_49 = arith.constant 0 : index
    %69 = vector.load %arg3[%c6_47, %c0_48, %c0_49] : memref<9x1x32xf32, #tpu.memory_space<vmem>>, vector<1x1x32xf32>
    %70 = vector.shape_cast %69 : vector<1x1x32xf32> to vector<1x32xf32>
    %71 = vector.broadcast %68 : vector<128x1xf32> to vector<128x32xf32>
    %72 = vector.broadcast %70 : vector<1x32xf32> to vector<128x32xf32>
    %73 = arith.mulf %71, %72 : vector<128x32xf32>
    %74 = arith.addf %64, %73 : vector<128x32xf32>
    %c24 = arith.constant 24 : index
    %c0_50 = arith.constant 0 : index
    %75 = vector.load %arg15[%c24, %c0_50] : memref<160x1xf32, #tpu.memory_space<vmem>>, vector<128x1xf32>
    %c7_51 = arith.constant 7 : index
    %c0_52 = arith.constant 0 : index
    %c0_53 = arith.constant 0 : index
    %76 = vector.load %arg2[%c7_51, %c0_52, %c0_53] : memref<9x128x1xf32, #tpu.memory_space<vmem>>, vector<1x128x1xf32>
    %77 = vector.shape_cast %76 : vector<1x128x1xf32> to vector<128x1xf32>
    %78 = arith.mulf %75, %77 : vector<128x1xf32>
    %c7_54 = arith.constant 7 : index
    %c0_55 = arith.constant 0 : index
    %c0_56 = arith.constant 0 : index
    %79 = vector.load %arg3[%c7_54, %c0_55, %c0_56] : memref<9x1x32xf32, #tpu.memory_space<vmem>>, vector<1x1x32xf32>
    %80 = vector.shape_cast %79 : vector<1x1x32xf32> to vector<1x32xf32>
    %81 = vector.broadcast %78 : vector<128x1xf32> to vector<128x32xf32>
    %82 = vector.broadcast %80 : vector<1x32xf32> to vector<128x32xf32>
    %83 = arith.mulf %81, %82 : vector<128x32xf32>
    %84 = arith.addf %74, %83 : vector<128x32xf32>
    %c25 = arith.constant 25 : index
    %c0_57 = arith.constant 0 : index
    %85 = vector.load %arg15[%c25, %c0_57] : memref<160x1xf32, #tpu.memory_space<vmem>>, vector<128x1xf32>
    %c8_58 = arith.constant 8 : index
    %c0_59 = arith.constant 0 : index
    %c0_60 = arith.constant 0 : index
    %86 = vector.load %arg2[%c8_58, %c0_59, %c0_60] : memref<9x128x1xf32, #tpu.memory_space<vmem>>, vector<1x128x1xf32>
    %87 = vector.shape_cast %86 : vector<1x128x1xf32> to vector<128x1xf32>
    %88 = arith.mulf %85, %87 : vector<128x1xf32>
    %c8_61 = arith.constant 8 : index
    %c0_62 = arith.constant 0 : index
    %c0_63 = arith.constant 0 : index
    %89 = vector.load %arg3[%c8_61, %c0_62, %c0_63] : memref<9x1x32xf32, #tpu.memory_space<vmem>>, vector<1x1x32xf32>
    %90 = vector.shape_cast %89 : vector<1x1x32xf32> to vector<1x32xf32>
    %91 = vector.broadcast %88 : vector<128x1xf32> to vector<128x32xf32>
    %92 = vector.broadcast %90 : vector<1x32xf32> to vector<128x32xf32>
    %93 = arith.mulf %91, %92 : vector<128x32xf32>
    %94 = arith.addf %84, %93 : vector<128x32xf32>
    %c0_64 = arith.constant 0 : index
    %c0_65 = arith.constant 0 : index
    %95 = vector.load %arg4[%c0_64, %c0_65] : memref<1x32xf32, #tpu.memory_space<vmem>>, vector<1x32xf32>
    %96 = vector.broadcast %95 : vector<1x32xf32> to vector<128x32xf32>
    %97 = arith.addf %94, %96 : vector<128x32xf32>
    %cst_66 = arith.constant 0.000000e+00 : f32
    %98 = vector.broadcast %cst_66 : f32 to vector<128x32xf32>
    %99 = arith.maximumf %97, %98 : vector<128x32xf32>
    %c0_67 = arith.constant 0 : index
    %c0_68 = arith.constant 0 : index
    %100 = vector.load %arg16[%c0_67, %c0_68] : memref<144x32xf32, #tpu.memory_space<vmem>>, vector<128x32xf32>
    tpu.vector_store %arg16[%c0_67, %c0_68], %99 {strides = array<i32>} : memref<144x32xf32, #tpu.memory_space<vmem>>, vector<128x32xf32>,
    %cst_69 = arith.constant 0.000000e+00 : f32
    %101 = vector.broadcast %cst_69 : f32 to vector<16x32xf32>
    %c128 = arith.constant 128 : index
    %c0_70 = arith.constant 0 : index
    %102 = vector.load %arg16[%c128, %c0_70] : memref<144x32xf32, #tpu.memory_space<vmem>>, vector<16x32xf32>
    tpu.vector_store %arg16[%c128, %c0_70], %101 {strides = array<i32>} : memref<144x32xf32, #tpu.memory_space<vmem>>, vector<16x32xf32>,
    %c1_71 = arith.constant 1 : index
    %c0_72 = arith.constant 0 : index
    %103 = vector.load %arg16[%c1_71, %c0_72] : memref<144x32xf32, #tpu.memory_space<vmem>>, vector<128x32xf32>
    %104 = arith.maximumf %99, %103 : vector<128x32xf32>
    %c8_73 = arith.constant 8 : index
    %c0_74 = arith.constant 0 : index
    %105 = vector.load %arg16[%c8_73, %c0_74] : memref<144x32xf32, #tpu.memory_space<vmem>>, vector<128x32xf32>
    %106 = arith.maximumf %104, %105 : vector<128x32xf32>
    %c9_75 = arith.constant 9 : index
    %c0_76 = arith.constant 0 : index
    %107 = vector.load %arg16[%c9_75, %c0_76] : memref<144x32xf32, #tpu.memory_space<vmem>>, vector<128x32xf32>
    %108 = arith.maximumf %106, %107 : vector<128x32xf32>
    %c0_77 = arith.constant 0 : index
    %c0_78 = arith.constant 0 : index
    %109 = vector.load %arg5[%c0_77, %c0_78] : memref<32x128xf32, #tpu.memory_space<vmem>>, vector<32x128xf32>
    %cst_79 = arith.constant dense<0.000000e+00> : vector<32x32xf32>
    %110 = tpu.matmul %109, %108, %cst_79 {dimension_numbers = #tpu.dot_dimension_numbers<[1], [0], [0], [1], [0, 0, 1, 1], [], []>} : vector<32x128xf32>, vector<128x32xf32>, vector<32x32xf32> -> vector<32x32xf32>
    %cst_80 = arith.constant 0.000000e+00 : f32
    %111 = vector.broadcast %cst_80 : f32 to vector<16x32xf32>
    %c0_81 = arith.constant 0 : index
    %c0_82 = arith.constant 0 : index
    %112 = vector.load %arg17[%c0_81, %c0_82] : memref<64x32xf32, #tpu.memory_space<vmem>>, vector<16x32xf32>
    tpu.vector_store %arg17[%c0_81, %c0_82], %111 {strides = array<i32>} : memref<64x32xf32, #tpu.memory_space<vmem>>, vector<16x32xf32>,
    %c16_83 = arith.constant 16 : index
    %c0_84 = arith.constant 0 : index
    %113 = vector.load %arg17[%c16_83, %c0_84] : memref<64x32xf32, #tpu.memory_space<vmem>>, vector<32x32xf32>
    tpu.vector_store %arg17[%c16_83, %c0_84], %110 {strides = array<i32>} : memref<64x32xf32, #tpu.memory_space<vmem>>, vector<32x32xf32>,
    %cst_85 = arith.constant 0.000000e+00 : f32
    %114 = vector.broadcast %cst_85 : f32 to vector<16x32xf32>
    %c48 = arith.constant 48 : index
    %c0_86 = arith.constant 0 : index
    %115 = vector.load %arg17[%c48, %c0_86] : memref<64x32xf32, #tpu.memory_space<vmem>>, vector<16x32xf32>
    tpu.vector_store %arg17[%c48, %c0_86], %114 {strides = array<i32>} : memref<64x32xf32, #tpu.memory_space<vmem>>, vector<16x32xf32>,
    %c11 = arith.constant 11 : index
    %c0_87 = arith.constant 0 : index
    %116 = vector.load %arg17[%c11, %c0_87] : memref<64x32xf32, #tpu.memory_space<vmem>>, vector<32x32xf32>
    %c0_88 = arith.constant 0 : index
    %c0_89 = arith.constant 0 : index
    %c0_90 = arith.constant 0 : index
    %117 = vector.load %arg6[%c0_88, %c0_89, %c0_90] : memref<9x32x1xf32, #tpu.memory_space<vmem>>, vector<1x32x1xf32>
    %118 = vector.shape_cast %117 : vector<1x32x1xf32> to vector<32x1xf32>
    %119 = vector.broadcast %118 : vector<32x1xf32> to vector<32x32xf32>
    %120 = arith.mulf %116, %119 : vector<32x32xf32>
    %c12 = arith.constant 12 : index
    %c0_91 = arith.constant 0 : index
    %121 = vector.load %arg17[%c12, %c0_91] : memref<64x32xf32, #tpu.memory_space<vmem>>, vector<32x32xf32>
    %c1_92 = arith.constant 1 : index
    %c0_93 = arith.constant 0 : index
    %c0_94 = arith.constant 0 : index
    %122 = vector.load %arg6[%c1_92, %c0_93, %c0_94] : memref<9x32x1xf32, #tpu.memory_space<vmem>>, vector<1x32x1xf32>
    %123 = vector.shape_cast %122 : vector<1x32x1xf32> to vector<32x1xf32>
    %124 = vector.broadcast %123 : vector<32x1xf32> to vector<32x32xf32>
    %125 = arith.mulf %121, %124 : vector<32x32xf32>
    %c13 = arith.constant 13 : index
    %c0_95 = arith.constant 0 : index
    %126 = vector.load %arg17[%c13, %c0_95] : memref<64x32xf32, #tpu.memory_space<vmem>>, vector<32x32xf32>
    %c2_96 = arith.constant 2 : index
    %c0_97 = arith.constant 0 : index
    %c0_98 = arith.constant 0 : index
    %127 = vector.load %arg6[%c2_96, %c0_97, %c0_98] : memref<9x32x1xf32, #tpu.memory_space<vmem>>, vector<1x32x1xf32>
    %128 = vector.shape_cast %127 : vector<1x32x1xf32> to vector<32x1xf32>
    %129 = vector.broadcast %128 : vector<32x1xf32> to vector<32x32xf32>
    %130 = arith.mulf %126, %129 : vector<32x32xf32>
    %c15_99 = arith.constant 15 : index
    %c0_100 = arith.constant 0 : index
    %131 = vector.load %arg17[%c15_99, %c0_100] : memref<64x32xf32, #tpu.memory_space<vmem>>, vector<32x32xf32>
    %c3_101 = arith.constant 3 : index
    %c0_102 = arith.constant 0 : index
    %c0_103 = arith.constant 0 : index
    %132 = vector.load %arg6[%c3_101, %c0_102, %c0_103] : memref<9x32x1xf32, #tpu.memory_space<vmem>>, vector<1x32x1xf32>
    %133 = vector.shape_cast %132 : vector<1x32x1xf32> to vector<32x1xf32>
    %134 = vector.broadcast %133 : vector<32x1xf32> to vector<32x32xf32>
    %135 = arith.mulf %131, %134 : vector<32x32xf32>
    %c16_104 = arith.constant 16 : index
    %c0_105 = arith.constant 0 : index
    %136 = vector.load %arg17[%c16_104, %c0_105] : memref<64x32xf32, #tpu.memory_space<vmem>>, vector<32x32xf32>
    %c4_106 = arith.constant 4 : index
    %c0_107 = arith.constant 0 : index
    %c0_108 = arith.constant 0 : index
    %137 = vector.load %arg6[%c4_106, %c0_107, %c0_108] : memref<9x32x1xf32, #tpu.memory_space<vmem>>, vector<1x32x1xf32>
    %138 = vector.shape_cast %137 : vector<1x32x1xf32> to vector<32x1xf32>
    %139 = vector.broadcast %138 : vector<32x1xf32> to vector<32x32xf32>
    %140 = arith.mulf %136, %139 : vector<32x32xf32>
    %c17_109 = arith.constant 17 : index
    %c0_110 = arith.constant 0 : index
    %141 = vector.load %arg17[%c17_109, %c0_110] : memref<64x32xf32, #tpu.memory_space<vmem>>, vector<32x32xf32>
    %c5_111 = arith.constant 5 : index
    %c0_112 = arith.constant 0 : index
    %c0_113 = arith.constant 0 : index
    %142 = vector.load %arg6[%c5_111, %c0_112, %c0_113] : memref<9x32x1xf32, #tpu.memory_space<vmem>>, vector<1x32x1xf32>
    %143 = vector.shape_cast %142 : vector<1x32x1xf32> to vector<32x1xf32>
    %144 = vector.broadcast %143 : vector<32x1xf32> to vector<32x32xf32>
    %145 = arith.mulf %141, %144 : vector<32x32xf32>
    %c19 = arith.constant 19 : index
    %c0_114 = arith.constant 0 : index
    %146 = vector.load %arg17[%c19, %c0_114] : memref<64x32xf32, #tpu.memory_space<vmem>>, vector<32x32xf32>
    %c6_115 = arith.constant 6 : index
    %c0_116 = arith.constant 0 : index
    %c0_117 = arith.constant 0 : index
    %147 = vector.load %arg6[%c6_115, %c0_116, %c0_117] : memref<9x32x1xf32, #tpu.memory_space<vmem>>, vector<1x32x1xf32>
    %148 = vector.shape_cast %147 : vector<1x32x1xf32> to vector<32x1xf32>
    %149 = vector.broadcast %148 : vector<32x1xf32> to vector<32x32xf32>
    %150 = arith.mulf %146, %149 : vector<32x32xf32>
    %c20 = arith.constant 20 : index
    %c0_118 = arith.constant 0 : index
    %151 = vector.load %arg17[%c20, %c0_118] : memref<64x32xf32, #tpu.memory_space<vmem>>, vector<32x32xf32>
    %c7_119 = arith.constant 7 : index
    %c0_120 = arith.constant 0 : index
    %c0_121 = arith.constant 0 : index
    %152 = vector.load %arg6[%c7_119, %c0_120, %c0_121] : memref<9x32x1xf32, #tpu.memory_space<vmem>>, vector<1x32x1xf32>
    %153 = vector.shape_cast %152 : vector<1x32x1xf32> to vector<32x1xf32>
    %154 = vector.broadcast %153 : vector<32x1xf32> to vector<32x32xf32>
    %155 = arith.mulf %151, %154 : vector<32x32xf32>
    %c21 = arith.constant 21 : index
    %c0_122 = arith.constant 0 : index
    %156 = vector.load %arg17[%c21, %c0_122] : memref<64x32xf32, #tpu.memory_space<vmem>>, vector<32x32xf32>
    %c8_123 = arith.constant 8 : index
    %c0_124 = arith.constant 0 : index
    %c0_125 = arith.constant 0 : index
    %157 = vector.load %arg6[%c8_123, %c0_124, %c0_125] : memref<9x32x1xf32, #tpu.memory_space<vmem>>, vector<1x32x1xf32>
    %158 = vector.shape_cast %157 : vector<1x32x1xf32> to vector<32x1xf32>
    %159 = vector.broadcast %158 : vector<32x1xf32> to vector<32x32xf32>
    %160 = arith.mulf %156, %159 : vector<32x32xf32>
    %161 = tpu.concatenate %120, %125, %130, %135, %140, %145, %150, %155, %160 in 1 : vector<32x32xf32>, vector<32x32xf32>, vector<32x32xf32>, vector<32x32xf32>, vector<32x32xf32>, vector<32x32xf32>, vector<32x32xf32>, vector<32x32xf32>, vector<32x32xf32> -> vector<32x288xf32>
    %c0_126 = arith.constant 0 : index
    %c0_127 = arith.constant 0 : index
    %162 = vector.load %arg7[%c0_126, %c0_127] : memref<288x64xf32, #tpu.memory_space<vmem>>, vector<288x64xf32>
    %cst_128 = arith.constant dense<0.000000e+00> : vector<32x64xf32>
    %163 = tpu.matmul %161, %162, %cst_128 {dimension_numbers = #tpu.dot_dimension_numbers<[1], [0], [0], [1], [0, 0, 1, 1], [], []>} : vector<32x288xf32>, vector<288x64xf32>, vector<32x64xf32> -> vector<32x64xf32>
    %c0_129 = arith.constant 0 : index
    %c0_130 = arith.constant 0 : index
    %164 = vector.load %arg8[%c0_129, %c0_130] : memref<1x64xf32, #tpu.memory_space<vmem>>, vector<1x64xf32>
    %165 = vector.broadcast %164 : vector<1x64xf32> to vector<32x64xf32>
    %166 = arith.addf %163, %165 : vector<32x64xf32>
    %cst_131 = arith.constant 0.000000e+00 : f32
    %167 = vector.broadcast %cst_131 : f32 to vector<32x64xf32>
    %168 = arith.maximumf %166, %167 : vector<32x64xf32>
    %c0_132 = arith.constant 0 : index
    %c0_133 = arith.constant 0 : index
    %169 = vector.load %arg18[%c0_132, %c0_133] : memref<40x64xf32, #tpu.memory_space<vmem>>, vector<32x64xf32>
    tpu.vector_store %arg18[%c0_132, %c0_133], %168 {strides = array<i32>} : memref<40x64xf32, #tpu.memory_space<vmem>>, vector<32x64xf32>,
    %cst_134 = arith.constant 0.000000e+00 : f32
    %170 = vector.broadcast %cst_134 : f32 to vector<8x64xf32>
    %c32 = arith.constant 32 : index
    %c0_135 = arith.constant 0 : index
    %171 = vector.load %arg18[%c32, %c0_135] : memref<40x64xf32, #tpu.memory_space<vmem>>, vector<8x64xf32>
    tpu.vector_store %arg18[%c32, %c0_135], %170 {strides = array<i32>} : memref<40x64xf32, #tpu.memory_space<vmem>>, vector<8x64xf32>,
    %c1_136 = arith.constant 1 : index
    %c0_137 = arith.constant 0 : index
    %172 = vector.load %arg18[%c1_136, %c0_137] : memref<40x64xf32, #tpu.memory_space<vmem>>, vector<32x64xf32>
    %173 = arith.maximumf %168, %172 : vector<32x64xf32>
    %c4_138 = arith.constant 4 : index
    %c0_139 = arith.constant 0 : index
    %174 = vector.load %arg18[%c4_138, %c0_139] : memref<40x64xf32, #tpu.memory_space<vmem>>, vector<32x64xf32>
    %175 = arith.maximumf %173, %174 : vector<32x64xf32>
    %c5_140 = arith.constant 5 : index
    %c0_141 = arith.constant 0 : index
    %176 = vector.load %arg18[%c5_140, %c0_141] : memref<40x64xf32, #tpu.memory_space<vmem>>, vector<32x64xf32>
    %177 = arith.maximumf %175, %176 : vector<32x64xf32>
    %c0_142 = arith.constant 0 : index
    %c0_143 = arith.constant 0 : index
    %178 = vector.load %arg9[%c0_142, %c0_143] : memref<8x32xf32, #tpu.memory_space<vmem>>, vector<8x32xf32>
    %cst_144 = arith.constant dense<0.000000e+00> : vector<8x64xf32>
    %179 = tpu.matmul %178, %177, %cst_144 {dimension_numbers = #tpu.dot_dimension_numbers<[1], [0], [0], [1], [0, 0, 1, 1], [], []>} : vector<8x32xf32>, vector<32x64xf32>, vector<8x64xf32> -> vector<8x64xf32>
    %180 = vector.extract_strided_slice %179 {offsets = [0, 0], sizes = [2, 64], strides = [1, 1]} : vector<8x64xf32> to vector<2x64xf32>
    %181 = vector.extract_strided_slice %179 {offsets = [2, 0], sizes = [2, 64], strides = [1, 1]} : vector<8x64xf32> to vector<2x64xf32>
    %182 = vector.extract_strided_slice %179 {offsets = [4, 0], sizes = [2, 64], strides = [1, 1]} : vector<8x64xf32> to vector<2x64xf32>
    %183 = vector.extract_strided_slice %179 {offsets = [6, 0], sizes = [2, 64], strides = [1, 1]} : vector<8x64xf32> to vector<2x64xf32>
    %184 = tpu.concatenate %180, %181, %182, %183 in 1 : vector<2x64xf32>, vector<2x64xf32>, vector<2x64xf32>, vector<2x64xf32> -> vector<2x256xf32>
    %c0_145 = arith.constant 0 : index
    %c0_146 = arith.constant 0 : index
    %185 = vector.load %arg10[%c0_145, %c0_146] : memref<256x64xf32, #tpu.memory_space<vmem>>, vector<256x64xf32>
    %cst_147 = arith.constant dense<0.000000e+00> : vector<2x64xf32>
    %186 = tpu.matmul %184, %185, %cst_147 {dimension_numbers = #tpu.dot_dimension_numbers<[1], [0], [0], [1], [0, 0, 1, 1], [], []>} : vector<2x256xf32>, vector<256x64xf32>, vector<2x64xf32> -> vector<2x64xf32>
    %c0_148 = arith.constant 0 : index
    %c0_149 = arith.constant 0 : index
    %187 = vector.load %arg11[%c0_148, %c0_149] : memref<1x64xf32, #tpu.memory_space<vmem>>, vector<1x64xf32>
    %188 = vector.broadcast %187 : vector<1x64xf32> to vector<2x64xf32>
    %189 = arith.addf %186, %188 : vector<2x64xf32>
    %cst_150 = arith.constant 0.000000e+00 : f32
    %190 = vector.broadcast %cst_150 : f32 to vector<2x64xf32>
    %191 = arith.maximumf %189, %190 : vector<2x64xf32>
    %c0_151 = arith.constant 0 : index
    %c0_152 = arith.constant 0 : index
    %192 = vector.load %arg12[%c0_151, %c0_152] : memref<64x128xf32, #tpu.memory_space<vmem>>, vector<64x128xf32>
    %cst_153 = arith.constant dense<0.000000e+00> : vector<2x128xf32>
    %193 = tpu.matmul %191, %192, %cst_153 {dimension_numbers = #tpu.dot_dimension_numbers<[1], [0], [0], [1], [0, 0, 1, 1], [], []>} : vector<2x64xf32>, vector<64x128xf32>, vector<2x128xf32> -> vector<2x128xf32>
    %c0_154 = arith.constant 0 : index
    %c0_155 = arith.constant 0 : index
    %194 = vector.load %arg13[%c0_154, %c0_155] : memref<1x128xf32, #tpu.memory_space<vmem>>, vector<1x128xf32>
    %195 = vector.broadcast %194 : vector<1x128xf32> to vector<2x128xf32>
    %196 = arith.addf %193, %195 : vector<2x128xf32>
    %c0_156 = arith.constant 0 : index
    %c0_157 = arith.constant 0 : index
    %197 = vector.load %arg14[%c0_156, %c0_157] : memref<2x128xf32, #tpu.memory_space<vmem>>, vector<2x128xf32>
    tpu.vector_store %arg14[%c0_156, %c0_157], %196 {strides = array<i32>} : memref<2x128xf32, #tpu.memory_space<vmem>>, vector<2x128xf32>,
    return
  }
  func.func @transform_0(%arg0: i32) -> (i32, i32) {
    %c0_i32 = arith.constant 0 : i32
    %c0_i32_0 = arith.constant 0 : i32
    %c0_i32_1 = arith.constant 0 : i32
    return %c0_i32, %c0_i32_0 : i32, i32
  }
  func.func @transform_1(%arg0: i32) -> (i32, i32, i32) {
    %c0_i32 = arith.constant 0 : i32
    %c0_i32_0 = arith.constant 0 : i32
    %c0_i32_1 = arith.constant 0 : i32
    %c0_i32_2 = arith.constant 0 : i32
    return %c0_i32, %c0_i32_0, %c0_i32_1 : i32, i32, i32
  }
  func.func @transform_2(%arg0: i32) -> (i32, i32, i32) {
    %c0_i32 = arith.constant 0 : i32
    %c0_i32_0 = arith.constant 0 : i32
    %c0_i32_1 = arith.constant 0 : i32
    %c0_i32_2 = arith.constant 0 : i32
    return %c0_i32, %c0_i32_0, %c0_i32_1 : i32, i32, i32
  }
  func.func @transform_3(%arg0: i32) -> (i32, i32) {
    %c0_i32 = arith.constant 0 : i32
    %c0_i32_0 = arith.constant 0 : i32
    %c0_i32_1 = arith.constant 0 : i32
    return %c0_i32, %c0_i32_0 : i32, i32
  }
  func.func @transform_4(%arg0: i32) -> (i32, i32) {
    %c0_i32 = arith.constant 0 : i32
    %c0_i32_0 = arith.constant 0 : i32
    %c0_i32_1 = arith.constant 0 : i32
    return %c0_i32, %c0_i32_0 : i32, i32
  }
  func.func @transform_5(%arg0: i32) -> (i32, i32, i32) {
    %c0_i32 = arith.constant 0 : i32
    %c0_i32_0 = arith.constant 0 : i32
    %c0_i32_1 = arith.constant 0 : i32
    %c0_i32_2 = arith.constant 0 : i32
    return %c0_i32, %c0_i32_0, %c0_i32_1 : i32, i32, i32
  }
  func.func @transform_6(%arg0: i32) -> (i32, i32) {
    %c0_i32 = arith.constant 0 : i32
    %c0_i32_0 = arith.constant 0 : i32
    %c0_i32_1 = arith.constant 0 : i32
    return %c0_i32, %c0_i32_0 : i32, i32
  }
  func.func @transform_7(%arg0: i32) -> (i32, i32) {
    %c0_i32 = arith.constant 0 : i32
    %c0_i32_0 = arith.constant 0 : i32
    %c0_i32_1 = arith.constant 0 : i32
    return %c0_i32, %c0_i32_0 : i32, i32
  }
  func.func @transform_8(%arg0: i32) -> (i32, i32) {
    %c0_i32 = arith.constant 0 : i32
    %c0_i32_0 = arith.constant 0 : i32
    %c0_i32_1 = arith.constant 0 : i32
    return %c0_i32, %c0_i32_0 : i32, i32
  }
  func.func @transform_9(%arg0: i32) -> (i32, i32) {
    %c0_i32 = arith.constant 0 : i32
    %c0_i32_0 = arith.constant 0 : i32
    %c0_i32_1 = arith.constant 0 : i32
    return %c0_i32, %c0_i32_0 : i32, i32
  }
  func.func @transform_10(%arg0: i32) -> (i32, i32) {
    %c0_i32 = arith.constant 0 : i32
    %c0_i32_0 = arith.constant 0 : i32
    %c0_i32_1 = arith.constant 0 : i32
    return %c0_i32, %c0_i32_0 : i32, i32
  }
  func.func @transform_11(%arg0: i32) -> (i32, i32) {
    %c0_i32 = arith.constant 0 : i32
    %c0_i32_0 = arith.constant 0 : i32
    %c0_i32_1 = arith.constant 0 : i32
    return %c0_i32, %c0_i32_0 : i32, i32
  }
  func.func @transform_12(%arg0: i32) -> (i32, i32) {
    %c0_i32 = arith.constant 0 : i32
    %c0_i32_0 = arith.constant 0 : i32
    %c0_i32_1 = arith.constant 0 : i32
    return %c0_i32, %c0_i32_0 : i32, i32
  }
  func.func @transform_13(%arg0: i32) -> (i32, i32) {
    %c0_i32 = arith.constant 0 : i32
    %c0_i32_0 = arith.constant 0 : i32
    %c0_i32_1 = arith.constant 0 : i32
    return %c0_i32, %c0_i32_0 : i32, i32
  }
}

</mosaic_0001>

<llo_original>
// kernel: forward.1
$region0: #{forward.1}
  #allocation0 [shape = 'u32[]', space=smem, size = 0x4, offset = 0x4, fixed_abs, tag = 'smem constant byte address 0x4 - core index']
  #allocation1 [shape = 'u32[144,128]{1,0:T(1,128)}', space=vmem, size = 0x12000, scoped, tag = 'internal scratch']
  #allocation2 [shape = 'f32[160,1]{1,0:T(8,128)}', space=vmem, size = 0x14000, scoped, tag = 'scratch operand']
  #allocation3 [shape = 'f32[144,32]{1,0:T(8,128)}', space=vmem, size = 0x12000, scoped, tag = 'scratch operand']
  #allocation4 [shape = 'f32[64,32]{1,0:T(8,128)}', space=vmem, size = 0x8000, scoped, tag = 'scratch operand']
  #allocation5 [shape = 'f32[40,64]{1,0:T(8,128)}', space=vmem, size = 0x5000, scoped, tag = 'scratch operand']
  %s0 = inlined_call_operand.vmem [shape: f32[128,1], index: 0, kind: input, shape index: {}]
  %s1 = inlined_call_operand.vmem [shape: f32[9,128,1], index: 1, kind: input, shape index: {}]
  %s2 = inlined_call_operand.vmem [shape: f32[9,1,32], index: 2, kind: input, shape index: {}]
  %s3 = inlined_call_operand.vmem [shape: f32[1,32], index: 3, kind: input, shape index: {}]
  %s4 = inlined_call_operand.vmem [shape: f32[32,128], index: 4, kind: input, shape index: {}]
  %s5 = inlined_call_operand.vmem [shape: f32[9,32,1], index: 5, kind: input, shape index: {}]
  %s6 = inlined_call_operand.vmem [shape: f32[288,64], index: 6, kind: input, shape index: {}]
  %s7 = inlined_call_operand.vmem [shape: f32[1,64], index: 7, kind: input, shape index: {}]
  %s8 = inlined_call_operand.vmem [shape: f32[8,32], index: 8, kind: input, shape index: {}]
  %s9 = inlined_call_operand.vmem [shape: f32[256,64], index: 9, kind: input, shape index: {}]
  %s10 = inlined_call_operand.vmem [shape: f32[1,64], index: 10, kind: input, shape index: {}]
  %s11 = inlined_call_operand.vmem [shape: f32[64,128], index: 11, kind: input, shape index: {}]
  %s12 = inlined_call_operand.vmem [shape: f32[1,128], index: 12, kind: input, shape index: {}]
  %s13 = inlined_call_operand.hbm [shape: f32[2,128], index: 13, kind: output, shape index: {}]
  %s14 = sld [smem:[#allocation0]]
  $region62: #{forward.1} parent=0
    _
  %s16 = ssub.s32 1, %s14
  %s17 = scalar_select 0, %s16, %s14
  $region1: #{forward.1} parent=0
    #allocation6 [shape = 'u8[1024]{0}', space=vmem, size = 0x400, scoped, tag = 'output window, operand 0, single buffered']
    #allocation7 [shape = 's32[1]{0}', space=sflag, size = 0x4, scoped, tag = 'scoped memory for forward.1']
    %18 = vsyncpa [#allocation7], 0
    // Predicated region
    $region2: #{forward.1} parent=1 // pred_check
      _
    $region3: #{forward.1} parent=1 // pred_check_branch
      %20 = sbr.rel (0) target = $region5
    $region4: #{forward.1} parent=1 // pred_region
      _
    $region5: #{forward.1} parent=1 // pred_fallthru
      _
    // Predicated region
    $region6: #{forward.1} parent=1 // pred_check
      _
    $region7: #{forward.1} parent=1 // pred_check_branch
      %22 = sbr.rel (0) target = $region9
    $region8: #{forward.1} parent=1 // pred_region
      _
    $region9: #{forward.1} parent=1 // pred_fallthru
      _
    // Predicated region
    $region10: #{forward.1} parent=1 // pred_check
      _
    $region11: #{forward.1} parent=1 // pred_check_branch
      %24 = sbr.rel (0) target = $region13
    $region12: #{forward.1} parent=1 // pred_region
      _
    $region13: #{forward.1} parent=1 // pred_fallthru
      _
    // Predicated region
    $region14: #{forward.1} parent=1 // pred_check
      _
    $region15: #{forward.1} parent=1 // pred_check_branch
      %26 = sbr.rel (0) target = $region17
    $region16: #{forward.1} parent=1 // pred_region
      _
    $region17: #{forward.1} parent=1 // pred_fallthru
      _
    // Predicated region
    $region18: #{forward.1} parent=1 // pred_check
      _
    $region19: #{forward.1} parent=1 // pred_check_branch
      %28 = sbr.rel (0) target = $region21
    $region20: #{forward.1} parent=1 // pred_region
      _
    $region21: #{forward.1} parent=1 // pred_fallthru
      _
    // Predicated region
    $region22: #{forward.1} parent=1 // pred_check
      _
    $region23: #{forward.1} parent=1 // pred_check_branch
      %30 = sbr.rel (0) target = $region25
    $region24: #{forward.1} parent=1 // pred_region
      _
    $region25: #{forward.1} parent=1 // pred_fallthru
      _
    // Predicated region
    $region26: #{forward.1} parent=1 // pred_check
      _
    $region27: #{forward.1} parent=1 // pred_check_branch
      %32 = sbr.rel (0) target = $region29
    $region28: #{forward.1} parent=1 // pred_region
      _
    $region29: #{forward.1} parent=1 // pred_fallthru
      _
    // Predicated region
    $region30: #{forward.1} parent=1 // pred_check
      _
    $region31: #{forward.1} parent=1 // pred_check_branch
      %34 = sbr.rel (0) target = $region33
    $region32: #{forward.1} parent=1 // pred_region
      _
    $region33: #{forward.1} parent=1 // pred_fallthru
      _
    // Predicated region
    $region34: #{forward.1} parent=1 // pred_check
      _
    $region35: #{forward.1} parent=1 // pred_check_branch
      %36 = sbr.rel (0) target = $region37
    $region36: #{forward.1} parent=1 // pred_region
      _
    $region37: #{forward.1} parent=1 // pred_fallthru
      _
    // Predicated region
    $region38: #{forward.1} parent=1 // pred_check
      _
    $region39: #{forward.1} parent=1 // pred_check_branch
      %38 = sbr.rel (0) target = $region41
    $region40: #{forward.1} parent=1 // pred_region
      _
    $region41: #{forward.1} parent=1 // pred_fallthru
      _
    // Predicated region
    $region42: #{forward.1} parent=1 // pred_check
      _
    $region43: #{forward.1} parent=1 // pred_check_branch
      %40 = sbr.rel (0) target = $region45
    $region44: #{forward.1} parent=1 // pred_region
      _
    $region45: #{forward.1} parent=1 // pred_fallthru
      _
    // Predicated region
    $region46: #{forward.1} parent=1 // pred_check
      _
    $region47: #{forward.1} parent=1 // pred_check_branch
      %42 = sbr.rel (0) target = $region49
    $region48: #{forward.1} parent=1 // pred_region
      _
    $region49: #{forward.1} parent=1 // pred_fallthru
      _
    // Predicated region
    $region50: #{forward.1} parent=1 // pred_check
      _
    $region51: #{forward.1} parent=1 // pred_check_branch
      %44 = sbr.rel (0) target = $region53
    $region52: #{forward.1} parent=1 // pred_region
      _
    $region53: #{forward.1} parent=1 // pred_fallthru
      _
    %vm45 = vcmask 7168
    %46 = vst.msk [vmem:[#allocation2] sm:$0xff] %vm45, 0.0
    %47 = vst.msk [vmem:[#allocation2 + $0x8] sm:$0xff] %vm45, 0.0
    %v48 = vld [vmem:[%s0] sm:$0xff]
    %v49 = vld [vmem:[%s0 + $0x8] sm:$0xff]
    %v50 = vld [vmem:[%s0 + $0x10] sm:$0xff]
    %v51 = vld [vmem:[%s0 + $0x18] sm:$0xff]
    %v52 = vld [vmem:[%s0 + $0x20] sm:$0xff]
    %v53 = vld [vmem:[%s0 + $0x28] sm:$0xff]
    %v54 = vld [vmem:[%s0 + $0x30] sm:$0xff]
    %v55 = vld [vmem:[%s0 + $0x38] sm:$0xff]
    %v56 = vld [vmem:[%s0 + $0x40] sm:$0xff]
    %v57 = vld [vmem:[%s0 + $0x48] sm:$0xff]
    %v58 = vld [vmem:[%s0 + $0x50] sm:$0xff]
    %v59 = vld [vmem:[%s0 + $0x58] sm:$0xff]
    %v60 = vld [vmem:[%s0 + $0x60] sm:$0xff]
    %v61 = vld [vmem:[%s0 + $0x68] sm:$0xff]
    %v62 = vld [vmem:[%s0 + $0x70] sm:$0xff]
    %v63 = vld [vmem:[%s0 + $0x78] sm:$0xff]
    %64 = vst.msk [vmem:[#allocation2 + $0x10] sm:$0xff] %vm45, %v48
    %65 = vst.msk [vmem:[#allocation2 + $0x18] sm:$0xff] %vm45, %v49
    %66 = vst.msk [vmem:[#allocation2 + $0x20] sm:$0xff] %vm45, %v50
    %67 = vst.msk [vmem:[#allocation2 + $0x28] sm:$0xff] %vm45, %v51
    %68 = vst.msk [vmem:[#allocation2 + $0x30] sm:$0xff] %vm45, %v52
    %69 = vst.msk [vmem:[#allocation2 + $0x38] sm:$0xff] %vm45, %v53
    %70 = vst.msk [vmem:[#allocation2 + $0x40] sm:$0xff] %vm45, %v54
    %71 = vst.msk [vmem:[#allocation2 + $0x48] sm:$0xff] %vm45, %v55
    %72 = vst.msk [vmem:[#allocation2 + $0x50] sm:$0xff] %vm45, %v56
    %73 = vst.msk [vmem:[#allocation2 + $0x58] sm:$0xff] %vm45, %v57
    %74 = vst.msk [vmem:[#allocation2 + $0x60] sm:$0xff] %vm45, %v58
    %75 = vst.msk [vmem:[#allocation2 + $0x68] sm:$0xff] %vm45, %v59
    %76 = vst.msk [vmem:[#allocation2 + $0x70] sm:$0xff] %vm45, %v60
    %77 = vst.msk [vmem:[#allocation2 + $0x78] sm:$0xff] %vm45, %v61
    %78 = vst.msk [vmem:[#allocation2 + $0x80] sm:$0xff] %vm45, %v62
    %79 = vst.msk [vmem:[#allocation2 + $0x88] sm:$0xff] %vm45, %v63
    %80 = vst.msk [vmem:[#allocation2 + $0x90] sm:$0xff] %vm45, 0.0
    %81 = vst.msk [vmem:[#allocation2 + $0x98] sm:$0xff] %vm45, 0.0
    %v82 = vld [vmem:[#allocation2 + $0x7] sm:$0xff]
    %v83 = vld [vmem:[#allocation2 + $0xf] sm:$0xff]
    %v84 = vld [vmem:[#allocation2 + $0x17] sm:$0xff]
    %v85 = vld [vmem:[#allocation2 + $0x1f] sm:$0xff]
    %v86 = vld [vmem:[#allocation2 + $0x27] sm:$0xff]
    %v87 = vld [vmem:[#allocation2 + $0x2f] sm:$0xff]
    %v88 = vld [vmem:[#allocation2 + $0x37] sm:$0xff]
    %v89 = vld [vmem:[#allocation2 + $0x3f] sm:$0xff]
    %v90 = vld [vmem:[#allocation2 + $0x47] sm:$0xff]
    %v91 = vld [vmem:[#allocation2 + $0x4f] sm:$0xff]
    %v92 = vld [vmem:[#allocation2 + $0x57] sm:$0xff]
    %v93 = vld [vmem:[#allocation2 + $0x5f] sm:$0xff]
    %v94 = vld [vmem:[#allocation2 + $0x67] sm:$0xff]
    %v95 = vld [vmem:[#allocation2 + $0x6f] sm:$0xff]
    %v96 = vld [vmem:[#allocation2 + $0x77] sm:$0xff]
    %v97 = vld [vmem:[#allocation2 + $0x7f] sm:$0xff]
    %v98 = vld [vmem:[%s1] sm:$0xff]
    %v99 = vld [vmem:[%s1 + $0x8] sm:$0xff]
    %v100 = vld [vmem:[%s1 + $0x10] sm:$0xff]
    %v101 = vld [vmem:[%s1 + $0x18] sm:$0xff]
    %v102 = vld [vmem:[%s1 + $0x20] sm:$0xff]
    %v103 = vld [vmem:[%s1 + $0x28] sm:$0xff]
    %v104 = vld [vmem:[%s1 + $0x30] sm:$0xff]
    %v105 = vld [vmem:[%s1 + $0x38] sm:$0xff]
    %v106 = vld [vmem:[%s1 + $0x40] sm:$0xff]
    %v107 = vld [vmem:[%s1 + $0x48] sm:$0xff]
    %v108 = vld [vmem:[%s1 + $0x50] sm:$0xff]
    %v109 = vld [vmem:[%s1 + $0x58] sm:$0xff]
    %v110 = vld [vmem:[%s1 + $0x60] sm:$0xff]
    %v111 = vld [vmem:[%s1 + $0x68] sm:$0xff]
    %v112 = vld [vmem:[%s1 + $0x70] sm:$0xff]
    %v113 = vld [vmem:[%s1 + $0x78] sm:$0xff]
    %v114 = vmul.f32 %v82, %v98
    %v115 = vmul.f32 %v83, %v99
    %v116 = vmul.f32 %v84, %v100
    %v117 = vmul.f32 %v85, %v101
    %v118 = vmul.f32 %v86, %v102
    %v119 = vmul.f32 %v87, %v103
    %v120 = vmul.f32 %v88, %v104
    %v121 = vmul.f32 %v89, %v105
    %v122 = vmul.f32 %v90, %v106
    %v123 = vmul.f32 %v91, %v107
    %v124 = vmul.f32 %v92, %v108
    %v125 = vmul.f32 %v93, %v109
    %v126 = vmul.f32 %v94, %v110
    %v127 = vmul.f32 %v95, %v111
    %v128 = vmul.f32 %v96, %v112
    %v129 = vmul.f32 %v97, %v113
    %v130 = vld [vmem:[%s2] sm:$0x1]
    %132 = vset.pattern.permute.xlu0 0
    %133 = vperm.xlu0 %132, %v114
    %v134 = vpop.permute.xlu0 %133
    %137 = vset.pattern.permute.xlu0 0
    %138 = vperm.xlu0 %137, %v115
    %v139 = vpop.permute.xlu0 %138
    %142 = vset.pattern.permute.xlu0 0
    %143 = vperm.xlu0 %142, %v116
    %v144 = vpop.permute.xlu0 %143
    %147 = vset.pattern.permute.xlu0 0
    %148 = vperm.xlu0 %147, %v117
    %v149 = vpop.permute.xlu0 %148
    %152 = vset.pattern.permute.xlu0 0
    %153 = vperm.xlu0 %152, %v118
    %v154 = vpop.permute.xlu0 %153
    %157 = vset.pattern.permute.xlu0 0
    %158 = vperm.xlu0 %157, %v119
    %v159 = vpop.permute.xlu0 %158
    %162 = vset.pattern.permute.xlu0 0
    %163 = vperm.xlu0 %162, %v120
    %v164 = vpop.permute.xlu0 %163
    %167 = vset.pattern.permute.xlu0 0
    %168 = vperm.xlu0 %167, %v121
    %v169 = vpop.permute.xlu0 %168
    %172 = vset.pattern.permute.xlu0 0
    %173 = vperm.xlu0 %172, %v122
    %v174 = vpop.permute.xlu0 %173
    %177 = vset.pattern.permute.xlu0 0
    %178 = vperm.xlu0 %177, %v123
    %v179 = vpop.permute.xlu0 %178
    %182 = vset.pattern.permute.xlu0 0
    %183 = vperm.xlu0 %182, %v124
    %v184 = vpop.permute.xlu0 %183
    %187 = vset.pattern.permute.xlu0 0
    %188 = vperm.xlu0 %187, %v125
    %v189 = vpop.permute.xlu0 %188
    %192 = vset.pattern.permute.xlu0 0
    %193 = vperm.xlu0 %192, %v126
    %v194 = vpop.permute.xlu0 %193
    %197 = vset.pattern.permute.xlu0 0
    %198 = vperm.xlu0 %197, %v127
    %v199 = vpop.permute.xlu0 %198
    %202 = vset.pattern.permute.xlu0 0
    %203 = vperm.xlu0 %202, %v128
    %v204 = vpop.permute.xlu0 %203
    %207 = vset.pattern.permute.xlu0 0
    %208 = vperm.xlu0 %207, %v129
    %v209 = vpop.permute.xlu0 %208
    %v212 = vlaneseq
    %v213 = vshrl.u32 %v212, 7
    %v214 = vsub.s32 0, %v213
    %v215 = vrot.slane %v130, %v214
    %v217 = vmul.f32 %v134, %v215
    %v218 = vmul.f32 %v139, %v215
    %v219 = vmul.f32 %v144, %v215
    %v220 = vmul.f32 %v149, %v215
    %v221 = vmul.f32 %v154, %v215
    %v222 = vmul.f32 %v159, %v215
    %v223 = vmul.f32 %v164, %v215
    %v224 = vmul.f32 %v169, %v215
    %v225 = vmul.f32 %v174, %v215
    %v226 = vmul.f32 %v179, %v215
    %v227 = vmul.f32 %v184, %v215
    %v228 = vmul.f32 %v189, %v215
    %v229 = vmul.f32 %v194, %v215
    %v230 = vmul.f32 %v199, %v215
    %v231 = vmul.f32 %v204, %v215
    %v232 = vmul.f32 %v209, %v215
    %v233 = vld [vmem:[#allocation2 + $0x8] sm:$0xff]
    %v234 = vld [vmem:[#allocation2 + $0x10] sm:$0xff]
    %v235 = vld [vmem:[#allocation2 + $0x18] sm:$0xff]
    %v236 = vld [vmem:[#allocation2 + $0x20] sm:$0xff]
    %v237 = vld [vmem:[#allocation2 + $0x28] sm:$0xff]
    %v238 = vld [vmem:[#allocation2 + $0x30] sm:$0xff]
    %v239 = vld [vmem:[#allocation2 + $0x38] sm:$0xff]
    %v240 = vld [vmem:[#allocation2 + $0x40] sm:$0xff]
    %v241 = vld [vmem:[#allocation2 + $0x48] sm:$0xff]
    %v242 = vld [vmem:[#allocation2 + $0x50] sm:$0xff]
    %v243 = vld [vmem:[#allocation2 + $0x58] sm:$0xff]
    %v244 = vld [vmem:[#allocation2 + $0x60] sm:$0xff]
    %v245 = vld [vmem:[#allocation2 + $0x68] sm:$0xff]
    %v246 = vld [vmem:[#allocation2 + $0x70] sm:$0xff]
    %v247 = vld [vmem:[#allocation2 + $0x78] sm:$0xff]
    %v248 = vld [vmem:[#allocation2 + $0x80] sm:$0xff]
    %s249 = scalar_lea.vmem %s1, 128
    %v250 = vld [vmem:[%s249] sm:$0xff]
    %v251 = vld [vmem:[%s249 + $0x8] sm:$0xff]
    %v252 = vld [vmem:[%s249 + $0x10] sm:$0xff]
    %v253 = vld [vmem:[%s249 + $0x18] sm:$0xff]
    %v254 = vld [vmem:[%s249 + $0x20] sm:$0xff]
    %v255 = vld [vmem:[%s249 + $0x28] sm:$0xff]
    %v256 = vld [vmem:[%s249 + $0x30] sm:$0xff]
    %v257 = vld [vmem:[%s249 + $0x38] sm:$0xff]
    %v258 = vld [vmem:[%s249 + $0x40] sm:$0xff]
    %v259 = vld [vmem:[%s249 + $0x48] sm:$0xff]
    %v260 = vld [vmem:[%s249 + $0x50] sm:$0xff]
    %v261 = vld [vmem:[%s249 + $0x58] sm:$0xff]
    %v262 = vld [vmem:[%s249 + $0x60] sm:$0xff]
    %v263 = vld [vmem:[%s249 + $0x68] sm:$0xff]
    %v264 = vld [vmem:[%s249 + $0x70] sm:$0xff]
    %v265 = vld [vmem:[%s249 + $0x78] sm:$0xff]
    %v266 = vmul.f32 %v233, %v250
    %v267 = vmul.f32 %v234, %v251
    %v268 = vmul.f32 %v235, %v252
    %v269 = vmul.f32 %v236, %v253
    %v270 = vmul.f32 %v237, %v254
    %v271 = vmul.f32 %v238, %v255
    %v272 = vmul.f32 %v239, %v256
    %v273 = vmul.f32 %v240, %v257
    %v274 = vmul.f32 %v241, %v258
    %v275 = vmul.f32 %v242, %v259
    %v276 = vmul.f32 %v243, %v260
    %v277 = vmul.f32 %v244, %v261
    %v278 = vmul.f32 %v245, %v262
    %v279 = vmul.f32 %v246, %v263
    %v280 = vmul.f32 %v247, %v264
    %v281 = vmul.f32 %v248, %v265
    %s282 = scalar_lea.vmem %s2, 1
    %v283 = vld [vmem:[%s282] sm:$0x1]
    %285 = vset.pattern.permute.xlu0 0
    %286 = vperm.xlu0 %285, %v266
    %v287 = vpop.permute.xlu0 %286
    %290 = vset.pattern.permute.xlu0 0
    %291 = vperm.xlu0 %290, %v267
    %v292 = vpop.permute.xlu0 %291
    %295 = vset.pattern.permute.xlu0 0
    %296 = vperm.xlu0 %295, %v268
    %v297 = vpop.permute.xlu0 %296
    %300 = vset.pattern.permute.xlu0 0
    %301 = vperm.xlu0 %300, %v269
    %v302 = vpop.permute.xlu0 %301
    %305 = vset.pattern.permute.xlu0 0
    %306 = vperm.xlu0 %305, %v270
    %v307 = vpop.permute.xlu0 %306
    %310 = vset.pattern.permute.xlu0 0
    %311 = vperm.xlu0 %310, %v271
    %v312 = vpop.permute.xlu0 %311
    %315 = vset.pattern.permute.xlu0 0
    %316 = vperm.xlu0 %315, %v272
    %v317 = vpop.permute.xlu0 %316
    %320 = vset.pattern.permute.xlu0 0
    %321 = vperm.xlu0 %320, %v273
    %v322 = vpop.permute.xlu0 %321
    %325 = vset.pattern.permute.xlu0 0
    %326 = vperm.xlu0 %325, %v274
    %v327 = vpop.permute.xlu0 %326
    %330 = vset.pattern.permute.xlu0 0
    %331 = vperm.xlu0 %330, %v275
    %v332 = vpop.permute.xlu0 %331
    %335 = vset.pattern.permute.xlu0 0
    %336 = vperm.xlu0 %335, %v276
    %v337 = vpop.permute.xlu0 %336
    %340 = vset.pattern.permute.xlu0 0
    %341 = vperm.xlu0 %340, %v277
    %v342 = vpop.permute.xlu0 %341
    %345 = vset.pattern.permute.xlu0 0
    %346 = vperm.xlu0 %345, %v278
    %v347 = vpop.permute.xlu0 %346
    %350 = vset.pattern.permute.xlu0 0
    %351 = vperm.xlu0 %350, %v279
    %v352 = vpop.permute.xlu0 %351
    %355 = vset.pattern.permute.xlu0 0
    %356 = vperm.xlu0 %355, %v280
    %v357 = vpop.permute.xlu0 %356
    %360 = vset.pattern.permute.xlu0 0
    %361 = vperm.xlu0 %360, %v281
    %v362 = vpop.permute.xlu0 %361
    %v365 = vlaneseq
    %v366 = vshrl.u32 %v365, 7
    %v367 = vsub.s32 0, %v366
    %v368 = vrot.slane %v283, %v367
    %v370 = vmul.f32 %v287, %v368
    %v371 = vmul.f32 %v292, %v368
    %v372 = vmul.f32 %v297, %v368
    %v373 = vmul.f32 %v302, %v368
    %v374 = vmul.f32 %v307, %v368
    %v375 = vmul.f32 %v312, %v368
    %v376 = vmul.f32 %v317, %v368
    %v377 = vmul.f32 %v322, %v368
    %v378 = vmul.f32 %v327, %v368
    %v379 = vmul.f32 %v332, %v368
    %v380 = vmul.f32 %v337, %v368
    %v381 = vmul.f32 %v342, %v368
    %v382 = vmul.f32 %v347, %v368
    %v383 = vmul.f32 %v352, %v368
    %v384 = vmul.f32 %v357, %v368
    %v385 = vmul.f32 %v362, %v368
    %v386 = vadd.f32 %v217, %v370
    %v387 = vadd.f32 %v218, %v371
    %v388 = vadd.f32 %v219, %v372
    %v389 = vadd.f32 %v220, %v373
    %v390 = vadd.f32 %v221, %v374
    %v391 = vadd.f32 %v222, %v375
    %v392 = vadd.f32 %v223, %v376
    %v393 = vadd.f32 %v224, %v377
    %v394 = vadd.f32 %v225, %v378
    %v395 = vadd.f32 %v226, %v379
    %v396 = vadd.f32 %v227, %v380
    %v397 = vadd.f32 %v228, %v381
    %v398 = vadd.f32 %v229, %v382
    %v399 = vadd.f32 %v230, %v383
    %v400 = vadd.f32 %v231, %v384
    %v401 = vadd.f32 %v232, %v385
    %v402 = vld [vmem:[#allocation2 + $0x9] sm:$0xff]
    %v403 = vld [vmem:[#allocation2 + $0x11] sm:$0xff]
    %v404 = vld [vmem:[#allocation2 + $0x19] sm:$0xff]
    %v405 = vld [vmem:[#allocation2 + $0x21] sm:$0xff]
    %v406 = vld [vmem:[#allocation2 + $0x29] sm:$0xff]
    %v407 = vld [vmem:[#allocation2 + $0x31] sm:$0xff]
    %v408 = vld [vmem:[#allocation2 + $0x39] sm:$0xff]
    %v409 = vld [vmem:[#allocation2 + $0x41] sm:$0xff]
    %v410 = vld [vmem:[#allocation2 + $0x49] sm:$0xff]
    %v411 = vld [vmem:[#allocation2 + $0x51] sm:$0xff]
    %v412 = vld [vmem:[#allocation2 + $0x59] sm:$0xff]
    %v413 = vld [vmem:[#allocation2 + $0x61] sm:$0xff]
    %v414 = vld [vmem:[#allocation2 + $0x69] sm:$0xff]
    %v415 = vld [vmem:[#allocation2 + $0x71] sm:$0xff]
    %v416 = vld [vmem:[#allocation2 + $0x79] sm:$0xff]
    %v417 = vld [vmem:[#allocation2 + $0x81] sm:$0xff]
    %s418 = scalar_lea.vmem %s1, 256
    %v419 = vld [vmem:[%s418] sm:$0xff]
    %v420 = vld [vmem:[%s418 + $0x8] sm:$0xff]
    %v421 = vld [vmem:[%s418 + $0x10] sm:$0xff]
    %v422 = vld [vmem:[%s418 + $0x18] sm:$0xff]
    %v423 = vld [vmem:[%s418 + $0x20] sm:$0xff]
    %v424 = vld [vmem:[%s418 + $0x28] sm:$0xff]
    %v425 = vld [vmem:[%s418 + $0x30] sm:$0xff]
    %v426 = vld [vmem:[%s418 + $0x38] sm:$0xff]
    %v427 = vld [vmem:[%s418 + $0x40] sm:$0xff]
    %v428 = vld [vmem:[%s418 + $0x48] sm:$0xff]
    %v429 = vld [vmem:[%s418 + $0x50] sm:$0xff]
    %v430 = vld [vmem:[%s418 + $0x58] sm:$0xff]
    %v431 = vld [vmem:[%s418 + $0x60] sm:$0xff]
    %v432 = vld [vmem:[%s418 + $0x68] sm:$0xff]
    %v433 = vld [vmem:[%s418 + $0x70] sm:$0xff]
    %v434 = vld [vmem:[%s418 + $0x78] sm:$0xff]
    %v435 = vmul.f32 %v402, %v419
    %v436 = vmul.f32 %v403, %v420
    %v437 = vmul.f32 %v404, %v421
    %v438 = vmul.f32 %v405, %v422
    %v439 = vmul.f32 %v406, %v423
    %v440 = vmul.f32 %v407, %v424
    %v441 = vmul.f32 %v408, %v425
    %v442 = vmul.f32 %v409, %v426
    %v443 = vmul.f32 %v410, %v427
    %v444 = vmul.f32 %v411, %v428
    %v445 = vmul.f32 %v412, %v429
    %v446 = vmul.f32 %v413, %v430
    %v447 = vmul.f32 %v414, %v431
    %v448 = vmul.f32 %v415, %v432
    %v449 = vmul.f32 %v416, %v433
    %v450 = vmul.f32 %v417, %v434
    %s451 = scalar_lea.vmem %s2, 2
    %v452 = vld [vmem:[%s451] sm:$0x1]
    %454 = vset.pattern.permute.xlu0 0
    %455 = vperm.xlu0 %454, %v435
    %v456 = vpop.permute.xlu0 %455
    %459 = vset.pattern.permute.xlu0 0
    %460 = vperm.xlu0 %459, %v436
    %v461 = vpop.permute.xlu0 %460
    %464 = vset.pattern.permute.xlu0 0
    %465 = vperm.xlu0 %464, %v437
    %v466 = vpop.permute.xlu0 %465
    %469 = vset.pattern.permute.xlu0 0
    %470 = vperm.xlu0 %469, %v438
    %v471 = vpop.permute.xlu0 %470
    %474 = vset.pattern.permute.xlu0 0
    %475 = vperm.xlu0 %474, %v439
    %v476 = vpop.permute.xlu0 %475
    %479 = vset.pattern.permute.xlu0 0
    %480 = vperm.xlu0 %479, %v440
    %v481 = vpop.permute.xlu0 %480
    %484 = vset.pattern.permute.xlu0 0
    %485 = vperm.xlu0 %484, %v441
    %v486 = vpop.permute.xlu0 %485
    %489 = vset.pattern.permute.xlu0 0
    %490 = vperm.xlu0 %489, %v442
    %v491 = vpop.permute.xlu0 %490
    %494 = vset.pattern.permute.xlu0 0
    %495 = vperm.xlu0 %494, %v443
    %v496 = vpop.permute.xlu0 %495
    %499 = vset.pattern.permute.xlu0 0
    %500 = vperm.xlu0 %499, %v444
    %v501 = vpop.permute.xlu0 %500
    %504 = vset.pattern.permute.xlu0 0
    %505 = vperm.xlu0 %504, %v445
    %v506 = vpop.permute.xlu0 %505
    %509 = vset.pattern.permute.xlu0 0
    %510 = vperm.xlu0 %509, %v446
    %v511 = vpop.permute.xlu0 %510
    %514 = vset.pattern.permute.xlu0 0
    %515 = vperm.xlu0 %514, %v447
    %v516 = vpop.permute.xlu0 %515
    %519 = vset.pattern.permute.xlu0 0
    %520 = vperm.xlu0 %519, %v448
    %v521 = vpop.permute.xlu0 %520
    %524 = vset.pattern.permute.xlu0 0
    %525 = vperm.xlu0 %524, %v449
    %v526 = vpop.permute.xlu0 %525
    %529 = vset.pattern.permute.xlu0 0
    %530 = vperm.xlu0 %529, %v450
    %v531 = vpop.permute.xlu0 %530
    %v534 = vlaneseq
    %v535 = vshrl.u32 %v534, 7
    %v536 = vsub.s32 0, %v535
    %v537 = vrot.slane %v452, %v536
    %v539 = vmul.f32 %v456, %v537
    %v540 = vmul.f32 %v461, %v537
    %v541 = vmul.f32 %v466, %v537
    %v542 = vmul.f32 %v471, %v537
    %v543 = vmul.f32 %v476, %v537
    %v544 = vmul.f32 %v481, %v537
    %v545 = vmul.f32 %v486, %v537
    %v546 = vmul.f32 %v491, %v537
    %v547 = vmul.f32 %v496, %v537
    %v548 = vmul.f32 %v501, %v537
    %v549 = vmul.f32 %v506, %v537
    %v550 = vmul.f32 %v511, %v537
    %v551 = vmul.f32 %v516, %v537
    %v552 = vmul.f32 %v521, %v537
    %v553 = vmul.f32 %v526, %v537
    %v554 = vmul.f32 %v531, %v537
    %v555 = vadd.f32 %v386, %v539
    %v556 = vadd.f32 %v387, %v540
    %v557 = vadd.f32 %v388, %v541
    %v558 = vadd.f32 %v389, %v542
    %v559 = vadd.f32 %v390, %v543
    %v560 = vadd.f32 %v391, %v544
    %v561 = vadd.f32 %v392, %v545
    %v562 = vadd.f32 %v393, %v546
    %v563 = vadd.f32 %v394, %v547
    %v564 = vadd.f32 %v395, %v548
    %v565 = vadd.f32 %v396, %v549
    %v566 = vadd.f32 %v397, %v550
    %v567 = vadd.f32 %v398, %v551
    %v568 = vadd.f32 %v399, %v552
    %v569 = vadd.f32 %v400, %v553
    %v570 = vadd.f32 %v401, %v554
    %v571 = vld [vmem:[#allocation2 + $0xf] sm:$0xff]
    %v572 = vld [vmem:[#allocation2 + $0x17] sm:$0xff]
    %v573 = vld [vmem:[#allocation2 + $0x1f] sm:$0xff]
    %v574 = vld [vmem:[#allocation2 + $0x27] sm:$0xff]
    %v575 = vld [vmem:[#allocation2 + $0x2f] sm:$0xff]
    %v576 = vld [vmem:[#allocation2 + $0x37] sm:$0xff]
    %v577 = vld [vmem:[#allocation2 + $0x3f] sm:$0xff]
    %v578 = vld [vmem:[#allocation2 + $0x47] sm:$0xff]
    %v579 = vld [vmem:[#allocation2 + $0x4f] sm:$0xff]
    %v580 = vld [vmem:[#allocation2 + $0x57] sm:$0xff]
    %v581 = vld [vmem:[#allocation2 + $0x5f] sm:$0xff]
    %v582 = vld [vmem:[#allocation2 + $0x67] sm:$0xff]
    %v583 = vld [vmem:[#allocation2 + $0x6f] sm:$0xff]
    %v584 = vld [vmem:[#allocation2 + $0x77] sm:$0xff]
    %v585 = vld [vmem:[#allocation2 + $0x7f] sm:$0xff]
    %v586 = vld [vmem:[#allocation2 + $0x87] sm:$0xff]
    %s587 = scalar_lea.vmem %s1, 384
    %v588 = vld [vmem:[%s587] sm:$0xff]
    %v589 = vld [vmem:[%s587 + $0x8] sm:$0xff]
    %v590 = vld [vmem:[%s587 + $0x10] sm:$0xff]
    %v591 = vld [vmem:[%s587 + $0x18] sm:$0xff]
    %v592 = vld [vmem:[%s587 + $0x20] sm:$0xff]
    %v593 = vld [vmem:[%s587 + $0x28] sm:$0xff]
    %v594 = vld [vmem:[%s587 + $0x30] sm:$0xff]
    %v595 = vld [vmem:[%s587 + $0x38] sm:$0xff]
    %v596 = vld [vmem:[%s587 + $0x40] sm:$0xff]
    %v597 = vld [vmem:[%s587 + $0x48] sm:$0xff]
    %v598 = vld [vmem:[%s587 + $0x50] sm:$0xff]
    %v599 = vld [vmem:[%s587 + $0x58] sm:$0xff]
    %v600 = vld [vmem:[%s587 + $0x60] sm:$0xff]
    %v601 = vld [vmem:[%s587 + $0x68] sm:$0xff]
    %v602 = vld [vmem:[%s587 + $0x70] sm:$0xff]
    %v603 = vld [vmem:[%s587 + $0x78] sm:$0xff]
    %v604 = vmul.f32 %v571, %v588
    %v605 = vmul.f32 %v572, %v589
    %v606 = vmul.f32 %v573, %v590
    %v607 = vmul.f32 %v574, %v591
    %v608 = vmul.f32 %v575, %v592
    %v609 = vmul.f32 %v576, %v593
    %v610 = vmul.f32 %v577, %v594
    %v611 = vmul.f32 %v578, %v595
    %v612 = vmul.f32 %v579, %v596
    %v613 = vmul.f32 %v580, %v597
    %v614 = vmul.f32 %v581, %v598
    %v615 = vmul.f32 %v582, %v599
    %v616 = vmul.f32 %v583, %v600
    %v617 = vmul.f32 %v584, %v601
    %v618 = vmul.f32 %v585, %v602
    %v619 = vmul.f32 %v586, %v603
    %s620 = scalar_lea.vmem %s2, 3
    %v621 = vld [vmem:[%s620] sm:$0x1]
    %623 = vset.pattern.permute.xlu0 0
    %624 = vperm.xlu0 %623, %v604
    %v625 = vpop.permute.xlu0 %624
    %628 = vset.pattern.permute.xlu0 0
    %629 = vperm.xlu0 %628, %v605
    %v630 = vpop.permute.xlu0 %629
    %633 = vset.pattern.permute.xlu0 0
    %634 = vperm.xlu0 %633, %v606
    %v635 = vpop.permute.xlu0 %634
    %638 = vset.pattern.permute.xlu0 0
    %639 = vperm.xlu0 %638, %v607
    %v640 = vpop.permute.xlu0 %639
    %643 = vset.pattern.permute.xlu0 0
    %644 = vperm.xlu0 %643, %v608
    %v645 = vpop.permute.xlu0 %644
    %648 = vset.pattern.permute.xlu0 0
    %649 = vperm.xlu0 %648, %v609
    %v650 = vpop.permute.xlu0 %649
    %653 = vset.pattern.permute.xlu0 0
    %654 = vperm.xlu0 %653, %v610
    %v655 = vpop.permute.xlu0 %654
    %658 = vset.pattern.permute.xlu0 0
    %659 = vperm.xlu0 %658, %v611
    %v660 = vpop.permute.xlu0 %659
    %663 = vset.pattern.permute.xlu0 0
    %664 = vperm.xlu0 %663, %v612
    %v665 = vpop.permute.xlu0 %664
    %668 = vset.pattern.permute.xlu0 0
    %669 = vperm.xlu0 %668, %v613
    %v670 = vpop.permute.xlu0 %669
    %673 = vset.pattern.permute.xlu0 0
    %674 = vperm.xlu0 %673, %v614
    %v675 = vpop.permute.xlu0 %674
    %678 = vset.pattern.permute.xlu0 0
    %679 = vperm.xlu0 %678, %v615
    %v680 = vpop.permute.xlu0 %679
    %683 = vset.pattern.permute.xlu0 0
    %684 = vperm.xlu0 %683, %v616
    %v685 = vpop.permute.xlu0 %684
    %688 = vset.pattern.permute.xlu0 0
    %689 = vperm.xlu0 %688, %v617
    %v690 = vpop.permute.xlu0 %689
    %693 = vset.pattern.permute.xlu0 0
    %694 = vperm.xlu0 %693, %v618
    %v695 = vpop.permute.xlu0 %694
    %698 = vset.pattern.permute.xlu0 0
    %699 = vperm.xlu0 %698, %v619
    %v700 = vpop.permute.xlu0 %699
    %v703 = vlaneseq
    %v704 = vshrl.u32 %v703, 7
    %v705 = vsub.s32 0, %v704
    %v706 = vrot.slane %v621, %v705
    %v708 = vmul.f32 %v625, %v706
    %v709 = vmul.f32 %v630, %v706
    %v710 = vmul.f32 %v635, %v706
    %v711 = vmul.f32 %v640, %v706
    %v712 = vmul.f32 %v645, %v706
    %v713 = vmul.f32 %v650, %v706
    %v714 = vmul.f32 %v655, %v706
    %v715 = vmul.f32 %v660, %v706
    %v716 = vmul.f32 %v665, %v706
    %v717 = vmul.f32 %v670, %v706
    %v718 = vmul.f32 %v675, %v706
    %v719 = vmul.f32 %v680, %v706
    %v720 = vmul.f32 %v685, %v706
    %v721 = vmul.f32 %v690, %v706
    %v722 = vmul.f32 %v695, %v706
    %v723 = vmul.f32 %v700, %v706
    %v724 = vadd.f32 %v555, %v708
    %v725 = vadd.f32 %v556, %v709
    %v726 = vadd.f32 %v557, %v710
    %v727 = vadd.f32 %v558, %v711
    %v728 = vadd.f32 %v559, %v712
    %v729 = vadd.f32 %v560, %v713
    %v730 = vadd.f32 %v561, %v714
    %v731 = vadd.f32 %v562, %v715
    %v732 = vadd.f32 %v563, %v716
    %v733 = vadd.f32 %v564, %v717
    %v734 = vadd.f32 %v565, %v718
    %v735 = vadd.f32 %v566, %v719
    %v736 = vadd.f32 %v567, %v720
    %v737 = vadd.f32 %v568, %v721
    %v738 = vadd.f32 %v569, %v722
    %v739 = vadd.f32 %v570, %v723
    %v740 = vld [vmem:[#allocation2 + $0x10] sm:$0xff]
    %v741 = vld [vmem:[#allocation2 + $0x18] sm:$0xff]
    %v742 = vld [vmem:[#allocation2 + $0x20] sm:$0xff]
    %v743 = vld [vmem:[#allocation2 + $0x28] sm:$0xff]
    %v744 = vld [vmem:[#allocation2 + $0x30] sm:$0xff]
    %v745 = vld [vmem:[#allocation2 + $0x38] sm:$0xff]
    %v746 = vld [vmem:[#allocation2 + $0x40] sm:$0xff]
    %v747 = vld [vmem:[#allocation2 + $0x48] sm:$0xff]
    %v748 = vld [vmem:[#allocation2 + $0x50] sm:$0xff]
    %v749 = vld [vmem:[#allocation2 + $0x58] sm:$0xff]
    %v750 = vld [vmem:[#allocation2 + $0x60] sm:$0xff]
    %v751 = vld [vmem:[#allocation2 + $0x68] sm:$0xff]
    %v752 = vld [vmem:[#allocation2 + $0x70] sm:$0xff]
    %v753 = vld [vmem:[#allocation2 + $0x78] sm:$0xff]
    %v754 = vld [vmem:[#allocation2 + $0x80] sm:$0xff]
    %v755 = vld [vmem:[#allocation2 + $0x88] sm:$0xff]
    %s756 = scalar_lea.vmem %s1, 512
    %v757 = vld [vmem:[%s756] sm:$0xff]
    %v758 = vld [vmem:[%s756 + $0x8] sm:$0xff]
    %v759 = vld [vmem:[%s756 + $0x10] sm:$0xff]
    %v760 = vld [vmem:[%s756 + $0x18] sm:$0xff]
    %v761 = vld [vmem:[%s756 + $0x20] sm:$0xff]
    %v762 = vld [vmem:[%s756 + $0x28] sm:$0xff]
    %v763 = vld [vmem:[%s756 + $0x30] sm:$0xff]
    %v764 = vld [vmem:[%s756 + $0x38] sm:$0xff]
    %v765 = vld [vmem:[%s756 + $0x40] sm:$0xff]
    %v766 = vld [vmem:[%s756 + $0x48] sm:$0xff]
    %v767 = vld [vmem:[%s756 + $0x50] sm:$0xff]
    %v768 = vld [vmem:[%s756 + $0x58] sm:$0xff]
    %v769 = vld [vmem:[%s756 + $0x60] sm:$0xff]
    %v770 = vld [vmem:[%s756 + $0x68] sm:$0xff]
    %v771 = vld [vmem:[%s756 + $0x70] sm:$0xff]
    %v772 = vld [vmem:[%s756 + $0x78] sm:$0xff]
    %v773 = vmul.f32 %v740, %v757
    %v774 = vmul.f32 %v741, %v758
    %v775 = vmul.f32 %v742, %v759
    %v776 = vmul.f32 %v743, %v760
    %v777 = vmul.f32 %v744, %v761
    %v778 = vmul.f32 %v745, %v762
    %v779 = vmul.f32 %v746, %v763
    %v780 = vmul.f32 %v747, %v764
    %v781 = vmul.f32 %v748, %v765
    %v782 = vmul.f32 %v749, %v766
    %v783 = vmul.f32 %v750, %v767
    %v784 = vmul.f32 %v751, %v768
    %v785 = vmul.f32 %v752, %v769
    %v786 = vmul.f32 %v753, %v770
    %v787 = vmul.f32 %v754, %v771
    %v788 = vmul.f32 %v755, %v772
    %s789 = scalar_lea.vmem %s2, 4
    %v790 = vld [vmem:[%s789] sm:$0x1]
    %792 = vset.pattern.permute.xlu0 0
    %793 = vperm.xlu0 %792, %v773
    %v794 = vpop.permute.xlu0 %793
    %797 = vset.pattern.permute.xlu0 0
    %798 = vperm.xlu0 %797, %v774
    %v799 = vpop.permute.xlu0 %798
    %802 = vset.pattern.permute.xlu0 0
    %803 = vperm.xlu0 %802, %v775
    %v804 = vpop.permute.xlu0 %803
    %807 = vset.pattern.permute.xlu0 0
    %808 = vperm.xlu0 %807, %v776
    %v809 = vpop.permute.xlu0 %808
    %812 = vset.pattern.permute.xlu0 0
    %813 = vperm.xlu0 %812, %v777
    %v814 = vpop.permute.xlu0 %813
    %817 = vset.pattern.permute.xlu0 0
    %818 = vperm.xlu0 %817, %v778
    %v819 = vpop.permute.xlu0 %818
    %822 = vset.pattern.permute.xlu0 0
    %823 = vperm.xlu0 %822, %v779
    %v824 = vpop.permute.xlu0 %823
    %827 = vset.pattern.permute.xlu0 0
    %828 = vperm.xlu0 %827, %v780
    %v829 = vpop.permute.xlu0 %828
    %832 = vset.pattern.permute.xlu0 0
    %833 = vperm.xlu0 %832, %v781
    %v834 = vpop.permute.xlu0 %833
    %837 = vset.pattern.permute.xlu0 0
    %838 = vperm.xlu0 %837, %v782
    %v839 = vpop.permute.xlu0 %838
    %842 = vset.pattern.permute.xlu0 0
    %843 = vperm.xlu0 %842, %v783
    %v844 = vpop.permute.xlu0 %843
    %847 = vset.pattern.permute.xlu0 0
    %848 = vperm.xlu0 %847, %v784
    %v849 = vpop.permute.xlu0 %848
    %852 = vset.pattern.permute.xlu0 0
    %853 = vperm.xlu0 %852, %v785
    %v854 = vpop.permute.xlu0 %853
    %857 = vset.pattern.permute.xlu0 0
    %858 = vperm.xlu0 %857, %v786
    %v859 = vpop.permute.xlu0 %858
    %862 = vset.pattern.permute.xlu0 0
    %863 = vperm.xlu0 %862, %v787
    %v864 = vpop.permute.xlu0 %863
    %867 = vset.pattern.permute.xlu0 0
    %868 = vperm.xlu0 %867, %v788
    %v869 = vpop.permute.xlu0 %868
    %v872 = vlaneseq
    %v873 = vshrl.u32 %v872, 7
    %v874 = vsub.s32 0, %v873
    %v875 = vrot.slane %v790, %v874
    %v877 = vmul.f32 %v794, %v875
    %v878 = vmul.f32 %v799, %v875
    %v879 = vmul.f32 %v804, %v875
    %v880 = vmul.f32 %v809, %v875
    %v881 = vmul.f32 %v814, %v875
    %v882 = vmul.f32 %v819, %v875
    %v883 = vmul.f32 %v824, %v875
    %v884 = vmul.f32 %v829, %v875
    %v885 = vmul.f32 %v834, %v875
    %v886 = vmul.f32 %v839, %v875
    %v887 = vmul.f32 %v844, %v875
    %v888 = vmul.f32 %v849, %v875
    %v889 = vmul.f32 %v854, %v875
    %v890 = vmul.f32 %v859, %v875
    %v891 = vmul.f32 %v864, %v875
    %v892 = vmul.f32 %v869, %v875
    %v893 = vadd.f32 %v724, %v877
    %v894 = vadd.f32 %v725, %v878
    %v895 = vadd.f32 %v726, %v879
    %v896 = vadd.f32 %v727, %v880
    %v897 = vadd.f32 %v728, %v881
    %v898 = vadd.f32 %v729, %v882
    %v899 = vadd.f32 %v730, %v883
    %v900 = vadd.f32 %v731, %v884
    %v901 = vadd.f32 %v732, %v885
    %v902 = vadd.f32 %v733, %v886
    %v903 = vadd.f32 %v734, %v887
    %v904 = vadd.f32 %v735, %v888
    %v905 = vadd.f32 %v736, %v889
    %v906 = vadd.f32 %v737, %v890
    %v907 = vadd.f32 %v738, %v891
    %v908 = vadd.f32 %v739, %v892
    %v909 = vld [vmem:[#allocation2 + $0x11] sm:$0xff]
    %v910 = vld [vmem:[#allocation2 + $0x19] sm:$0xff]
    %v911 = vld [vmem:[#allocation2 + $0x21] sm:$0xff]
    %v912 = vld [vmem:[#allocation2 + $0x29] sm:$0xff]
    %v913 = vld [vmem:[#allocation2 + $0x31] sm:$0xff]
    %v914 = vld [vmem:[#allocation2 + $0x39] sm:$0xff]
    %v915 = vld [vmem:[#allocation2 + $0x41] sm:$0xff]
    %v916 = vld [vmem:[#allocation2 + $0x49] sm:$0xff]
    %v917 = vld [vmem:[#allocation2 + $0x51] sm:$0xff]
    %v918 = vld [vmem:[#allocation2 + $0x59] sm:$0xff]
    %v919 = vld [vmem:[#allocation2 + $0x61] sm:$0xff]
    %v920 = vld [vmem:[#allocation2 + $0x69] sm:$0xff]
    %v921 = vld [vmem:[#allocation2 + $0x71] sm:$0xff]
    %v922 = vld [vmem:[#allocation2 + $0x79] sm:$0xff]
    %v923 = vld [vmem:[#allocation2 + $0x81] sm:$0xff]
    %v924 = vld [vmem:[#allocation2 + $0x89] sm:$0xff]
    %s925 = scalar_lea.vmem %s1, 640
    %v926 = vld [vmem:[%s925] sm:$0xff]
    %v927 = vld [vmem:[%s925 + $0x8] sm:$0xff]
    %v928 = vld [vmem:[%s925 + $0x10] sm:$0xff]
    %v929 = vld [vmem:[%s925 + $0x18] sm:$0xff]
    %v930 = vld [vmem:[%s925 + $0x20] sm:$0xff]
    %v931 = vld [vmem:[%s925 + $0x28] sm:$0xff]
    %v932 = vld [vmem:[%s925 + $0x30] sm:$0xff]
    %v933 = vld [vmem:[%s925 + $0x38] sm:$0xff]
    %v934 = vld [vmem:[%s925 + $0x40] sm:$0xff]
    %v935 = vld [vmem:[%s925 + $0x48] sm:$0xff]
    %v936 = vld [vmem:[%s925 + $0x50] sm:$0xff]
    %v937 = vld [vmem:[%s925 + $0x58] sm:$0xff]
    %v938 = vld [vmem:[%s925 + $0x60] sm:$0xff]
    %v939 = vld [vmem:[%s925 + $0x68] sm:$0xff]
    %v940 = vld [vmem:[%s925 + $0x70] sm:$0xff]
    %v941 = vld [vmem:[%s925 + $0x78] sm:$0xff]
    %v942 = vmul.f32 %v909, %v926
    %v943 = vmul.f32 %v910, %v927
    %v944 = vmul.f32 %v911, %v928
    %v945 = vmul.f32 %v912, %v929
    %v946 = vmul.f32 %v913, %v930
    %v947 = vmul.f32 %v914, %v931
    %v948 = vmul.f32 %v915, %v932
    %v949 = vmul.f32 %v916, %v933
    %v950 = vmul.f32 %v917, %v934
    %v951 = vmul.f32 %v918, %v935
    %v952 = vmul.f32 %v919, %v936
    %v953 = vmul.f32 %v920, %v937
    %v954 = vmul.f32 %v921, %v938
    %v955 = vmul.f32 %v922, %v939
    %v956 = vmul.f32 %v923, %v940
    %v957 = vmul.f32 %v924, %v941
    %s958 = scalar_lea.vmem %s2, 5
    %v959 = vld [vmem:[%s958] sm:$0x1]
    %961 = vset.pattern.permute.xlu0 0
    %962 = vperm.xlu0 %961, %v942
    %v963 = vpop.permute.xlu0 %962
    %966 = vset.pattern.permute.xlu0 0
    %967 = vperm.xlu0 %966, %v943
    %v968 = vpop.permute.xlu0 %967
    %971 = vset.pattern.permute.xlu0 0
    %972 = vperm.xlu0 %971, %v944
    %v973 = vpop.permute.xlu0 %972
    %976 = vset.pattern.permute.xlu0 0
    %977 = vperm.xlu0 %976, %v945
    %v978 = vpop.permute.xlu0 %977
    %981 = vset.pattern.permute.xlu0 0
    %982 = vperm.xlu0 %981, %v946
    %v983 = vpop.permute.xlu0 %982
    %986 = vset.pattern.permute.xlu0 0
    %987 = vperm.xlu0 %986, %v947
    %v988 = vpop.permute.xlu0 %987
    %991 = vset.pattern.permute.xlu0 0
    %992 = vperm.xlu0 %991, %v948
    %v993 = vpop.permute.xlu0 %992
    %996 = vset.pattern.permute.xlu0 0
    %997 = vperm.xlu0 %996, %v949
    %v998 = vpop.permute.xlu0 %997
    %1001 = vset.pattern.permute.xlu0 0
    %1002 = vperm.xlu0 %1001, %v950
    %v1003 = vpop.permute.xlu0 %1002
    %1006 = vset.pattern.permute.xlu0 0
    %1007 = vperm.xlu0 %1006, %v951
    %v1008 = vpop.permute.xlu0 %1007
    %1011 = vset.pattern.permute.xlu0 0
    %1012 = vperm.xlu0 %1011, %v952
    %v1013 = vpop.permute.xlu0 %1012
    %1016 = vset.pattern.permute.xlu0 0
    %1017 = vperm.xlu0 %1016, %v953
    %v1018 = vpop.permute.xlu0 %1017
    %1021 = vset.pattern.permute.xlu0 0
    %1022 = vperm.xlu0 %1021, %v954
    %v1023 = vpop.permute.xlu0 %1022
    %1026 = vset.pattern.permute.xlu0 0
    %1027 = vperm.xlu0 %1026, %v955
    %v1028 = vpop.permute.xlu0 %1027
    %1031 = vset.pattern.permute.xlu0 0
    %1032 = vperm.xlu0 %1031, %v956
    %v1033 = vpop.permute.xlu0 %1032
    %1036 = vset.pattern.permute.xlu0 0
    %1037 = vperm.xlu0 %1036, %v957
    %v1038 = vpop.permute.xlu0 %1037
    %v1041 = vlaneseq
    %v1042 = vshrl.u32 %v1041, 7
    %v1043 = vsub.s32 0, %v1042
    %v1044 = vrot.slane %v959, %v1043
    %v1046 = vmul.f32 %v963, %v1044
    %v1047 = vmul.f32 %v968, %v1044
    %v1048 = vmul.f32 %v973, %v1044
    %v1049 = vmul.f32 %v978, %v1044
    %v1050 = vmul.f32 %v983, %v1044
    %v1051 = vmul.f32 %v988, %v1044
    %v1052 = vmul.f32 %v993, %v1044
    %v1053 = vmul.f32 %v998, %v1044
    %v1054 = vmul.f32 %v1003, %v1044
    %v1055 = vmul.f32 %v1008, %v1044
    %v1056 = vmul.f32 %v1013, %v1044
    %v1057 = vmul.f32 %v1018, %v1044
    %v1058 = vmul.f32 %v1023, %v1044
    %v1059 = vmul.f32 %v1028, %v1044
    %v1060 = vmul.f32 %v1033, %v1044
    %v1061 = vmul.f32 %v1038, %v1044
    %v1062 = vadd.f32 %v893, %v1046
    %v1063 = vadd.f32 %v894, %v1047
    %v1064 = vadd.f32 %v895, %v1048
    %v1065 = vadd.f32 %v896, %v1049
    %v1066 = vadd.f32 %v897, %v1050
    %v1067 = vadd.f32 %v898, %v1051
    %v1068 = vadd.f32 %v899, %v1052
    %v1069 = vadd.f32 %v900, %v1053
    %v1070 = vadd.f32 %v901, %v1054
    %v1071 = vadd.f32 %v902, %v1055
    %v1072 = vadd.f32 %v903, %v1056
    %v1073 = vadd.f32 %v904, %v1057
    %v1074 = vadd.f32 %v905, %v1058
    %v1075 = vadd.f32 %v906, %v1059
    %v1076 = vadd.f32 %v907, %v1060
    %v1077 = vadd.f32 %v908, %v1061
    %v1078 = vld [vmem:[#allocation2 + $0x17] sm:$0xff]
    %v1079 = vld [vmem:[#allocation2 + $0x1f] sm:$0xff]
    %v1080 = vld [vmem:[#allocation2 + $0x27] sm:$0xff]
    %v1081 = vld [vmem:[#allocation2 + $0x2f] sm:$0xff]
    %v1082 = vld [vmem:[#allocation2 + $0x37] sm:$0xff]
    %v1083 = vld [vmem:[#allocation2 + $0x3f] sm:$0xff]
    %v1084 = vld [vmem:[#allocation2 + $0x47] sm:$0xff]
    %v1085 = vld [vmem:[#allocation2 + $0x4f] sm:$0xff]
    %v1086 = vld [vmem:[#allocation2 + $0x57] sm:$0xff]
    %v1087 = vld [vmem:[#allocation2 + $0x5f] sm:$0xff]
    %v1088 = vld [vmem:[#allocation2 + $0x67] sm:$0xff]
    %v1089 = vld [vmem:[#allocation2 + $0x6f] sm:$0xff]
    %v1090 = vld [vmem:[#allocation2 + $0x77] sm:$0xff]
    %v1091 = vld [vmem:[#allocation2 + $0x7f] sm:$0xff]
    %v1092 = vld [vmem:[#allocation2 + $0x87] sm:$0xff]
    %v1093 = vld [vmem:[#allocation2 + $0x8f] sm:$0xff]
    %s1094 = scalar_lea.vmem %s1, 768
    %v1095 = vld [vmem:[%s1094] sm:$0xff]
    %v1096 = vld [vmem:[%s1094 + $0x8] sm:$0xff]
    %v1097 = vld [vmem:[%s1094 + $0x10] sm:$0xff]
    %v1098 = vld [vmem:[%s1094 + $0x18] sm:$0xff]
    %v1099 = vld [vmem:[%s1094 + $0x20] sm:$0xff]
    %v1100 = vld [vmem:[%s1094 + $0x28] sm:$0xff]
    %v1101 = vld [vmem:[%s1094 + $0x30] sm:$0xff]
    %v1102 = vld [vmem:[%s1094 + $0x38] sm:$0xff]
    %v1103 = vld [vmem:[%s1094 + $0x40] sm:$0xff]
    %v1104 = vld [vmem:[%s1094 + $0x48] sm:$0xff]
    %v1105 = vld [vmem:[%s1094 + $0x50] sm:$0xff]
    %v1106 = vld [vmem:[%s1094 + $0x58] sm:$0xff]
    %v1107 = vld [vmem:[%s1094 + $0x60] sm:$0xff]
    %v1108 = vld [vmem:[%s1094 + $0x68] sm:$0xff]
    %v1109 = vld [vmem:[%s1094 + $0x70] sm:$0xff]
    %v1110 = vld [vmem:[%s1094 + $0x78] sm:$0xff]
    %v1111 = vmul.f32 %v1078, %v1095
    %v1112 = vmul.f32 %v1079, %v1096
    %v1113 = vmul.f32 %v1080, %v1097
    %v1114 = vmul.f32 %v1081, %v1098
    %v1115 = vmul.f32 %v1082, %v1099
    %v1116 = vmul.f32 %v1083, %v1100
    %v1117 = vmul.f32 %v1084, %v1101
    %v1118 = vmul.f32 %v1085, %v1102
    %v1119 = vmul.f32 %v1086, %v1103
    %v1120 = vmul.f32 %v1087, %v1104
    %v1121 = vmul.f32 %v1088, %v1105
    %v1122 = vmul.f32 %v1089, %v1106
    %v1123 = vmul.f32 %v1090, %v1107
    %v1124 = vmul.f32 %v1091, %v1108
    %v1125 = vmul.f32 %v1092, %v1109
    %v1126 = vmul.f32 %v1093, %v1110
    %s1127 = scalar_lea.vmem %s2, 6
    %v1128 = vld [vmem:[%s1127] sm:$0x1]
    %1130 = vset.pattern.permute.xlu0 0
    %1131 = vperm.xlu0 %1130, %v1111
    %v1132 = vpop.permute.xlu0 %1131
    %1135 = vset.pattern.permute.xlu0 0
    %1136 = vperm.xlu0 %1135, %v1112
    %v1137 = vpop.permute.xlu0 %1136
    %1140 = vset.pattern.permute.xlu0 0
    %1141 = vperm.xlu0 %1140, %v1113
    %v1142 = vpop.permute.xlu0 %1141
    %1145 = vset.pattern.permute.xlu0 0
    %1146 = vperm.xlu0 %1145, %v1114
    %v1147 = vpop.permute.xlu0 %1146
    %1150 = vset.pattern.permute.xlu0 0
    %1151 = vperm.xlu0 %1150, %v1115
    %v1152 = vpop.permute.xlu0 %1151
    %1155 = vset.pattern.permute.xlu0 0
    %1156 = vperm.xlu0 %1155, %v1116
    %v1157 = vpop.permute.xlu0 %1156
    %1160 = vset.pattern.permute.xlu0 0
    %1161 = vperm.xlu0 %1160, %v1117
    %v1162 = vpop.permute.xlu0 %1161
    %1165 = vset.pattern.permute.xlu0 0
    %1166 = vperm.xlu0 %1165, %v1118
    %v1167 = vpop.permute.xlu0 %1166
    %1170 = vset.pattern.permute.xlu0 0
    %1171 = vperm.xlu0 %1170, %v1119
    %v1172 = vpop.permute.xlu0 %1171
    %1175 = vset.pattern.permute.xlu0 0
    %1176 = vperm.xlu0 %1175, %v1120
    %v1177 = vpop.permute.xlu0 %1176
    %1180 = vset.pattern.permute.xlu0 0
    %1181 = vperm.xlu0 %1180, %v1121
    %v1182 = vpop.permute.xlu0 %1181
    %1185 = vset.pattern.permute.xlu0 0
    %1186 = vperm.xlu0 %1185, %v1122
    %v1187 = vpop.permute.xlu0 %1186
    %1190 = vset.pattern.permute.xlu0 0
    %1191 = vperm.xlu0 %1190, %v1123
    %v1192 = vpop.permute.xlu0 %1191
    %1195 = vset.pattern.permute.xlu0 0
    %1196 = vperm.xlu0 %1195, %v1124
    %v1197 = vpop.permute.xlu0 %1196
    %1200 = vset.pattern.permute.xlu0 0
    %1201 = vperm.xlu0 %1200, %v1125
    %v1202 = vpop.permute.xlu0 %1201
    %1205 = vset.pattern.permute.xlu0 0
    %1206 = vperm.xlu0 %1205, %v1126
    %v1207 = vpop.permute.xlu0 %1206
    %v1210 = vlaneseq
    %v1211 = vshrl.u32 %v1210, 7
    %v1212 = vsub.s32 0, %v1211
    %v1213 = vrot.slane %v1128, %v1212
    %v1215 = vmul.f32 %v1132, %v1213
    %v1216 = vmul.f32 %v1137, %v1213
    %v1217 = vmul.f32 %v1142, %v1213
    %v1218 = vmul.f32 %v1147, %v1213
    %v1219 = vmul.f32 %v1152, %v1213
    %v1220 = vmul.f32 %v1157, %v1213
    %v1221 = vmul.f32 %v1162, %v1213
    %v1222 = vmul.f32 %v1167, %v1213
    %v1223 = vmul.f32 %v1172, %v1213
    %v1224 = vmul.f32 %v1177, %v1213
    %v1225 = vmul.f32 %v1182, %v1213
    %v1226 = vmul.f32 %v1187, %v1213
    %v1227 = vmul.f32 %v1192, %v1213
    %v1228 = vmul.f32 %v1197, %v1213
    %v1229 = vmul.f32 %v1202, %v1213
    %v1230 = vmul.f32 %v1207, %v1213
    %v1231 = vadd.f32 %v1062, %v1215
    %v1232 = vadd.f32 %v1063, %v1216
    %v1233 = vadd.f32 %v1064, %v1217
    %v1234 = vadd.f32 %v1065, %v1218
    %v1235 = vadd.f32 %v1066, %v1219
    %v1236 = vadd.f32 %v1067, %v1220
    %v1237 = vadd.f32 %v1068, %v1221
    %v1238 = vadd.f32 %v1069, %v1222
    %v1239 = vadd.f32 %v1070, %v1223
    %v1240 = vadd.f32 %v1071, %v1224
    %v1241 = vadd.f32 %v1072, %v1225
    %v1242 = vadd.f32 %v1073, %v1226
    %v1243 = vadd.f32 %v1074, %v1227
    %v1244 = vadd.f32 %v1075, %v1228
    %v1245 = vadd.f32 %v1076, %v1229
    %v1246 = vadd.f32 %v1077, %v1230
    %v1247 = vld [vmem:[#allocation2 + $0x18] sm:$0xff]
    %v1248 = vld [vmem:[#allocation2 + $0x20] sm:$0xff]
    %v1249 = vld [vmem:[#allocation2 + $0x28] sm:$0xff]
    %v1250 = vld [vmem:[#allocation2 + $0x30] sm:$0xff]
    %v1251 = vld [vmem:[#allocation2 + $0x38] sm:$0xff]
    %v1252 = vld [vmem:[#allocation2 + $0x40] sm:$0xff]
    %v1253 = vld [vmem:[#allocation2 + $0x48] sm:$0xff]
    %v1254 = vld [vmem:[#allocation2 + $0x50] sm:$0xff]
    %v1255 = vld [vmem:[#allocation2 + $0x58] sm:$0xff]
    %v1256 = vld [vmem:[#allocation2 + $0x60] sm:$0xff]
    %v1257 = vld [vmem:[#allocation2 + $0x68] sm:$0xff]
    %v1258 = vld [vmem:[#allocation2 + $0x70] sm:$0xff]
    %v1259 = vld [vmem:[#allocation2 + $0x78] sm:$0xff]
    %v1260 = vld [vmem:[#allocation2 + $0x80] sm:$0xff]
    %v1261 = vld [vmem:[#allocation2 + $0x88] sm:$0xff]
    %v1262 = vld [vmem:[#allocation2 + $0x90] sm:$0xff]
    %s1263 = scalar_lea.vmem %s1, 896
    %v1264 = vld [vmem:[%s1263] sm:$0xff]
    %v1265 = vld [vmem:[%s1263 + $0x8] sm:$0xff]
    %v1266 = vld [vmem:[%s1263 + $0x10] sm:$0xff]
    %v1267 = vld [vmem:[%s1263 + $0x18] sm:$0xff]
    %v1268 = vld [vmem:[%s1263 + $0x20] sm:$0xff]
    %v1269 = vld [vmem:[%s1263 + $0x28] sm:$0xff]
    %v1270 = vld [vmem:[%s1263 + $0x30] sm:$0xff]
    %v1271 = vld [vmem:[%s1263 + $0x38] sm:$0xff]
    %v1272 = vld [vmem:[%s1263 + $0x40] sm:$0xff]
    %v1273 = vld [vmem:[%s1263 + $0x48] sm:$0xff]
    %v1274 = vld [vmem:[%s1263 + $0x50] sm:$0xff]
    %v1275 = vld [vmem:[%s1263 + $0x58] sm:$0xff]
    %v1276 = vld [vmem:[%s1263 + $0x60] sm:$0xff]
    %v1277 = vld [vmem:[%s1263 + $0x68] sm:$0xff]
    %v1278 = vld [vmem:[%s1263 + $0x70] sm:$0xff]
    %v1279 = vld [vmem:[%s1263 + $0x78] sm:$0xff]
    %v1280 = vmul.f32 %v1247, %v1264
    %v1281 = vmul.f32 %v1248, %v1265
    %v1282 = vmul.f32 %v1249, %v1266
    %v1283 = vmul.f32 %v1250, %v1267
    %v1284 = vmul.f32 %v1251, %v1268
    %v1285 = vmul.f32 %v1252, %v1269
    %v1286 = vmul.f32 %v1253, %v1270
    %v1287 = vmul.f32 %v1254, %v1271
    %v1288 = vmul.f32 %v1255, %v1272
    %v1289 = vmul.f32 %v1256, %v1273
    %v1290 = vmul.f32 %v1257, %v1274
    %v1291 = vmul.f32 %v1258, %v1275
    %v1292 = vmul.f32 %v1259, %v1276
    %v1293 = vmul.f32 %v1260, %v1277
    %v1294 = vmul.f32 %v1261, %v1278
    %v1295 = vmul.f32 %v1262, %v1279
    %s1296 = scalar_lea.vmem %s2, 7
    %v1297 = vld [vmem:[%s1296] sm:$0x1]
    %1299 = vset.pattern.permute.xlu0 0
    %1300 = vperm.xlu0 %1299, %v1280
    %v1301 = vpop.permute.xlu0 %1300
    %1304 = vset.pattern.permute.xlu0 0
    %1305 = vperm.xlu0 %1304, %v1281
    %v1306 = vpop.permute.xlu0 %1305
    %1309 = vset.pattern.permute.xlu0 0
    %1310 = vperm.xlu0 %1309, %v1282
    %v1311 = vpop.permute.xlu0 %1310
    %1314 = vset.pattern.permute.xlu0 0
    %1315 = vperm.xlu0 %1314, %v1283
    %v1316 = vpop.permute.xlu0 %1315
    %1319 = vset.pattern.permute.xlu0 0
    %1320 = vperm.xlu0 %1319, %v1284
    %v1321 = vpop.permute.xlu0 %1320
    %1324 = vset.pattern.permute.xlu0 0
    %1325 = vperm.xlu0 %1324, %v1285
    %v1326 = vpop.permute.xlu0 %1325
    %1329 = vset.pattern.permute.xlu0 0
    %1330 = vperm.xlu0 %1329, %v1286
    %v1331 = vpop.permute.xlu0 %1330
    %1334 = vset.pattern.permute.xlu0 0
    %1335 = vperm.xlu0 %1334, %v1287
    %v1336 = vpop.permute.xlu0 %1335
    %1339 = vset.pattern.permute.xlu0 0
    %1340 = vperm.xlu0 %1339, %v1288
    %v1341 = vpop.permute.xlu0 %1340
    %1344 = vset.pattern.permute.xlu0 0
    %1345 = vperm.xlu0 %1344, %v1289
    %v1346 = vpop.permute.xlu0 %1345
    %1349 = vset.pattern.permute.xlu0 0
    %1350 = vperm.xlu0 %1349, %v1290
    %v1351 = vpop.permute.xlu0 %1350
    %1354 = vset.pattern.permute.xlu0 0
    %1355 = vperm.xlu0 %1354, %v1291
    %v1356 = vpop.permute.xlu0 %1355
    %1359 = vset.pattern.permute.xlu0 0
    %1360 = vperm.xlu0 %1359, %v1292
    %v1361 = vpop.permute.xlu0 %1360
    %1364 = vset.pattern.permute.xlu0 0
    %1365 = vperm.xlu0 %1364, %v1293
    %v1366 = vpop.permute.xlu0 %1365
    %1369 = vset.pattern.permute.xlu0 0
    %1370 = vperm.xlu0 %1369, %v1294
    %v1371 = vpop.permute.xlu0 %1370
    %1374 = vset.pattern.permute.xlu0 0
    %1375 = vperm.xlu0 %1374, %v1295
    %v1376 = vpop.permute.xlu0 %1375
    %v1379 = vlaneseq
    %v1380 = vshrl.u32 %v1379, 7
    %v1381 = vsub.s32 0, %v1380
    %v1382 = vrot.slane %v1297, %v1381
    %v1384 = vmul.f32 %v1301, %v1382
    %v1385 = vmul.f32 %v1306, %v1382
    %v1386 = vmul.f32 %v1311, %v1382
    %v1387 = vmul.f32 %v1316, %v1382
    %v1388 = vmul.f32 %v1321, %v1382
    %v1389 = vmul.f32 %v1326, %v1382
    %v1390 = vmul.f32 %v1331, %v1382
    %v1391 = vmul.f32 %v1336, %v1382
    %v1392 = vmul.f32 %v1341, %v1382
    %v1393 = vmul.f32 %v1346, %v1382
    %v1394 = vmul.f32 %v1351, %v1382
    %v1395 = vmul.f32 %v1356, %v1382
    %v1396 = vmul.f32 %v1361, %v1382
    %v1397 = vmul.f32 %v1366, %v1382
    %v1398 = vmul.f32 %v1371, %v1382
    %v1399 = vmul.f32 %v1376, %v1382
    %v1400 = vadd.f32 %v1231, %v1384
    %v1401 = vadd.f32 %v1232, %v1385
    %v1402 = vadd.f32 %v1233, %v1386
    %v1403 = vadd.f32 %v1234, %v1387
    %v1404 = vadd.f32 %v1235, %v1388
    %v1405 = vadd.f32 %v1236, %v1389
    %v1406 = vadd.f32 %v1237, %v1390
    %v1407 = vadd.f32 %v1238, %v1391
    %v1408 = vadd.f32 %v1239, %v1392
    %v1409 = vadd.f32 %v1240, %v1393
    %v1410 = vadd.f32 %v1241, %v1394
    %v1411 = vadd.f32 %v1242, %v1395
    %v1412 = vadd.f32 %v1243, %v1396
    %v1413 = vadd.f32 %v1244, %v1397
    %v1414 = vadd.f32 %v1245, %v1398
    %v1415 = vadd.f32 %v1246, %v1399
    %v1416 = vld [vmem:[#allocation2 + $0x19] sm:$0xff]
    %v1417 = vld [vmem:[#allocation2 + $0x21] sm:$0xff]
    %v1418 = vld [vmem:[#allocation2 + $0x29] sm:$0xff]
    %v1419 = vld [vmem:[#allocation2 + $0x31] sm:$0xff]
    %v1420 = vld [vmem:[#allocation2 + $0x39] sm:$0xff]
    %v1421 = vld [vmem:[#allocation2 + $0x41] sm:$0xff]
    %v1422 = vld [vmem:[#allocation2 + $0x49] sm:$0xff]
    %v1423 = vld [vmem:[#allocation2 + $0x51] sm:$0xff]
    %v1424 = vld [vmem:[#allocation2 + $0x59] sm:$0xff]
    %v1425 = vld [vmem:[#allocation2 + $0x61] sm:$0xff]
    %v1426 = vld [vmem:[#allocation2 + $0x69] sm:$0xff]
    %v1427 = vld [vmem:[#allocation2 + $0x71] sm:$0xff]
    %v1428 = vld [vmem:[#allocation2 + $0x79] sm:$0xff]
    %v1429 = vld [vmem:[#allocation2 + $0x81] sm:$0xff]
    %v1430 = vld [vmem:[#allocation2 + $0x89] sm:$0xff]
    %v1431 = vld [vmem:[#allocation2 + $0x91] sm:$0xff]
    %s1432 = scalar_lea.vmem %s1, 1024
    %v1433 = vld [vmem:[%s1432] sm:$0xff]
    %v1434 = vld [vmem:[%s1432 + $0x8] sm:$0xff]
    %v1435 = vld [vmem:[%s1432 + $0x10] sm:$0xff]
    %v1436 = vld [vmem:[%s1432 + $0x18] sm:$0xff]
    %v1437 = vld [vmem:[%s1432 + $0x20] sm:$0xff]
    %v1438 = vld [vmem:[%s1432 + $0x28] sm:$0xff]
    %v1439 = vld [vmem:[%s1432 + $0x30] sm:$0xff]
    %v1440 = vld [vmem:[%s1432 + $0x38] sm:$0xff]
    %v1441 = vld [vmem:[%s1432 + $0x40] sm:$0xff]
    %v1442 = vld [vmem:[%s1432 + $0x48] sm:$0xff]
    %v1443 = vld [vmem:[%s1432 + $0x50] sm:$0xff]
    %v1444 = vld [vmem:[%s1432 + $0x58] sm:$0xff]
    %v1445 = vld [vmem:[%s1432 + $0x60] sm:$0xff]
    %v1446 = vld [vmem:[%s1432 + $0x68] sm:$0xff]
    %v1447 = vld [vmem:[%s1432 + $0x70] sm:$0xff]
    %v1448 = vld [vmem:[%s1432 + $0x78] sm:$0xff]
    %v1449 = vmul.f32 %v1416, %v1433
    %v1450 = vmul.f32 %v1417, %v1434
    %v1451 = vmul.f32 %v1418, %v1435
    %v1452 = vmul.f32 %v1419, %v1436
    %v1453 = vmul.f32 %v1420, %v1437
    %v1454 = vmul.f32 %v1421, %v1438
    %v1455 = vmul.f32 %v1422, %v1439
    %v1456 = vmul.f32 %v1423, %v1440
    %v1457 = vmul.f32 %v1424, %v1441
    %v1458 = vmul.f32 %v1425, %v1442
    %v1459 = vmul.f32 %v1426, %v1443
    %v1460 = vmul.f32 %v1427, %v1444
    %v1461 = vmul.f32 %v1428, %v1445
    %v1462 = vmul.f32 %v1429, %v1446
    %v1463 = vmul.f32 %v1430, %v1447
    %v1464 = vmul.f32 %v1431, %v1448
    %s1465 = scalar_lea.vmem %s2, 8
    %v1466 = vld [vmem:[%s1465] sm:$0x1]
    %1468 = vset.pattern.permute.xlu0 0
    %1469 = vperm.xlu0 %1468, %v1449
    %v1470 = vpop.permute.xlu0 %1469
    %1473 = vset.pattern.permute.xlu0 0
    %1474 = vperm.xlu0 %1473, %v1450
    %v1475 = vpop.permute.xlu0 %1474
    %1478 = vset.pattern.permute.xlu0 0
    %1479 = vperm.xlu0 %1478, %v1451
    %v1480 = vpop.permute.xlu0 %1479
    %1483 = vset.pattern.permute.xlu0 0
    %1484 = vperm.xlu0 %1483, %v1452
    %v1485 = vpop.permute.xlu0 %1484
    %1488 = vset.pattern.permute.xlu0 0
    %1489 = vperm.xlu0 %1488, %v1453
    %v1490 = vpop.permute.xlu0 %1489
    %1493 = vset.pattern.permute.xlu0 0
    %1494 = vperm.xlu0 %1493, %v1454
    %v1495 = vpop.permute.xlu0 %1494
    %1498 = vset.pattern.permute.xlu0 0
    %1499 = vperm.xlu0 %1498, %v1455
    %v1500 = vpop.permute.xlu0 %1499
    %1503 = vset.pattern.permute.xlu0 0
    %1504 = vperm.xlu0 %1503, %v1456
    %v1505 = vpop.permute.xlu0 %1504
    %1508 = vset.pattern.permute.xlu0 0
    %1509 = vperm.xlu0 %1508, %v1457
    %v1510 = vpop.permute.xlu0 %1509
    %1513 = vset.pattern.permute.xlu0 0
    %1514 = vperm.xlu0 %1513, %v1458
    %v1515 = vpop.permute.xlu0 %1514
    %1518 = vset.pattern.permute.xlu0 0
    %1519 = vperm.xlu0 %1518, %v1459
    %v1520 = vpop.permute.xlu0 %1519
    %1523 = vset.pattern.permute.xlu0 0
    %1524 = vperm.xlu0 %1523, %v1460
    %v1525 = vpop.permute.xlu0 %1524
    %1528 = vset.pattern.permute.xlu0 0
    %1529 = vperm.xlu0 %1528, %v1461
    %v1530 = vpop.permute.xlu0 %1529
    %1533 = vset.pattern.permute.xlu0 0
    %1534 = vperm.xlu0 %1533, %v1462
    %v1535 = vpop.permute.xlu0 %1534
    %1538 = vset.pattern.permute.xlu0 0
    %1539 = vperm.xlu0 %1538, %v1463
    %v1540 = vpop.permute.xlu0 %1539
    %1543 = vset.pattern.permute.xlu0 0
    %1544 = vperm.xlu0 %1543, %v1464
    %v1545 = vpop.permute.xlu0 %1544
    %v1548 = vlaneseq
    %v1549 = vshrl.u32 %v1548, 7
    %v1550 = vsub.s32 0, %v1549
    %v1551 = vrot.slane %v1466, %v1550
    %v1553 = vmul.f32 %v1470, %v1551
    %v1554 = vmul.f32 %v1475, %v1551
    %v1555 = vmul.f32 %v1480, %v1551
    %v1556 = vmul.f32 %v1485, %v1551
    %v1557 = vmul.f32 %v1490, %v1551
    %v1558 = vmul.f32 %v1495, %v1551
    %v1559 = vmul.f32 %v1500, %v1551
    %v1560 = vmul.f32 %v1505, %v1551
    %v1561 = vmul.f32 %v1510, %v1551
    %v1562 = vmul.f32 %v1515, %v1551
    %v1563 = vmul.f32 %v1520, %v1551
    %v1564 = vmul.f32 %v1525, %v1551
    %v1565 = vmul.f32 %v1530, %v1551
    %v1566 = vmul.f32 %v1535, %v1551
    %v1567 = vmul.f32 %v1540, %v1551
    %v1568 = vmul.f32 %v1545, %v1551
    %v1569 = vadd.f32 %v1400, %v1553
    %v1570 = vadd.f32 %v1401, %v1554
    %v1571 = vadd.f32 %v1402, %v1555
    %v1572 = vadd.f32 %v1403, %v1556
    %v1573 = vadd.f32 %v1404, %v1557
    %v1574 = vadd.f32 %v1405, %v1558
    %v1575 = vadd.f32 %v1406, %v1559
    %v1576 = vadd.f32 %v1407, %v1560
    %v1577 = vadd.f32 %v1408, %v1561
    %v1578 = vadd.f32 %v1409, %v1562
    %v1579 = vadd.f32 %v1410, %v1563
    %v1580 = vadd.f32 %v1411, %v1564
    %v1581 = vadd.f32 %v1412, %v1565
    %v1582 = vadd.f32 %v1413, %v1566
    %v1583 = vadd.f32 %v1414, %v1567
    %v1584 = vadd.f32 %v1415, %v1568
    %v1585 = vld [vmem:[%s3] sm:$0x1]
    %v1587 = vlaneseq
    %v1588 = vshrl.u32 %v1587, 7
    %v1589 = vsub.s32 0, %v1588
    %v1590 = vrot.slane %v1585, %v1589
    %v1592 = vadd.f32 %v1569, %v1590
    %v1593 = vadd.f32 %v1570, %v1590
    %v1594 = vadd.f32 %v1571, %v1590
    %v1595 = vadd.f32 %v1572, %v1590
    %v1596 = vadd.f32 %v1573, %v1590
    %v1597 = vadd.f32 %v1574, %v1590
    %v1598 = vadd.f32 %v1575, %v1590
    %v1599 = vadd.f32 %v1576, %v1590
    %v1600 = vadd.f32 %v1577, %v1590
    %v1601 = vadd.f32 %v1578, %v1590
    %v1602 = vadd.f32 %v1579, %v1590
    %v1603 = vadd.f32 %v1580, %v1590
    %v1604 = vadd.f32 %v1581, %v1590
    %v1605 = vadd.f32 %v1582, %v1590
    %v1606 = vadd.f32 %v1583, %v1590
    %v1607 = vadd.f32 %v1584, %v1590
    %v1608 = vmax.f32 %v1592, 0.0
    %v1609 = vmax.f32 %v1593, 0.0
    %v1610 = vmax.f32 %v1594, 0.0
    %v1611 = vmax.f32 %v1595, 0.0
    %v1612 = vmax.f32 %v1596, 0.0
    %v1613 = vmax.f32 %v1597, 0.0
    %v1614 = vmax.f32 %v1598, 0.0
    %v1615 = vmax.f32 %v1599, 0.0
    %v1616 = vmax.f32 %v1600, 0.0
    %v1617 = vmax.f32 %v1601, 0.0
    %v1618 = vmax.f32 %v1602, 0.0
    %v1619 = vmax.f32 %v1603, 0.0
    %v1620 = vmax.f32 %v1604, 0.0
    %v1621 = vmax.f32 %v1605, 0.0
    %v1622 = vmax.f32 %v1606, 0.0
    %v1623 = vmax.f32 %v1607, 0.0
    %vm1624 = vcmask 261120
    %1625 = vst.msk [vmem:[#allocation3] sm:$0xff] %vm1624, %v1608
    %1626 = vst.msk [vmem:[#allocation3 + $0x8] sm:$0xff] %vm1624, %v1609
    %1627 = vst.msk [vmem:[#allocation3 + $0x10] sm:$0xff] %vm1624, %v1610
    %1628 = vst.msk [vmem:[#allocation3 + $0x18] sm:$0xff] %vm1624, %v1611
    %1629 = vst.msk [vmem:[#allocation3 + $0x20] sm:$0xff] %vm1624, %v1612
    %1630 = vst.msk [vmem:[#allocation3 + $0x28] sm:$0xff] %vm1624, %v1613
    %1631 = vst.msk [vmem:[#allocation3 + $0x30] sm:$0xff] %vm1624, %v1614
    %1632 = vst.msk [vmem:[#allocation3 + $0x38] sm:$0xff] %vm1624, %v1615
    %1633 = vst.msk [vmem:[#allocation3 + $0x40] sm:$0xff] %vm1624, %v1616
    %1634 = vst.msk [vmem:[#allocation3 + $0x48] sm:$0xff] %vm1624, %v1617
    %1635 = vst.msk [vmem:[#allocation3 + $0x50] sm:$0xff] %vm1624, %v1618
    %1636 = vst.msk [vmem:[#allocation3 + $0x58] sm:$0xff] %vm1624, %v1619
    %1637 = vst.msk [vmem:[#allocation3 + $0x60] sm:$0xff] %vm1624, %v1620
    %1638 = vst.msk [vmem:[#allocation3 + $0x68] sm:$0xff] %vm1624, %v1621
    %1639 = vst.msk [vmem:[#allocation3 + $0x70] sm:$0xff] %vm1624, %v1622
    %1640 = vst.msk [vmem:[#allocation3 + $0x78] sm:$0xff] %vm1624, %v1623
    %1641 = vst.msk [vmem:[#allocation3 + $0x80] sm:$0xff] %vm1624, 0.0
    %1642 = vst.msk [vmem:[#allocation3 + $0x88] sm:$0xff] %vm1624, 0.0
    %v1643 = vld [vmem:[#allocation3 + $0x1] sm:$0xff]
    %v1644 = vld [vmem:[#allocation3 + $0x9] sm:$0xff]
    %v1645 = vld [vmem:[#allocation3 + $0x11] sm:$0xff]
    %v1646 = vld [vmem:[#allocation3 + $0x19] sm:$0xff]
    %v1647 = vld [vmem:[#allocation3 + $0x21] sm:$0xff]
    %v1648 = vld [vmem:[#allocation3 + $0x29] sm:$0xff]
    %v1649 = vld [vmem:[#allocation3 + $0x31] sm:$0xff]
    %v1650 = vld [vmem:[#allocation3 + $0x39] sm:$0xff]
    %v1651 = vld [vmem:[#allocation3 + $0x41] sm:$0xff]
    %v1652 = vld [vmem:[#allocation3 + $0x49] sm:$0xff]
    %v1653 = vld [vmem:[#allocation3 + $0x51] sm:$0xff]
    %v1654 = vld [vmem:[#allocation3 + $0x59] sm:$0xff]
    %v1655 = vld [vmem:[#allocation3 + $0x61] sm:$0xff]
    %v1656 = vld [vmem:[#allocation3 + $0x69] sm:$0xff]
    %v1657 = vld [vmem:[#allocation3 + $0x71] sm:$0xff]
    %v1658 = vld [vmem:[#allocation3 + $0x79] sm:$0xff]
    %v1659 = vmax.f32 %v1608, %v1643
    %v1660 = vmax.f32 %v1609, %v1644
    %v1661 = vmax.f32 %v1610, %v1645
    %v1662 = vmax.f32 %v1611, %v1646
    %v1663 = vmax.f32 %v1612, %v1647
    %v1664 = vmax.f32 %v1613, %v1648
    %v1665 = vmax.f32 %v1614, %v1649
    %v1666 = vmax.f32 %v1615, %v1650
    %v1667 = vmax.f32 %v1616, %v1651
    %v1668 = vmax.f32 %v1617, %v1652
    %v1669 = vmax.f32 %v1618, %v1653
    %v1670 = vmax.f32 %v1619, %v1654
    %v1671 = vmax.f32 %v1620, %v1655
    %v1672 = vmax.f32 %v1621, %v1656
    %v1673 = vmax.f32 %v1622, %v1657
    %v1674 = vmax.f32 %v1623, %v1658
    %v1675 = vld [vmem:[#allocation3 + $0x8] sm:$0xff]
    %v1676 = vld [vmem:[#allocation3 + $0x10] sm:$0xff]
    %v1677 = vld [vmem:[#allocation3 + $0x18] sm:$0xff]
    %v1678 = vld [vmem:[#allocation3 + $0x20] sm:$0xff]
    %v1679 = vld [vmem:[#allocation3 + $0x28] sm:$0xff]
    %v1680 = vld [vmem:[#allocation3 + $0x30] sm:$0xff]
    %v1681 = vld [vmem:[#allocation3 + $0x38] sm:$0xff]
    %v1682 = vld [vmem:[#allocation3 + $0x40] sm:$0xff]
    %v1683 = vld [vmem:[#allocation3 + $0x48] sm:$0xff]
    %v1684 = vld [vmem:[#allocation3 + $0x50] sm:$0xff]
    %v1685 = vld [vmem:[#allocation3 + $0x58] sm:$0xff]
    %v1686 = vld [vmem:[#allocation3 + $0x60] sm:$0xff]
    %v1687 = vld [vmem:[#allocation3 + $0x68] sm:$0xff]
    %v1688 = vld [vmem:[#allocation3 + $0x70] sm:$0xff]
    %v1689 = vld [vmem:[#allocation3 + $0x78] sm:$0xff]
    %v1690 = vld [vmem:[#allocation3 + $0x80] sm:$0xff]
    %v1691 = vmax.f32 %v1659, %v1675
    %v1692 = vmax.f32 %v1660, %v1676
    %v1693 = vmax.f32 %v1661, %v1677
    %v1694 = vmax.f32 %v1662, %v1678
    %v1695 = vmax.f32 %v1663, %v1679
    %v1696 = vmax.f32 %v1664, %v1680
    %v1697 = vmax.f32 %v1665, %v1681
    %v1698 = vmax.f32 %v1666, %v1682
    %v1699 = vmax.f32 %v1667, %v1683
    %v1700 = vmax.f32 %v1668, %v1684
    %v1701 = vmax.f32 %v1669, %v1685
    %v1702 = vmax.f32 %v1670, %v1686
    %v1703 = vmax.f32 %v1671, %v1687
    %v1704 = vmax.f32 %v1672, %v1688
    %v1705 = vmax.f32 %v1673, %v1689
    %v1706 = vmax.f32 %v1674, %v1690
    %v1707 = vld [vmem:[#allocation3 + $0x81] sm:$0xff]
    %v1708 = vmax.f32 %v1691, %v1644
    %v1709 = vmax.f32 %v1692, %v1645
    %v1710 = vmax.f32 %v1693, %v1646
    %v1711 = vmax.f32 %v1694, %v1647
    %v1712 = vmax.f32 %v1695, %v1648
    %v1713 = vmax.f32 %v1696, %v1649
    %v1714 = vmax.f32 %v1697, %v1650
    %v1715 = vmax.f32 %v1698, %v1651
    %v1716 = vmax.f32 %v1699, %v1652
    %v1717 = vmax.f32 %v1700, %v1653
    %v1718 = vmax.f32 %v1701, %v1654
    %v1719 = vmax.f32 %v1702, %v1655
    %v1720 = vmax.f32 %v1703, %v1656
    %v1721 = vmax.f32 %v1704, %v1657
    %v1722 = vmax.f32 %v1705, %v1658
    %v1723 = vmax.f32 %v1706, %v1707
    %v1724 = vld [vmem:[%s4] sm:$0xff]
    %v1725 = vld [vmem:[%s4 + $0x8] sm:$0xff]
    %v1726 = vld [vmem:[%s4 + $0x10] sm:$0xff]
    %v1727 = vld [vmem:[%s4 + $0x18] sm:$0xff]
    %1728 = vmatprep.subr.mxu0 0.0
    %1729 = vmatpush1.msra.mxu0 %v1708
    %1730 = vmatprep.subr.mxu0 0.0
    %1731 = vmatpush1.msra.mxu0 %v1709
    %1732 = vmatprep.subr.mxu0 0.0
    %1733 = vmatpush1.msra.mxu0 %v1710
    %1734 = vmatprep.subr.mxu0 0.0
    %1735 = vmatpush1.msra.mxu0 %v1711
    %1736 = vmatprep.subr.mxu0 0.0
    %1737 = vmatpush1.msra.mxu0 %v1712
    %1738 = vmatprep.subr.mxu0 0.0
    %1739 = vmatpush1.msra.mxu0 %v1713
    %1740 = vmatprep.subr.mxu0 0.0
    %1741 = vmatpush1.msra.mxu0 %v1714
    %1742 = vmatprep.subr.mxu0 0.0
    %1743 = vmatpush1.msra.mxu0 %v1715
    %1744 = vmatprep.subr.mxu0 0.0
    %1745 = vmatpush1.msra.mxu0 %v1716
    %1746 = vmatprep.subr.mxu0 0.0
    %1747 = vmatpush1.msra.mxu0 %v1717
    %1748 = vmatprep.subr.mxu0 0.0
    %1749 = vmatpush1.msra.mxu0 %v1718
    %1750 = vmatprep.subr.mxu0 0.0
    %1751 = vmatpush1.msra.mxu0 %v1719
    %1752 = vmatprep.subr.mxu0 0.0
    %1753 = vmatpush1.msra.mxu0 %v1720
    %1754 = vmatprep.subr.mxu0 0.0
    %1755 = vmatpush1.msra.mxu0 %v1721
    %1756 = vmatprep.subr.mxu0 0.0
    %1757 = vmatpush1.msra.mxu0 %v1722
    %1758 = vmatprep.subr.mxu0 0.0
    %1759 = vmatpush1.msra.mxu0 %v1723
    %1760 = vmatprep.subr.mxu0 0.0
    %1761 = vmatpush1.msra.mxu0 0.0
    %1762 = vmatprep.subr.mxu0 0.0
    %1763 = vmatpush1.msra.mxu0 0.0
    %1764 = vmatprep.subr.mxu0 0.0
    %1765 = vmatpush1.msra.mxu0 0.0
    %1766 = vmatprep.subr.mxu0 0.0
    %1767 = vmatpush1.msra.mxu0 0.0
    %1768 = vmatprep.subr.mxu0 0.0
    %1769 = vmatpush1.msra.mxu0 0.0
    %1770 = vmatprep.subr.mxu0 0.0
    %1771 = vmatpush1.msra.mxu0 0.0
    %1772 = vmatprep.subr.mxu0 0.0
    %1773 = vmatpush1.msra.mxu0 0.0
    %1774 = vmatprep.subr.mxu0 0.0
    %1775 = vmatpush1.msra.mxu0 0.0
    %1776 = vmatprep.subr.mxu0 0.0
    %1777 = vmatpush1.msra.mxu0 0.0
    %1778 = vmatprep.subr.mxu0 0.0
    %1779 = vmatpush1.msra.mxu0 0.0
    %1780 = vmatprep.subr.mxu0 0.0
    %1781 = vmatpush1.msra.mxu0 0.0
    %1782 = vmatprep.subr.mxu0 0.0
    %1783 = vmatpush1.msra.mxu0 0.0
    %1784 = vmatprep.subr.mxu0 0.0
    %1785 = vmatpush1.msra.mxu0 0.0
    %1786 = vmatprep.subr.mxu0 0.0
    %1787 = vmatpush1.msra.mxu0 0.0
    %1788 = vmatprep.subr.mxu0 0.0
    %1789 = vmatpush1.msra.mxu0 0.0
    %1790 = vmatprep.subr.mxu0 0.0
    %1791 = vmatpush1.msra.mxu0 0.0
    %1792 = vmatprep.mubr.f32.mxu0 0.0
    %1793 = vmatmul.mubr.f32.gmra.mrb[0].mxu0 %v1724
    %v1794 = vpop.f32.mrb[0].mxu0
    %v1795 = vadd.f32 0.0, %v1794
    %v1796 = vpop.f32.mrb[0].mxu0
    %1797 = vmatprep.mubr.f32.mxu0 0.0
    %1798 = vmatmul.mubr.f32.gmra.mrb[0].mxu0 %v1725
    %v1799 = vpop.f32.mrb[0].mxu0
    %v1800 = vadd.f32 0.0, %v1799
    %v1801 = vpop.f32.mrb[0].mxu0
    %1802 = vmatprep.mubr.f32.mxu0 0.0
    %1803 = vmatmul.mubr.f32.gmra.mrb[0].mxu0 %v1726
    %v1804 = vpop.f32.mrb[0].mxu0
    %v1805 = vadd.f32 0.0, %v1804
    %v1806 = vpop.f32.mrb[0].mxu0
    %1807 = vmatprep.mubr.f32.mxu0 0.0
    %1808 = vmatmul.mubr.f32.gmra.mrb[0].mxu0 %v1727
    %v1809 = vpop.f32.mrb[0].mxu0
    %v1810 = vadd.f32 0.0, %v1809
    %v1811 = vpop.f32.mrb[0].mxu0
    %1812 = vdwg.mxu0
    %1813 = vst.msk [vmem:[#allocation4] sm:$0xff] %vm1624, 0.0
    %1814 = vst.msk [vmem:[#allocation4 + $0x8] sm:$0xff] %vm1624, 0.0
    %1815 = vst.msk [vmem:[#allocation4 + $0x10] sm:$0xff] %vm1624, %v1795
    %1816 = vst.msk [vmem:[#allocation4 + $0x18] sm:$0xff] %vm1624, %v1800
    %1817 = vst.msk [vmem:[#allocation4 + $0x20] sm:$0xff] %vm1624, %v1805
    %1818 = vst.msk [vmem:[#allocation4 + $0x28] sm:$0xff] %vm1624, %v1810
    %1819 = vst.msk [vmem:[#allocation4 + $0x30] sm:$0xff] %vm1624, 0.0
    %1820 = vst.msk [vmem:[#allocation4 + $0x38] sm:$0xff] %vm1624, 0.0
    %v1821 = vld [vmem:[#allocation4 + $0xb] sm:$0xff]
    %v1822 = vld [vmem:[#allocation4 + $0x13] sm:$0xff]
    %v1823 = vld [vmem:[#allocation4 + $0x1b] sm:$0xff]
    %v1824 = vld [vmem:[#allocation4 + $0x23] sm:$0xff]
    %v1825 = vld [vmem:[%s5] sm:$0xff]
    %v1826 = vld [vmem:[%s5 + $0x8] sm:$0xff]
    %v1827 = vld [vmem:[%s5 + $0x10] sm:$0xff]
    %v1828 = vld [vmem:[%s5 + $0x18] sm:$0xff]
    %1830 = vset.pattern.permute.xlu0 0
    %1831 = vperm.xlu0 %1830, %v1825
    %v1832 = vpop.permute.xlu0 %1831
    %1835 = vset.pattern.permute.xlu0 0
    %1836 = vperm.xlu0 %1835, %v1826
    %v1837 = vpop.permute.xlu0 %1836
    %1840 = vset.pattern.permute.xlu0 0
    %1841 = vperm.xlu0 %1840, %v1827
    %v1842 = vpop.permute.xlu0 %1841
    %1845 = vset.pattern.permute.xlu0 0
    %1846 = vperm.xlu0 %1845, %v1828
    %v1847 = vpop.permute.xlu0 %1846
    %v1849 = vmul.f32 %v1821, %v1832
    %v1850 = vmul.f32 %v1822, %v1837
    %v1851 = vmul.f32 %v1823, %v1842
    %v1852 = vmul.f32 %v1824, %v1847
    %v1853 = vld [vmem:[#allocation4 + $0xc] sm:$0xff]
    %v1854 = vld [vmem:[#allocation4 + $0x14] sm:$0xff]
    %v1855 = vld [vmem:[#allocation4 + $0x1c] sm:$0xff]
    %v1856 = vld [vmem:[#allocation4 + $0x24] sm:$0xff]
    %s1857 = scalar_lea.vmem %s5, 32
    %v1858 = vld [vmem:[%s1857] sm:$0xff]
    %v1859 = vld [vmem:[%s1857 + $0x8] sm:$0xff]
    %v1860 = vld [vmem:[%s1857 + $0x10] sm:$0xff]
    %v1861 = vld [vmem:[%s1857 + $0x18] sm:$0xff]
    %1863 = vset.pattern.permute.xlu0 0
    %1864 = vperm.xlu0 %1863, %v1858
    %v1865 = vpop.permute.xlu0 %1864
    %1868 = vset.pattern.permute.xlu0 0
    %1869 = vperm.xlu0 %1868, %v1859
    %v1870 = vpop.permute.xlu0 %1869
    %1873 = vset.pattern.permute.xlu0 0
    %1874 = vperm.xlu0 %1873, %v1860
    %v1875 = vpop.permute.xlu0 %1874
    %1878 = vset.pattern.permute.xlu0 0
    %1879 = vperm.xlu0 %1878, %v1861
    %v1880 = vpop.permute.xlu0 %1879
    %v1882 = vmul.f32 %v1853, %v1865
    %v1883 = vmul.f32 %v1854, %v1870
    %v1884 = vmul.f32 %v1855, %v1875
    %v1885 = vmul.f32 %v1856, %v1880
    %v1886 = vld [vmem:[#allocation4 + $0xd] sm:$0xff]
    %v1887 = vld [vmem:[#allocation4 + $0x15] sm:$0xff]
    %v1888 = vld [vmem:[#allocation4 + $0x1d] sm:$0xff]
    %v1889 = vld [vmem:[#allocation4 + $0x25] sm:$0xff]
    %s1890 = scalar_lea.vmem %s5, 64
    %v1891 = vld [vmem:[%s1890] sm:$0xff]
    %v1892 = vld [vmem:[%s1890 + $0x8] sm:$0xff]
    %v1893 = vld [vmem:[%s1890 + $0x10] sm:$0xff]
    %v1894 = vld [vmem:[%s1890 + $0x18] sm:$0xff]
    %1896 = vset.pattern.permute.xlu0 0
    %1897 = vperm.xlu0 %1896, %v1891
    %v1898 = vpop.permute.xlu0 %1897
    %1901 = vset.pattern.permute.xlu0 0
    %1902 = vperm.xlu0 %1901, %v1892
    %v1903 = vpop.permute.xlu0 %1902
    %1906 = vset.pattern.permute.xlu0 0
    %1907 = vperm.xlu0 %1906, %v1893
    %v1908 = vpop.permute.xlu0 %1907
    %1911 = vset.pattern.permute.xlu0 0
    %1912 = vperm.xlu0 %1911, %v1894
    %v1913 = vpop.permute.xlu0 %1912
    %v1915 = vmul.f32 %v1886, %v1898
    %v1916 = vmul.f32 %v1887, %v1903
    %v1917 = vmul.f32 %v1888, %v1908
    %v1918 = vmul.f32 %v1889, %v1913
    %v1919 = vld [vmem:[#allocation4 + $0xf] sm:$0xff]
    %v1920 = vld [vmem:[#allocation4 + $0x17] sm:$0xff]
    %v1921 = vld [vmem:[#allocation4 + $0x1f] sm:$0xff]
    %v1922 = vld [vmem:[#allocation4 + $0x27] sm:$0xff]
    %s1923 = scalar_lea.vmem %s5, 96
    %v1924 = vld [vmem:[%s1923] sm:$0xff]
    %v1925 = vld [vmem:[%s1923 + $0x8] sm:$0xff]
    %v1926 = vld [vmem:[%s1923 + $0x10] sm:$0xff]
    %v1927 = vld [vmem:[%s1923 + $0x18] sm:$0xff]
    %1929 = vset.pattern.permute.xlu0 0
    %1930 = vperm.xlu0 %1929, %v1924
    %v1931 = vpop.permute.xlu0 %1930
    %1934 = vset.pattern.permute.xlu0 0
    %1935 = vperm.xlu0 %1934, %v1925
    %v1936 = vpop.permute.xlu0 %1935
    %1939 = vset.pattern.permute.xlu0 0
    %1940 = vperm.xlu0 %1939, %v1926
    %v1941 = vpop.permute.xlu0 %1940
    %1944 = vset.pattern.permute.xlu0 0
    %1945 = vperm.xlu0 %1944, %v1927
    %v1946 = vpop.permute.xlu0 %1945
    %v1948 = vmul.f32 %v1919, %v1931
    %v1949 = vmul.f32 %v1920, %v1936
    %v1950 = vmul.f32 %v1921, %v1941
    %v1951 = vmul.f32 %v1922, %v1946
    %v1952 = vld [vmem:[#allocation4 + $0x10] sm:$0xff]
    %v1953 = vld [vmem:[#allocation4 + $0x18] sm:$0xff]
    %v1954 = vld [vmem:[#allocation4 + $0x20] sm:$0xff]
    %v1955 = vld [vmem:[#allocation4 + $0x28] sm:$0xff]
    %s1956 = scalar_lea.vmem %s5, 128
    %v1957 = vld [vmem:[%s1956] sm:$0xff]
    %v1958 = vld [vmem:[%s1956 + $0x8] sm:$0xff]
    %v1959 = vld [vmem:[%s1956 + $0x10] sm:$0xff]
    %v1960 = vld [vmem:[%s1956 + $0x18] sm:$0xff]
    %1962 = vset.pattern.permute.xlu0 0
    %1963 = vperm.xlu0 %1962, %v1957
    %v1964 = vpop.permute.xlu0 %1963
    %1967 = vset.pattern.permute.xlu0 0
    %1968 = vperm.xlu0 %1967, %v1958
    %v1969 = vpop.permute.xlu0 %1968
    %1972 = vset.pattern.permute.xlu0 0
    %1973 = vperm.xlu0 %1972, %v1959
    %v1974 = vpop.permute.xlu0 %1973
    %1977 = vset.pattern.permute.xlu0 0
    %1978 = vperm.xlu0 %1977, %v1960
    %v1979 = vpop.permute.xlu0 %1978
    %v1981 = vmul.f32 %v1952, %v1964
    %v1982 = vmul.f32 %v1953, %v1969
    %v1983 = vmul.f32 %v1954, %v1974
    %v1984 = vmul.f32 %v1955, %v1979
    %v1985 = vld [vmem:[#allocation4 + $0x11] sm:$0xff]
    %v1986 = vld [vmem:[#allocation4 + $0x19] sm:$0xff]
    %v1987 = vld [vmem:[#allocation4 + $0x21] sm:$0xff]
    %v1988 = vld [vmem:[#allocation4 + $0x29] sm:$0xff]
    %s1989 = scalar_lea.vmem %s5, 160
    %v1990 = vld [vmem:[%s1989] sm:$0xff]
    %v1991 = vld [vmem:[%s1989 + $0x8] sm:$0xff]
    %v1992 = vld [vmem:[%s1989 + $0x10] sm:$0xff]
    %v1993 = vld [vmem:[%s1989 + $0x18] sm:$0xff]
    %1995 = vset.pattern.permute.xlu0 0
    %1996 = vperm.xlu0 %1995, %v1990
    %v1997 = vpop.permute.xlu0 %1996
    %2000 = vset.pattern.permute.xlu0 0
    %2001 = vperm.xlu0 %2000, %v1991
    %v2002 = vpop.permute.xlu0 %2001
    %2005 = vset.pattern.permute.xlu0 0
    %2006 = vperm.xlu0 %2005, %v1992
    %v2007 = vpop.permute.xlu0 %2006
    %2010 = vset.pattern.permute.xlu0 0
    %2011 = vperm.xlu0 %2010, %v1993
    %v2012 = vpop.permute.xlu0 %2011
    %v2014 = vmul.f32 %v1985, %v1997
    %v2015 = vmul.f32 %v1986, %v2002
    %v2016 = vmul.f32 %v1987, %v2007
    %v2017 = vmul.f32 %v1988, %v2012
    %v2018 = vld [vmem:[#allocation4 + $0x13] sm:$0xff]
    %v2019 = vld [vmem:[#allocation4 + $0x1b] sm:$0xff]
    %v2020 = vld [vmem:[#allocation4 + $0x23] sm:$0xff]
    %v2021 = vld [vmem:[#allocation4 + $0x2b] sm:$0xff]
    %s2022 = scalar_lea.vmem %s5, 192
    %v2023 = vld [vmem:[%s2022] sm:$0xff]
    %v2024 = vld [vmem:[%s2022 + $0x8] sm:$0xff]
    %v2025 = vld [vmem:[%s2022 + $0x10] sm:$0xff]
    %v2026 = vld [vmem:[%s2022 + $0x18] sm:$0xff]
    %2028 = vset.pattern.permute.xlu0 0
    %2029 = vperm.xlu0 %2028, %v2023
    %v2030 = vpop.permute.xlu0 %2029
    %2033 = vset.pattern.permute.xlu0 0
    %2034 = vperm.xlu0 %2033, %v2024
    %v2035 = vpop.permute.xlu0 %2034
    %2038 = vset.pattern.permute.xlu0 0
    %2039 = vperm.xlu0 %2038, %v2025
    %v2040 = vpop.permute.xlu0 %2039
    %2043 = vset.pattern.permute.xlu0 0
    %2044 = vperm.xlu0 %2043, %v2026
    %v2045 = vpop.permute.xlu0 %2044
    %v2047 = vmul.f32 %v2018, %v2030
    %v2048 = vmul.f32 %v2019, %v2035
    %v2049 = vmul.f32 %v2020, %v2040
    %v2050 = vmul.f32 %v2021, %v2045
    %v2051 = vld [vmem:[#allocation4 + $0x14] sm:$0xff]
    %v2052 = vld [vmem:[#allocation4 + $0x1c] sm:$0xff]
    %v2053 = vld [vmem:[#allocation4 + $0x24] sm:$0xff]
    %v2054 = vld [vmem:[#allocation4 + $0x2c] sm:$0xff]
    %s2055 = scalar_lea.vmem %s5, 224
    %v2056 = vld [vmem:[%s2055] sm:$0xff]
    %v2057 = vld [vmem:[%s2055 + $0x8] sm:$0xff]
    %v2058 = vld [vmem:[%s2055 + $0x10] sm:$0xff]
    %v2059 = vld [vmem:[%s2055 + $0x18] sm:$0xff]
    %2061 = vset.pattern.permute.xlu0 0
    %2062 = vperm.xlu0 %2061, %v2056
    %v2063 = vpop.permute.xlu0 %2062
    %2066 = vset.pattern.permute.xlu0 0
    %2067 = vperm.xlu0 %2066, %v2057
    %v2068 = vpop.permute.xlu0 %2067
    %2071 = vset.pattern.permute.xlu0 0
    %2072 = vperm.xlu0 %2071, %v2058
    %v2073 = vpop.permute.xlu0 %2072
    %2076 = vset.pattern.permute.xlu0 0
    %2077 = vperm.xlu0 %2076, %v2059
    %v2078 = vpop.permute.xlu0 %2077
    %v2080 = vmul.f32 %v2051, %v2063
    %v2081 = vmul.f32 %v2052, %v2068
    %v2082 = vmul.f32 %v2053, %v2073
    %v2083 = vmul.f32 %v2054, %v2078
    %v2084 = vld [vmem:[#allocation4 + $0x15] sm:$0xff]
    %v2085 = vld [vmem:[#allocation4 + $0x1d] sm:$0xff]
    %v2086 = vld [vmem:[#allocation4 + $0x25] sm:$0xff]
    %v2087 = vld [vmem:[#allocation4 + $0x2d] sm:$0xff]
    %s2088 = scalar_lea.vmem %s5, 256
    %v2089 = vld [vmem:[%s2088] sm:$0xff]
    %v2090 = vld [vmem:[%s2088 + $0x8] sm:$0xff]
    %v2091 = vld [vmem:[%s2088 + $0x10] sm:$0xff]
    %v2092 = vld [vmem:[%s2088 + $0x18] sm:$0xff]
    %2094 = vset.pattern.permute.xlu0 0
    %2095 = vperm.xlu0 %2094, %v2089
    %v2096 = vpop.permute.xlu0 %2095
    %2099 = vset.pattern.permute.xlu0 0
    %2100 = vperm.xlu0 %2099, %v2090
    %v2101 = vpop.permute.xlu0 %2100
    %2104 = vset.pattern.permute.xlu0 0
    %2105 = vperm.xlu0 %2104, %v2091
    %v2106 = vpop.permute.xlu0 %2105
    %2109 = vset.pattern.permute.xlu0 0
    %2110 = vperm.xlu0 %2109, %v2092
    %v2111 = vpop.permute.xlu0 %2110
    %v2113 = vmul.f32 %v2084, %v2096
    %v2114 = vmul.f32 %v2085, %v2101
    %v2115 = vmul.f32 %v2086, %v2106
    %v2116 = vmul.f32 %v2087, %v2111
    %2121 = vrot.lane.b32.xlu0 %v1882, 32
    %v2122 = vpop.permute.xlu0 %2121
    %2123 = vrot.lane.b32.xlu0 %v1883, 32
    %v2124 = vpop.permute.xlu0 %2123
    %2125 = vrot.lane.b32.xlu0 %v1884, 32
    %v2126 = vpop.permute.xlu0 %2125
    %2127 = vrot.lane.b32.xlu0 %v1885, 32
    %v2128 = vpop.permute.xlu0 %2127
    %2137 = vrot.lane.b32.xlu0 %v1915, 64
    %v2138 = vpop.permute.xlu0 %2137
    %2139 = vrot.lane.b32.xlu0 %v1916, 64
    %v2140 = vpop.permute.xlu0 %2139
    %2141 = vrot.lane.b32.xlu0 %v1917, 64
    %v2142 = vpop.permute.xlu0 %2141
    %2143 = vrot.lane.b32.xlu0 %v1918, 64
    %v2144 = vpop.permute.xlu0 %2143
    %2153 = vrot.lane.b32.xlu0 %v1948, 96
    %v2154 = vpop.permute.xlu0 %2153
    %2155 = vrot.lane.b32.xlu0 %v1949, 96
    %v2156 = vpop.permute.xlu0 %2155
    %2157 = vrot.lane.b32.xlu0 %v1950, 96
    %v2158 = vpop.permute.xlu0 %2157
    %2159 = vrot.lane.b32.xlu0 %v1951, 96
    %v2160 = vpop.permute.xlu0 %2159
    %2169 = vrot.lane.b32.xlu0 %v2014, 32
    %v2170 = vpop.permute.xlu0 %2169
    %2171 = vrot.lane.b32.xlu0 %v2015, 32
    %v2172 = vpop.permute.xlu0 %2171
    %2173 = vrot.lane.b32.xlu0 %v2016, 32
    %v2174 = vpop.permute.xlu0 %2173
    %2175 = vrot.lane.b32.xlu0 %v2017, 32
    %v2176 = vpop.permute.xlu0 %2175
    %2185 = vrot.lane.b32.xlu0 %v2047, 64
    %v2186 = vpop.permute.xlu0 %2185
    %2187 = vrot.lane.b32.xlu0 %v2048, 64
    %v2188 = vpop.permute.xlu0 %2187
    %2189 = vrot.lane.b32.xlu0 %v2049, 64
    %v2190 = vpop.permute.xlu0 %2189
    %2191 = vrot.lane.b32.xlu0 %v2050, 64
    %v2192 = vpop.permute.xlu0 %2191
    %2201 = vrot.lane.b32.xlu0 %v2080, 96
    %v2202 = vpop.permute.xlu0 %2201
    %2203 = vrot.lane.b32.xlu0 %v2081, 96
    %v2204 = vpop.permute.xlu0 %2203
    %2205 = vrot.lane.b32.xlu0 %v2082, 96
    %v2206 = vpop.permute.xlu0 %2205
    %2207 = vrot.lane.b32.xlu0 %v2083, 96
    %v2208 = vpop.permute.xlu0 %2207
    %v2213 = vsel %vm1624, %v1849, %v2122
    %v2214 = vsel %vm1624, %v1850, %v2124
    %v2215 = vsel %vm1624, %v1851, %v2126
    %v2216 = vsel %vm1624, %v1852, %v2128
    %vm2217 = vcmask 523264
    %v2218 = vsel %vm2217, %v2213, %v2138
    %v2219 = vsel %vm2217, %v2214, %v2140
    %v2220 = vsel %vm2217, %v2215, %v2142
    %v2221 = vsel %vm2217, %v2216, %v2144
    %vm2222 = vcmask 785408
    %v2223 = vsel %vm2222, %v2218, %v2154
    %v2224 = vsel %vm2222, %v2219, %v2156
    %v2225 = vsel %vm2222, %v2220, %v2158
    %v2226 = vsel %vm2222, %v2221, %v2160
    %v2227 = vsel %vm1624, %v1981, %v2170
    %v2228 = vsel %vm1624, %v1982, %v2172
    %v2229 = vsel %vm1624, %v1983, %v2174
    %v2230 = vsel %vm1624, %v1984, %v2176
    %v2231 = vsel %vm2217, %v2227, %v2186
    %v2232 = vsel %vm2217, %v2228, %v2188
    %v2233 = vsel %vm2217, %v2229, %v2190
    %v2234 = vsel %vm2217, %v2230, %v2192
    %v2235 = vsel %vm2222, %v2231, %v2202
    %v2236 = vsel %vm2222, %v2232, %v2204
    %v2237 = vsel %vm2222, %v2233, %v2206
    %v2238 = vsel %vm2222, %v2234, %v2208
    %v2239 = vld [vmem:[%s6] sm:$0xff]
    %v2240 = vld [vmem:[%s6 + $0x8] sm:$0xff]
    %v2241 = vld [vmem:[%s6 + $0x10] sm:$0xff]
    %v2242 = vld [vmem:[%s6 + $0x18] sm:$0xff]
    %v2243 = vld [vmem:[%s6 + $0x20] sm:$0xff]
    %v2244 = vld [vmem:[%s6 + $0x28] sm:$0xff]
    %v2245 = vld [vmem:[%s6 + $0x30] sm:$0xff]
    %v2246 = vld [vmem:[%s6 + $0x38] sm:$0xff]
    %v2247 = vld [vmem:[%s6 + $0x40] sm:$0xff]
    %v2248 = vld [vmem:[%s6 + $0x48] sm:$0xff]
    %v2249 = vld [vmem:[%s6 + $0x50] sm:$0xff]
    %v2250 = vld [vmem:[%s6 + $0x58] sm:$0xff]
    %v2251 = vld [vmem:[%s6 + $0x60] sm:$0xff]
    %v2252 = vld [vmem:[%s6 + $0x68] sm:$0xff]
    %v2253 = vld [vmem:[%s6 + $0x70] sm:$0xff]
    %v2254 = vld [vmem:[%s6 + $0x78] sm:$0xff]
    %v2255 = vld [vmem:[%s6 + $0x80] sm:$0xff]
    %v2256 = vld [vmem:[%s6 + $0x88] sm:$0xff]
    %v2257 = vld [vmem:[%s6 + $0x90] sm:$0xff]
    %v2258 = vld [vmem:[%s6 + $0x98] sm:$0xff]
    %v2259 = vld [vmem:[%s6 + $0xa0] sm:$0xff]
    %v2260 = vld [vmem:[%s6 + $0xa8] sm:$0xff]
    %v2261 = vld [vmem:[%s6 + $0xb0] sm:$0xff]
    %v2262 = vld [vmem:[%s6 + $0xb8] sm:$0xff]
    %v2263 = vld [vmem:[%s6 + $0xc0] sm:$0xff]
    %v2264 = vld [vmem:[%s6 + $0xc8] sm:$0xff]
    %v2265 = vld [vmem:[%s6 + $0xd0] sm:$0xff]
    %v2266 = vld [vmem:[%s6 + $0xd8] sm:$0xff]
    %v2267 = vld [vmem:[%s6 + $0xe0] sm:$0xff]
    %v2268 = vld [vmem:[%s6 + $0xe8] sm:$0xff]
    %v2269 = vld [vmem:[%s6 + $0xf0] sm:$0xff]
    %v2270 = vld [vmem:[%s6 + $0xf8] sm:$0xff]
    %v2271 = vld [vmem:[%s6 + $0x100] sm:$0xff]
    %v2272 = vld [vmem:[%s6 + $0x108] sm:$0xff]
    %v2273 = vld [vmem:[%s6 + $0x110] sm:$0xff]
    %v2274 = vld [vmem:[%s6 + $0x118] sm:$0xff]
    %v2275 = vld [vmem:[%s7] sm:$0x1]
    %v2277 = vlaneseq
    %v2278 = vshrl.u32 %v2277, 7
    %v2279 = vsub.s32 0, %v2278
    %v2280 = vrot.slane %v2275, %v2279
    %v2283 = vsel %vm1624, %v2113, 0
    %v2286 = vsel %vm1624, %v2114, 0
    %v2289 = vsel %vm1624, %v2115, 0
    %v2292 = vsel %vm1624, %v2116, 0
    %2294 = vmatprep.subr.mxu0 0.0
    %2295 = vmatpush1.msra.mxu0 %v2239
    %2296 = vmatprep.subr.mxu0 0.0
    %2297 = vmatpush1.msra.mxu0 %v2240
    %2298 = vmatprep.subr.mxu0 0.0
    %2299 = vmatpush1.msra.mxu0 %v2241
    %2300 = vmatprep.subr.mxu0 0.0
    %2301 = vmatpush1.msra.mxu0 %v2242
    %2302 = vmatprep.subr.mxu0 0.0
    %2303 = vmatpush1.msra.mxu0 %v2243
    %2304 = vmatprep.subr.mxu0 0.0
    %2305 = vmatpush1.msra.mxu0 %v2244
    %2306 = vmatprep.subr.mxu0 0.0
    %2307 = vmatpush1.msra.mxu0 %v2245
    %2308 = vmatprep.subr.mxu0 0.0
    %2309 = vmatpush1.msra.mxu0 %v2246
    %2310 = vmatprep.subr.mxu0 0.0
    %2311 = vmatpush1.msra.mxu0 %v2247
    %2312 = vmatprep.subr.mxu0 0.0
    %2313 = vmatpush1.msra.mxu0 %v2248
    %2314 = vmatprep.subr.mxu0 0.0
    %2315 = vmatpush1.msra.mxu0 %v2249
    %2316 = vmatprep.subr.mxu0 0.0
    %2317 = vmatpush1.msra.mxu0 %v2250
    %2318 = vmatprep.subr.mxu0 0.0
    %2319 = vmatpush1.msra.mxu0 %v2251
    %2320 = vmatprep.subr.mxu0 0.0
    %2321 = vmatpush1.msra.mxu0 %v2252
    %2322 = vmatprep.subr.mxu0 0.0
    %2323 = vmatpush1.msra.mxu0 %v2253
    %2324 = vmatprep.subr.mxu0 0.0
    %2325 = vmatpush1.msra.mxu0 %v2254
    %2326 = vmatprep.subr.mxu0 0.0
    %2327 = vmatpush1.msra.mxu0 %v2255
    %2328 = vmatprep.subr.mxu0 0.0
    %2329 = vmatpush1.msra.mxu0 %v2256
    %2330 = vmatprep.subr.mxu0 0.0
    %2331 = vmatpush1.msra.mxu0 %v2257
    %2332 = vmatprep.subr.mxu0 0.0
    %2333 = vmatpush1.msra.mxu0 %v2258
    %2334 = vmatprep.subr.mxu0 0.0
    %2335 = vmatpush1.msra.mxu0 %v2259
    %2336 = vmatprep.subr.mxu0 0.0
    %2337 = vmatpush1.msra.mxu0 %v2260
    %2338 = vmatprep.subr.mxu0 0.0
    %2339 = vmatpush1.msra.mxu0 %v2261
    %2340 = vmatprep.subr.mxu0 0.0
    %2341 = vmatpush1.msra.mxu0 %v2262
    %2342 = vmatprep.subr.mxu0 0.0
    %2343 = vmatpush1.msra.mxu0 %v2263
    %2344 = vmatprep.subr.mxu0 0.0
    %2345 = vmatpush1.msra.mxu0 %v2264
    %2346 = vmatprep.subr.mxu0 0.0
    %2347 = vmatpush1.msra.mxu0 %v2265
    %2348 = vmatprep.subr.mxu0 0.0
    %2349 = vmatpush1.msra.mxu0 %v2266
    %2350 = vmatprep.subr.mxu0 0.0
    %2351 = vmatpush1.msra.mxu0 %v2267
    %2352 = vmatprep.subr.mxu0 0.0
    %2353 = vmatpush1.msra.mxu0 %v2268
    %2354 = vmatprep.subr.mxu0 0.0
    %2355 = vmatpush1.msra.mxu0 %v2269
    %2356 = vmatprep.subr.mxu0 0.0
    %2357 = vmatpush1.msra.mxu0 %v2270
    %2358 = vmatprep.mubr.f32.mxu0 %v2235
    %2359 = vmatmul.mubr.f32.gmra.mrb[0].mxu0 %v2223
    %v2360 = vpop.f32.mrb[0].mxu0
    %v2361 = vadd.f32 %v2280, %v2360
    %v2362 = vpop.f32.mrb[0].mxu0
    %2363 = vmatprep.mubr.f32.mxu0 %v2236
    %2364 = vmatmul.mubr.f32.gmra.mrb[0].mxu0 %v2224
    %v2365 = vpop.f32.mrb[0].mxu0
    %v2366 = vadd.f32 %v2280, %v2365
    %v2367 = vpop.f32.mrb[0].mxu0
    %2368 = vmatprep.mubr.f32.mxu0 %v2237
    %2369 = vmatmul.mubr.f32.gmra.mrb[0].mxu0 %v2225
    %v2370 = vpop.f32.mrb[0].mxu0
    %v2371 = vadd.f32 %v2280, %v2370
    %v2372 = vpop.f32.mrb[0].mxu0
    %2373 = vmatprep.mubr.f32.mxu0 %v2238
    %2374 = vmatmul.mubr.f32.gmra.mrb[0].mxu0 %v2226
    %v2375 = vpop.f32.mrb[0].mxu0
    %v2376 = vadd.f32 %v2280, %v2375
    %v2377 = vpop.f32.mrb[0].mxu0
    %2378 = vdwg.mxu0
    %2379 = vmatprep.subr.mxu0 0.0
    %2380 = vmatpush1.msra.mxu0 %v2271
    %2381 = vmatprep.subr.mxu0 0.0
    %2382 = vmatpush1.msra.mxu0 %v2272
    %2383 = vmatprep.subr.mxu0 0.0
    %2384 = vmatpush1.msra.mxu0 %v2273
    %2385 = vmatprep.subr.mxu0 0.0
    %2386 = vmatpush1.msra.mxu0 %v2274
    %2387 = vmatprep.subr.mxu0 0.0
    %2388 = vmatpush1.msra.mxu0 0.0
    %2389 = vmatprep.subr.mxu0 0.0
    %2390 = vmatpush1.msra.mxu0 0.0
    %2391 = vmatprep.subr.mxu0 0.0
    %2392 = vmatpush1.msra.mxu0 0.0
    %2393 = vmatprep.subr.mxu0 0.0
    %2394 = vmatpush1.msra.mxu0 0.0
    %2395 = vmatprep.subr.mxu0 0.0
    %2396 = vmatpush1.msra.mxu0 0.0
    %2397 = vmatprep.subr.mxu0 0.0
    %2398 = vmatpush1.msra.mxu0 0.0
    %2399 = vmatprep.subr.mxu0 0.0
    %2400 = vmatpush1.msra.mxu0 0.0
    %2401 = vmatprep.subr.mxu0 0.0
    %2402 = vmatpush1.msra.mxu0 0.0
    %2403 = vmatprep.subr.mxu0 0.0
    %2404 = vmatpush1.msra.mxu0 0.0
    %2405 = vmatprep.subr.mxu0 0.0
    %2406 = vmatpush1.msra.mxu0 0.0
    %2407 = vmatprep.subr.mxu0 0.0
    %2408 = vmatpush1.msra.mxu0 0.0
    %2409 = vmatprep.subr.mxu0 0.0
    %2410 = vmatpush1.msra.mxu0 0.0
    %2411 = vmatprep.subr.mxu0 0.0
    %2412 = vmatpush1.msra.mxu0 0.0
    %2413 = vmatprep.subr.mxu0 0.0
    %2414 = vmatpush1.msra.mxu0 0.0
    %2415 = vmatprep.subr.mxu0 0.0
    %2416 = vmatpush1.msra.mxu0 0.0
    %2417 = vmatprep.subr.mxu0 0.0
    %2418 = vmatpush1.msra.mxu0 0.0
    %2419 = vmatprep.subr.mxu0 0.0
    %2420 = vmatpush1.msra.mxu0 0.0
    %2421 = vmatprep.subr.mxu0 0.0
    %2422 = vmatpush1.msra.mxu0 0.0
    %2423 = vmatprep.subr.mxu0 0.0
    %2424 = vmatpush1.msra.mxu0 0.0
    %2425 = vmatprep.subr.mxu0 0.0
    %2426 = vmatpush1.msra.mxu0 0.0
    %2427 = vmatprep.subr.mxu0 0.0
    %2428 = vmatpush1.msra.mxu0 0.0
    %2429 = vmatprep.subr.mxu0 0.0
    %2430 = vmatpush1.msra.mxu0 0.0
    %2431 = vmatprep.subr.mxu0 0.0
    %2432 = vmatpush1.msra.mxu0 0.0
    %2433 = vmatprep.subr.mxu0 0.0
    %2434 = vmatpush1.msra.mxu0 0.0
    %2435 = vmatprep.subr.mxu0 0.0
    %2436 = vmatpush1.msra.mxu0 0.0
    %2437 = vmatprep.subr.mxu0 0.0
    %2438 = vmatpush1.msra.mxu0 0.0
    %2439 = vmatprep.subr.mxu0 0.0
    %2440 = vmatpush1.msra.mxu0 0.0
    %2441 = vmatprep.subr.mxu0 0.0
    %2442 = vmatpush1.msra.mxu0 0.0
    %2443 = vmatprep.mubr.f32.mxu0 0.0
    %2444 = vmatmul.mubr.f32.gmra.mrb[0].mxu0 %v2283
    %v2445 = vpop.f32.mrb[0].mxu0
    %v2446 = vadd.f32 %v2361, %v2445
    %v2447 = vpop.f32.mrb[0].mxu0
    %2448 = vmatprep.mubr.f32.mxu0 0.0
    %2449 = vmatmul.mubr.f32.gmra.mrb[0].mxu0 %v2286
    %v2450 = vpop.f32.mrb[0].mxu0
    %v2451 = vadd.f32 %v2366, %v2450
    %v2452 = vpop.f32.mrb[0].mxu0
    %2453 = vmatprep.mubr.f32.mxu0 0.0
    %2454 = vmatmul.mubr.f32.gmra.mrb[0].mxu0 %v2289
    %v2455 = vpop.f32.mrb[0].mxu0
    %v2456 = vadd.f32 %v2371, %v2455
    %v2457 = vpop.f32.mrb[0].mxu0
    %2458 = vmatprep.mubr.f32.mxu0 0.0
    %2459 = vmatmul.mubr.f32.gmra.mrb[0].mxu0 %v2292
    %v2460 = vpop.f32.mrb[0].mxu0
    %v2461 = vadd.f32 %v2376, %v2460
    %v2462 = vpop.f32.mrb[0].mxu0
    %2463 = vdwg.mxu0
    %v2464 = vmax.f32 %v2446, 0.0
    %v2465 = vmax.f32 %v2451, 0.0
    %v2466 = vmax.f32 %v2456, 0.0
    %v2467 = vmax.f32 %v2461, 0.0
    %2468 = vst.msk [vmem:[#allocation5] sm:$0xff] %vm2217, %v2464
    %2469 = vst.msk [vmem:[#allocation5 + $0x8] sm:$0xff] %vm2217, %v2465
    %2470 = vst.msk [vmem:[#allocation5 + $0x10] sm:$0xff] %vm2217, %v2466
    %2471 = vst.msk [vmem:[#allocation5 + $0x18] sm:$0xff] %vm2217, %v2467
    %2472 = vst.msk [vmem:[#allocation5 + $0x20] sm:$0xff] %vm2217, 0.0
    %v2473 = vld [vmem:[#allocation5 + $0x1] sm:$0xff]
    %v2474 = vld [vmem:[#allocation5 + $0x9] sm:$0xff]
    %v2475 = vld [vmem:[#allocation5 + $0x11] sm:$0xff]
    %v2476 = vld [vmem:[#allocation5 + $0x19] sm:$0xff]
    %v2477 = vmax.f32 %v2464, %v2473
    %v2478 = vmax.f32 %v2465, %v2474
    %v2479 = vmax.f32 %v2466, %v2475
    %v2480 = vmax.f32 %v2467, %v2476
    %v2481 = vld [vmem:[#allocation5 + $0x4] sm:$0xff]
    %v2482 = vld [vmem:[#allocation5 + $0xc] sm:$0xff]
    %v2483 = vld [vmem:[#allocation5 + $0x14] sm:$0xff]
    %v2484 = vld [vmem:[#allocation5 + $0x1c] sm:$0xff]
    %v2485 = vmax.f32 %v2477, %v2481
    %v2486 = vmax.f32 %v2478, %v2482
    %v2487 = vmax.f32 %v2479, %v2483
    %v2488 = vmax.f32 %v2480, %v2484
    %v2489 = vld [vmem:[#allocation5 + $0x5] sm:$0xff]
    %v2490 = vld [vmem:[#allocation5 + $0xd] sm:$0xff]
    %v2491 = vld [vmem:[#allocation5 + $0x15] sm:$0xff]
    %v2492 = vld [vmem:[#allocation5 + $0x1d] sm:$0xff]
    %v2493 = vmax.f32 %v2485, %v2489
    %v2494 = vmax.f32 %v2486, %v2490
    %v2495 = vmax.f32 %v2487, %v2491
    %v2496 = vmax.f32 %v2488, %v2492
    %v2497 = vld [vmem:[%s8] sm:$0xff]
    %v2499 = vsel %vm1624, %v2497, 0
    %2501 = vmatprep.subr.mxu0 0.0
    %2502 = vmatpush1.msra.mxu0 %v2493
    %2503 = vmatprep.subr.mxu0 0.0
    %2504 = vmatpush1.msra.mxu0 %v2494
    %2505 = vmatprep.subr.mxu0 0.0
    %2506 = vmatpush1.msra.mxu0 %v2495
    %2507 = vmatprep.subr.mxu0 0.0
    %2508 = vmatpush1.msra.mxu0 %v2496
    %2509 = vmatprep.subr.mxu0 0.0
    %2510 = vmatpush1.msra.mxu0 0.0
    %2511 = vmatprep.subr.mxu0 0.0
    %2512 = vmatpush1.msra.mxu0 0.0
    %2513 = vmatprep.subr.mxu0 0.0
    %2514 = vmatpush1.msra.mxu0 0.0
    %2515 = vmatprep.subr.mxu0 0.0
    %2516 = vmatpush1.msra.mxu0 0.0
    %2517 = vmatprep.subr.mxu0 0.0
    %2518 = vmatpush1.msra.mxu0 0.0
    %2519 = vmatprep.subr.mxu0 0.0
    %2520 = vmatpush1.msra.mxu0 0.0
    %2521 = vmatprep.subr.mxu0 0.0
    %2522 = vmatpush1.msra.mxu0 0.0
    %2523 = vmatprep.subr.mxu0 0.0
    %2524 = vmatpush1.msra.mxu0 0.0
    %2525 = vmatprep.subr.mxu0 0.0
    %2526 = vmatpush1.msra.mxu0 0.0
    %2527 = vmatprep.subr.mxu0 0.0
    %2528 = vmatpush1.msra.mxu0 0.0
    %2529 = vmatprep.subr.mxu0 0.0
    %2530 = vmatpush1.msra.mxu0 0.0
    %2531 = vmatprep.subr.mxu0 0.0
    %2532 = vmatpush1.msra.mxu0 0.0
    %2533 = vmatprep.subr.mxu0 0.0
    %2534 = vmatpush1.msra.mxu0 0.0
    %2535 = vmatprep.subr.mxu0 0.0
    %2536 = vmatpush1.msra.mxu0 0.0
    %2537 = vmatprep.subr.mxu0 0.0
    %2538 = vmatpush1.msra.mxu0 0.0
    %2539 = vmatprep.subr.mxu0 0.0
    %2540 = vmatpush1.msra.mxu0 0.0
    %2541 = vmatprep.subr.mxu0 0.0
    %2542 = vmatpush1.msra.mxu0 0.0
    %2543 = vmatprep.subr.mxu0 0.0
    %2544 = vmatpush1.msra.mxu0 0.0
    %2545 = vmatprep.subr.mxu0 0.0
    %2546 = vmatpush1.msra.mxu0 0.0
    %2547 = vmatprep.subr.mxu0 0.0
    %2548 = vmatpush1.msra.mxu0 0.0
    %2549 = vmatprep.subr.mxu0 0.0
    %2550 = vmatpush1.msra.mxu0 0.0
    %2551 = vmatprep.subr.mxu0 0.0
    %2552 = vmatpush1.msra.mxu0 0.0
    %2553 = vmatprep.subr.mxu0 0.0
    %2554 = vmatpush1.msra.mxu0 0.0
    %2555 = vmatprep.subr.mxu0 0.0
    %2556 = vmatpush1.msra.mxu0 0.0
    %2557 = vmatprep.subr.mxu0 0.0
    %2558 = vmatpush1.msra.mxu0 0.0
    %2559 = vmatprep.subr.mxu0 0.0
    %2560 = vmatpush1.msra.mxu0 0.0
    %2561 = vmatprep.subr.mxu0 0.0
    %2562 = vmatpush1.msra.mxu0 0.0
    %2563 = vmatprep.subr.mxu0 0.0
    %2564 = vmatpush1.msra.mxu0 0.0
    %2565 = vmatprep.mubr.f32.mxu0 0.0
    %2566 = vmatmul.mubr.f32.gmra.mrb[0].mxu0 %v2499
    %v2567 = vpop.f32.mrb[0].mxu0
    %v2568 = vadd.f32 0.0, %v2567
    %v2569 = vpop.f32.mrb[0].mxu0
    %2570 = vdwg.mxu0
    %v2572 = vrot.slane %v2568, 2
    %2573 = vrot.lane.b32.xlu0 %v2572, 64
    %v2574 = vpop.permute.xlu0 %2573
    %v2576 = vrot.slane %v2568, 4
    %v2578 = vrot.slane %v2568, 6
    %2579 = vrot.lane.b32.xlu0 %v2578, 64
    %v2580 = vpop.permute.xlu0 %2579
    %v2582 = vsel %vm2217, %v2568, %v2574
    %v2583 = vsel %vm2217, %v2576, %v2580
    %v2584 = vld [vmem:[%s9] sm:$0xff]
    %v2585 = vld [vmem:[%s9 + $0x8] sm:$0xff]
    %v2586 = vld [vmem:[%s9 + $0x10] sm:$0xff]
    %v2587 = vld [vmem:[%s9 + $0x18] sm:$0xff]
    %v2588 = vld [vmem:[%s9 + $0x20] sm:$0xff]
    %v2589 = vld [vmem:[%s9 + $0x28] sm:$0xff]
    %v2590 = vld [vmem:[%s9 + $0x30] sm:$0xff]
    %v2591 = vld [vmem:[%s9 + $0x38] sm:$0xff]
    %v2592 = vld [vmem:[%s9 + $0x40] sm:$0xff]
    %v2593 = vld [vmem:[%s9 + $0x48] sm:$0xff]
    %v2594 = vld [vmem:[%s9 + $0x50] sm:$0xff]
    %v2595 = vld [vmem:[%s9 + $0x58] sm:$0xff]
    %v2596 = vld [vmem:[%s9 + $0x60] sm:$0xff]
    %v2597 = vld [vmem:[%s9 + $0x68] sm:$0xff]
    %v2598 = vld [vmem:[%s9 + $0x70] sm:$0xff]
    %v2599 = vld [vmem:[%s9 + $0x78] sm:$0xff]
    %v2600 = vld [vmem:[%s9 + $0x80] sm:$0xff]
    %v2601 = vld [vmem:[%s9 + $0x88] sm:$0xff]
    %v2602 = vld [vmem:[%s9 + $0x90] sm:$0xff]
    %v2603 = vld [vmem:[%s9 + $0x98] sm:$0xff]
    %v2604 = vld [vmem:[%s9 + $0xa0] sm:$0xff]
    %v2605 = vld [vmem:[%s9 + $0xa8] sm:$0xff]
    %v2606 = vld [vmem:[%s9 + $0xb0] sm:$0xff]
    %v2607 = vld [vmem:[%s9 + $0xb8] sm:$0xff]
    %v2608 = vld [vmem:[%s9 + $0xc0] sm:$0xff]
    %v2609 = vld [vmem:[%s9 + $0xc8] sm:$0xff]
    %v2610 = vld [vmem:[%s9 + $0xd0] sm:$0xff]
    %v2611 = vld [vmem:[%s9 + $0xd8] sm:$0xff]
    %v2612 = vld [vmem:[%s9 + $0xe0] sm:$0xff]
    %v2613 = vld [vmem:[%s9 + $0xe8] sm:$0xff]
    %v2614 = vld [vmem:[%s9 + $0xf0] sm:$0xff]
    %v2615 = vld [vmem:[%s9 + $0xf8] sm:$0xff]
    %v2616 = vld [vmem:[%s10] sm:$0x1]
    %v2618 = vlaneseq
    %v2619 = vshrl.u32 %v2618, 7
    %v2620 = vsub.s32 0, %v2619
    %v2621 = vrot.slane %v2616, %v2620
    %2623 = vmatprep.subr.mxu0 0.0
    %2624 = vmatpush1.msra.mxu0 %v2584
    %2625 = vmatprep.subr.mxu0 0.0
    %2626 = vmatpush1.msra.mxu0 %v2585
    %2627 = vmatprep.subr.mxu0 0.0
    %2628 = vmatpush1.msra.mxu0 %v2586
    %2629 = vmatprep.subr.mxu0 0.0
    %2630 = vmatpush1.msra.mxu0 %v2587
    %2631 = vmatprep.subr.mxu0 0.0
    %2632 = vmatpush1.msra.mxu0 %v2588
    %2633 = vmatprep.subr.mxu0 0.0
    %2634 = vmatpush1.msra.mxu0 %v2589
    %2635 = vmatprep.subr.mxu0 0.0
    %2636 = vmatpush1.msra.mxu0 %v2590
    %2637 = vmatprep.subr.mxu0 0.0
    %2638 = vmatpush1.msra.mxu0 %v2591
    %2639 = vmatprep.subr.mxu0 0.0
    %2640 = vmatpush1.msra.mxu0 %v2592
    %2641 = vmatprep.subr.mxu0 0.0
    %2642 = vmatpush1.msra.mxu0 %v2593
    %2643 = vmatprep.subr.mxu0 0.0
    %2644 = vmatpush1.msra.mxu0 %v2594
    %2645 = vmatprep.subr.mxu0 0.0
    %2646 = vmatpush1.msra.mxu0 %v2595
    %2647 = vmatprep.subr.mxu0 0.0
    %2648 = vmatpush1.msra.mxu0 %v2596
    %2649 = vmatprep.subr.mxu0 0.0
    %2650 = vmatpush1.msra.mxu0 %v2597
    %2651 = vmatprep.subr.mxu0 0.0
    %2652 = vmatpush1.msra.mxu0 %v2598
    %2653 = vmatprep.subr.mxu0 0.0
    %2654 = vmatpush1.msra.mxu0 %v2599
    %2655 = vmatprep.subr.mxu0 0.0
    %2656 = vmatpush1.msra.mxu0 %v2600
    %2657 = vmatprep.subr.mxu0 0.0
    %2658 = vmatpush1.msra.mxu0 %v2601
    %2659 = vmatprep.subr.mxu0 0.0
    %2660 = vmatpush1.msra.mxu0 %v2602
    %2661 = vmatprep.subr.mxu0 0.0
    %2662 = vmatpush1.msra.mxu0 %v2603
    %2663 = vmatprep.subr.mxu0 0.0
    %2664 = vmatpush1.msra.mxu0 %v2604
    %2665 = vmatprep.subr.mxu0 0.0
    %2666 = vmatpush1.msra.mxu0 %v2605
    %2667 = vmatprep.subr.mxu0 0.0
    %2668 = vmatpush1.msra.mxu0 %v2606
    %2669 = vmatprep.subr.mxu0 0.0
    %2670 = vmatpush1.msra.mxu0 %v2607
    %2671 = vmatprep.subr.mxu0 0.0
    %2672 = vmatpush1.msra.mxu0 %v2608
    %2673 = vmatprep.subr.mxu0 0.0
    %2674 = vmatpush1.msra.mxu0 %v2609
    %2675 = vmatprep.subr.mxu0 0.0
    %2676 = vmatpush1.msra.mxu0 %v2610
    %2677 = vmatprep.subr.mxu0 0.0
    %2678 = vmatpush1.msra.mxu0 %v2611
    %2679 = vmatprep.subr.mxu0 0.0
    %2680 = vmatpush1.msra.mxu0 %v2612
    %2681 = vmatprep.subr.mxu0 0.0
    %2682 = vmatpush1.msra.mxu0 %v2613
    %2683 = vmatprep.subr.mxu0 0.0
    %2684 = vmatpush1.msra.mxu0 %v2614
    %2685 = vmatprep.subr.mxu0 0.0
    %2686 = vmatpush1.msra.mxu0 %v2615
    %2687 = vmatprep.mubr.f32.mxu0 %v2583
    %2688 = vmatmul.mubr.f32.gmra.mrb[0].mxu0 %v2582
    %v2689 = vpop.f32.mrb[0].mxu0
    %v2690 = vadd.f32 %v2621, %v2689
    %v2691 = vpop.f32.mrb[0].mxu0
    %2692 = vdwg.mxu0
    %v2693 = vmax.f32 %v2690, 0.0
    %v2694 = vld [vmem:[%s11] sm:$0xff]
    %v2695 = vld [vmem:[%s11 + $0x8] sm:$0xff]
    %v2696 = vld [vmem:[%s11 + $0x10] sm:$0xff]
    %v2697 = vld [vmem:[%s11 + $0x18] sm:$0xff]
    %v2698 = vld [vmem:[%s11 + $0x20] sm:$0xff]
    %v2699 = vld [vmem:[%s11 + $0x28] sm:$0xff]
    %v2700 = vld [vmem:[%s11 + $0x30] sm:$0xff]
    %v2701 = vld [vmem:[%s11 + $0x38] sm:$0xff]
    %v2702 = vld [vmem:[%s12] sm:$0x1]
    %v2704 = vlaneseq
    %v2705 = vshrl.u32 %v2704, 7
    %v2706 = vsub.s32 0, %v2705
    %v2707 = vrot.slane %v2702, %v2706
    %v2710 = vsel %vm2217, %v2693, 0
    %2712 = vmatprep.subr.mxu0 0.0
    %2713 = vmatpush1.msra.mxu0 %v2694
    %2714 = vmatprep.subr.mxu0 0.0
    %2715 = vmatpush1.msra.mxu0 %v2695
    %2716 = vmatprep.subr.mxu0 0.0
    %2717 = vmatpush1.msra.mxu0 %v2696
    %2718 = vmatprep.subr.mxu0 0.0
    %2719 = vmatpush1.msra.mxu0 %v2697
    %2720 = vmatprep.subr.mxu0 0.0
    %2721 = vmatpush1.msra.mxu0 %v2698
    %2722 = vmatprep.subr.mxu0 0.0
    %2723 = vmatpush1.msra.mxu0 %v2699
    %2724 = vmatprep.subr.mxu0 0.0
    %2725 = vmatpush1.msra.mxu0 %v2700
    %2726 = vmatprep.subr.mxu0 0.0
    %2727 = vmatpush1.msra.mxu0 %v2701
    %2728 = vmatprep.subr.mxu0 0.0
    %2729 = vmatpush1.msra.mxu0 0.0
    %2730 = vmatprep.subr.mxu0 0.0
    %2731 = vmatpush1.msra.mxu0 0.0
    %2732 = vmatprep.subr.mxu0 0.0
    %2733 = vmatpush1.msra.mxu0 0.0
    %2734 = vmatprep.subr.mxu0 0.0
    %2735 = vmatpush1.msra.mxu0 0.0
    %2736 = vmatprep.subr.mxu0 0.0
    %2737 = vmatpush1.msra.mxu0 0.0
    %2738 = vmatprep.subr.mxu0 0.0
    %2739 = vmatpush1.msra.mxu0 0.0
    %2740 = vmatprep.subr.mxu0 0.0
    %2741 = vmatpush1.msra.mxu0 0.0
    %2742 = vmatprep.subr.mxu0 0.0
    %2743 = vmatpush1.msra.mxu0 0.0
    %2744 = vmatprep.subr.mxu0 0.0
    %2745 = vmatpush1.msra.mxu0 0.0
    %2746 = vmatprep.subr.mxu0 0.0
    %2747 = vmatpush1.msra.mxu0 0.0
    %2748 = vmatprep.subr.mxu0 0.0
    %2749 = vmatpush1.msra.mxu0 0.0
    %2750 = vmatprep.subr.mxu0 0.0
    %2751 = vmatpush1.msra.mxu0 0.0
    %2752 = vmatprep.subr.mxu0 0.0
    %2753 = vmatpush1.msra.mxu0 0.0
    %2754 = vmatprep.subr.mxu0 0.0
    %2755 = vmatpush1.msra.mxu0 0.0
    %2756 = vmatprep.subr.mxu0 0.0
    %2757 = vmatpush1.msra.mxu0 0.0
    %2758 = vmatprep.subr.mxu0 0.0
    %2759 = vmatpush1.msra.mxu0 0.0
    %2760 = vmatprep.subr.mxu0 0.0
    %2761 = vmatpush1.msra.mxu0 0.0
    %2762 = vmatprep.subr.mxu0 0.0
    %2763 = vmatpush1.msra.mxu0 0.0
    %2764 = vmatprep.subr.mxu0 0.0
    %2765 = vmatpush1.msra.mxu0 0.0
    %2766 = vmatprep.subr.mxu0 0.0
    %2767 = vmatpush1.msra.mxu0 0.0
    %2768 = vmatprep.subr.mxu0 0.0
    %2769 = vmatpush1.msra.mxu0 0.0
    %2770 = vmatprep.subr.mxu0 0.0
    %2771 = vmatpush1.msra.mxu0 0.0
    %2772 = vmatprep.subr.mxu0 0.0
    %2773 = vmatpush1.msra.mxu0 0.0
    %2774 = vmatprep.subr.mxu0 0.0
    %2775 = vmatpush1.msra.mxu0 0.0
    %2776 = vmatprep.mubr.f32.mxu0 0.0
    %2777 = vmatmul.mubr.f32.gmra.mrb[0].mxu0 %v2710
    %v2778 = vpop.f32.mrb[0].mxu0
    %v2779 = vadd.f32 %v2707, %v2778
    %v2780 = vpop.f32.mrb[0].mxu0
    %2781 = vdwg.mxu0
    %2782 = vst [vmem:[#allocation6] sm:$0x3] %v2779
    // Predicated region
    $region54: #{forward.1} parent=1 // pred_check
      _
    $region55: #{forward.1} parent=1 // pred_check_branch
      %2784 = sbr.rel (0) target = $region57
    $region56: #{forward.1} parent=1 // pred_region
      %s2786 = ssub.s32 32, 32
      %2787 = vsyncadd [#allocation7], %s2786
      %s2789 = sshll.u32 [#allocation6], 4
      %s2790 = int_to_ptr.vmem [resolvable:$true] %s2789
      %2792 = dma.vmem_to_hbm [thread:$0]  %s2790, 32, %s13, [#allocation7]
    $region57: #{forward.1} parent=1 // pred_fallthru
      _
    // Predicated region
    $region58: #{forward.1} parent=1 // pred_check
      _
    $region59: #{forward.1} parent=1 // pred_check_branch
      %2794 = sbr.rel (0) target = $region61
    $region60: #{forward.1} parent=1 // pred_region
      %2795 = dma.done [#allocation7], 32
    $region61: #{forward.1} parent=1 // pred_fallthru
      _
    %2796 = vsyncpa [#allocation7], 1

</llo_original>
